<compile_context>
chip_gen: v7x
topology: tpu7x:2x2x1
jax: 0.10.0
libtpu: 0.0.40
codegen_flags: <defaults>
</compile_context>

<pallas_src>
import jax
import jax.numpy as jnp
from jax.experimental import pallas as pl
from jax.experimental.pallas import tpu as pltpu


# ---------------------------------------------------------------------------
# Kernel factory (static dims captured by closure)
# ---------------------------------------------------------------------------
def _make_kernel(S, N, FP, Gh, L, H):
    SN = S * N
    G3 = 3 * H
    L2 = 2 * L
    inv_s = 1.0 / S

    def kernel(a_ref, xe_ref, encw_ref, encb_ref, sel_ref, wrep_ref,
               gruw_ref, grub_ref, lin_ref, out_ref, tail_ref):
        a = a_ref[...]                                   # (SN, SN) block-diag A_hat
        xe = xe_ref[...]                                 # (SN, FP + L)
        x = xe[:, :FP]                                   # zero-padded node features
        eps = xe[:, FP:FP + L]

        enc_w = encw_ref[...]                            # (FP+Gh, max(Gh, 2L))
        w1 = enc_w[:FP, :Gh]
        wml = enc_w[FP:FP + Gh, :L2]                     # [Wmu | Wlogvar]
        enc_b = encb_ref[...]                            # (1, Gh + 2L)

        # ---- VAE encoder, batched over all S timesteps (block-diagonal A) ----
        xw1 = jnp.dot(x, w1, preferred_element_type=jnp.float32)
        h = jnp.dot(a, xw1, preferred_element_type=jnp.float32) + enc_b[:, :Gh]
        hw = jnp.dot(h, wml, preferred_element_type=jnp.float32)
        ml = jnp.dot(a, hw, preferred_element_type=jnp.float32) + enc_b[:, Gh:Gh + L2]
        mu = ml[:, :L]
        lv = ml[:, L:L2]
        z = mu + eps * jnp.exp(0.5 * lv)                 # reparameterization, (SN, L)

        sel = sel_ref[...]
        r_sel = sel[:N, :]                               # (N, SN) temporal mean (1/S baked in)
        seg = sel[N:N + S, :]                            # (S, SN) per-step block indicator

        # ---- temporal means of mu/logvar and inner-product adjacency ----
        ml_mean = jnp.dot(r_sel, ml, preferred_element_type=jnp.float32)  # (N, 2L)
        adj_acc = jnp.zeros((N, N), jnp.float32)
        for t in range(S):                               # independent matmuls, no .T
            z_t = z[t * N:(t + 1) * N, :]
            g = jax.lax.dot_general(z_t, z_t, (((1,), (1,)), ((), ())),
                                    preferred_element_type=jnp.float32)
            adj_acc = adj_acc + jax.nn.sigmoid(g)
        tail_ref[...] = jnp.concatenate([ml_mean, adj_acc * inv_s], axis=1)

        # ---- decode Linear folded with GRU layer-0 input gates (one affine) ----
        # gx0[t] = z_t.flatten() @ (dec_w.T @ W_ih_l0.T) + (dec_b @ W_ih_l0.T + b_ih_l0)
        wrep = wrep_ref[...]                             # (SN, L*3H) composed weight, tiled over S
        d = z[:, 0:1] * wrep[:, 0:G3]
        for l in range(1, L):
            d = d + z[:, l:l + 1] * wrep[:, l * G3:(l + 1) * G3]
        grub = grub_ref[...]                             # (4, 3H)
        gx0 = jnp.dot(seg, d, preferred_element_type=jnp.float32) + grub[0:1, :]

        # ---- 2-layer GRU (PyTorch gate order r, z, n), row-vector recurrence ----
        whh0 = gruw_ref[0]                               # (H, 3H)
        wih1 = gruw_ref[1]
        whh1 = gruw_ref[2]
        bhh0 = grub[1:2, :]
        bih1 = grub[2:3, :]
        bhh1 = grub[3:4, :]

        def gru_cell(gx, gh, hprev):
            r = jax.nn.sigmoid(gx[:, :H] + gh[:, :H])
            zg = jax.nn.sigmoid(gx[:, H:2 * H] + gh[:, H:2 * H])
            n = jnp.tanh(gx[:, 2 * H:] + r * gh[:, 2 * H:])
            return (1.0 - zg) * n + zg * hprev

        h1 = jnp.zeros((1, H), jnp.float32)
        h2 = jnp.zeros((1, H), jnp.float32)
        h2_rows = []
        for t in range(S):                               # static unroll, S small
            gh1 = jnp.dot(h1, whh0, preferred_element_type=jnp.float32) + bhh0
            h1 = gru_cell(gx0[t:t + 1, :], gh1, h1)
            gx2 = jnp.dot(h1, wih1, preferred_element_type=jnp.float32) + bih1
            gh2 = jnp.dot(h2, whh1, preferred_element_type=jnp.float32) + bhh1
            h2 = gru_cell(gx2, gh2, h2)
            h2_rows.append(h2)

        # ---- final Linear(H, 1) over all steps at once, single output store ----
        lin = lin_ref[...]                               # (H+1, 1) = [W.T ; b]
        h2_all = jnp.concatenate(h2_rows, axis=0)        # (S, H)
        out_ref[...] = (jnp.dot(h2_all, lin[:H, :],
                                preferred_element_type=jnp.float32) + lin[H:, :])

    return kernel


# ---------------------------------------------------------------------------
# Host wrapper: parameter packing (cheap, one-off re-layouts) + one pallas_call
# ---------------------------------------------------------------------------
def vae_rnn_forward(x, eps, a_hat, params, tar_len=1):
    """x: (S, N, F), eps: (S, N, L) -> (out[-tar_len:], mu, logvar, adj_recon)."""
    S, N, F = x.shape
    L = eps.shape[-1]
    Gh = params["w1"].shape[1]
    H = params["gru_w_hh_l0"].shape[1]
    G3 = 3 * H
    SN = S * N
    FP = ((F + 7) // 8) * 8                              # pad feature dim (aligned slices)

    # block-diagonal adjacency: batches the encoder across all S timesteps
    a_blk = jnp.kron(jnp.eye(S, dtype=jnp.float32), a_hat)               # (SN, SN)
    x_pad = jnp.pad(x.reshape(SN, F), ((0, 0), (0, FP - F)))
    x_eps = jnp.concatenate([x_pad, eps.reshape(SN, L)], axis=1)          # (SN, FP+L)

    # encoder weights: [W1 ; Wmu|Wlogvar] padded to a common lane width
    wc = max(Gh, 2 * L)
    enc_w = jnp.zeros((FP + Gh, wc), jnp.float32)
    enc_w = enc_w.at[:F, :Gh].set(params["w1"])
    enc_w = enc_w.at[FP:FP + Gh, :2 * L].set(
        jnp.concatenate([params["wmu"], params["wlv"]], axis=1))
    enc_b = jnp.concatenate([params["b1"], params["bmu"], params["blv"]],
                            axis=0).reshape(1, Gh + 2 * L)

    # temporal-mean selector (rows 0..N-1) + per-step block indicator (rows N..)
    r_sel = jnp.tile(jnp.eye(N, dtype=jnp.float32), (1, S)) / S           # (N, SN)
    seg = jnp.kron(jnp.eye(S, dtype=jnp.float32),
                   jnp.ones((1, N), jnp.float32))                         # (S, SN)
    sel = jnp.concatenate([r_sel, seg], axis=0)

    # fold decode Linear into GRU layer-0 input-gate transform (both affine)
    wih0_t = params["gru_w_ih_l0"].T                                      # (3, 3H)
    wcomp = params["dec_w"].T @ wih0_t                                     # (N*L, 3H)
    bcomp = (params["dec_b"].reshape(1, -1) @ wih0_t
             + params["gru_b_ih_l0"].reshape(1, G3))                       # (1, 3H)
    wrep = jnp.tile(wcomp.reshape(N, L * G3), (S, 1))                      # (SN, L*3H)

    gru_w = jnp.stack([params["gru_w_hh_l0"].T,
                       params["gru_w_ih_l1"].T,
                       params["gru_w_hh_l1"].T])                           # (3, H, 3H)
    gru_b = jnp.concatenate([bcomp,
                             params["gru_b_hh_l0"].reshape(1, G3),
                             params["gru_b_ih_l1"].reshape(1, G3),
                             params["gru_b_hh_l1"].reshape(1, G3)], axis=0)
    lin_wb = jnp.concatenate([params["lin_w"].T,
                              params["lin_b"].reshape(1, 1)], axis=0)      # (H+1, 1)

    args = (a_blk, x_eps, enc_w, enc_b, sel, wrep, gru_w, gru_b, lin_wb)

    # Advisory cost estimate (rough) so XLA doesn't treat the call as free.
    flops = 2 * (SN * FP * Gh + SN * SN * Gh + SN * Gh * 2 * L + SN * SN * 2 * L
                 + N * SN * 2 * L + S * N * L * N + SN * L * G3 + S * SN * G3
                 + S * 3 * H * G3 + S * H)
    transcendentals = SN * L + S * N * N + S * 6 * H
    bytes_accessed = (sum(int(a.size) for a in args) + S + N * (2 * L + N)) * 4

    kernel = _make_kernel(S, N, FP, Gh, L, H)
    vmem = pl.BlockSpec(memory_space=pltpu.MemorySpace.VMEM)
    out_col, tail = pl.pallas_call(
        kernel,
        out_shape=(jax.ShapeDtypeStruct((S, 1), jnp.float32),
                   jax.ShapeDtypeStruct((N, 2 * L + N), jnp.float32)),
        in_specs=[vmem] * len(args),
        out_specs=(vmem, vmem),
        cost_estimate=pl.CostEstimate(flops=flops,
                                      transcendentals=transcendentals,
                                      bytes_accessed=bytes_accessed),
    )(*args)

    out = out_col.reshape(S, 1, 1)                       # (seq_len, batch=1, 1)
    mu = tail[:, :L]
    logvar = tail[:, L:2 * L]
    adj_recon = tail[:, 2 * L:]
    return out[-tar_len:], mu, logvar, adj_recon


# ---------------------------------------------------------------------------
# Glue: adjacency normalization and parameter init (PyTorch-native layouts)
# ---------------------------------------------------------------------------
def normalized_adjacency(edge_index, n_nodes):
    a = jnp.zeros((n_nodes, n_nodes), jnp.float32)
    a = a.at[edge_index[0], edge_index[1]].set(1.0)
    a = a + jnp.eye(n_nodes, dtype=jnp.float32)          # self loops
    deg = a.sum(axis=1)
    d = 1.0 / jnp.sqrt(deg)
    return d[:, None] * a * d[None, :]


def init_params(key, in_feat, g_hidden, g_latent, n_nodes, rnn_feat, out_feat):
    ks = jax.random.split(key, 18)
    nrm = lambda k, s, sc=0.1: (sc * jax.random.normal(k, s)).astype(jnp.float32)
    H = out_feat
    return {
        # VAE GCN layers (math form X @ W, row bias)
        "w1":  nrm(ks[0], (in_feat, g_hidden)),
        "b1":  nrm(ks[1], (g_hidden,), 0.01),
        "wmu": nrm(ks[2], (g_hidden, g_latent)),
        "bmu": nrm(ks[3], (g_latent,), 0.01),
        "wlv": nrm(ks[4], (g_hidden, g_latent)),
        "blv": nrm(ks[5], (g_latent,), 0.01),
        # decode: nn.Linear(G_latent * adj_shape, 3)  (PyTorch weight layout)
        "dec_w": nrm(ks[6], (rnn_feat, g_latent * n_nodes)),
        "dec_b": nrm(ks[7], (rnn_feat,), 0.01),
        # nn.GRU(3, out_feat, 2 layers); PyTorch layouts, gate order (r, z, n)
        "gru_w_ih_l0": nrm(ks[8], (3 * H, rnn_feat)),
        "gru_w_hh_l0": nrm(ks[9], (3 * H, H)),
        "gru_b_ih_l0": nrm(ks[10], (3 * H,), 0.01),
        "gru_b_hh_l0": nrm(ks[11], (3 * H,), 0.01),
        "gru_w_ih_l1": nrm(ks[12], (3 * H, H)),
        "gru_w_hh_l1": nrm(ks[13], (3 * H, H)),
        "gru_b_ih_l1": nrm(ks[14], (3 * H,), 0.01),
        "gru_b_hh_l1": nrm(ks[15], (3 * H,), 0.01),
        # final nn.Linear(out_feat, 1)
        "lin_w": nrm(ks[16], (1, H)),
        "lin_b": nrm(ks[17], (1,), 0.01),
    }


if __name__ == "__main__":
    # Small shapes consistent with the module
    SEQ_LEN, IN_FEAT = 8, 6
    G_HIDDEN, G_LATENT = 8, 4
    OUT_FEAT, TAR_LEN, RNN_FEAT = 32, 1, 3

    # Bidirectional ring graph on 8 nodes -> adj_shape = 8
    n = 8
    src = jnp.arange(n, dtype=jnp.int32)
    dst = (src + 1) % n
    edge_index = jnp.stack([jnp.concatenate([src, dst]),
                            jnp.concatenate([dst, src])])
    adj_shape = int(edge_index.max()) + 1
    a_hat = normalized_adjacency(edge_index, adj_shape)

    key = jax.random.PRNGKey(0)
    k_param, k_x, k_eps = jax.random.split(key, 3)
    params = init_params(k_param, IN_FEAT, G_HIDDEN, G_LATENT,
                         adj_shape, RNN_FEAT, OUT_FEAT)

    x = jax.random.normal(k_x, (SEQ_LEN, adj_shape, IN_FEAT), jnp.float32)
    eps = jax.random.normal(k_eps, (SEQ_LEN, adj_shape, G_LATENT), jnp.float32)

    out, mu, logvar, adj_recon = vae_rnn_forward(x, eps, a_hat, params,
                                                 tar_len=TAR_LEN)
    jax.block_until_ready((out, mu, logvar, adj_recon))

    assert out.shape == (TAR_LEN, 1, 1)
    assert mu.shape == (adj_shape, G_LATENT)
    assert logvar.shape == (adj_shape, G_LATENT)
    assert adj_recon.shape == (adj_shape, adj_shape)
    print("KERNEL_OK")
</pallas_src>

<mosaic_0001>
module attributes {stable_mosaic.version = 11 : i64} {
  func.func @kernel(%arg0: memref<64x64xf32, #tpu.memory_space<vmem>>, %arg1: memref<64x12xf32, #tpu.memory_space<vmem>>, %arg2: memref<16x8xf32, #tpu.memory_space<vmem>>, %arg3: memref<1x16xf32, #tpu.memory_space<vmem>>, %arg4: memref<16x64xf32, #tpu.memory_space<vmem>>, %arg5: memref<64x384xf32, #tpu.memory_space<vmem>>, %arg6: memref<3x32x96xf32, #tpu.memory_space<vmem>>, %arg7: memref<4x96xf32, #tpu.memory_space<vmem>>, %arg8: memref<33x1xf32, #tpu.memory_space<vmem>>, %arg9: memref<8x1xf32, #tpu.memory_space<vmem>>, %arg10: memref<8x16xf32, #tpu.memory_space<vmem>>) attributes {dimension_semantics = [], scalar_prefetch = 0 : i64, scratch_operands = 0 : i64, tpu.core_type = #tpu.core_type<tc>} {
    %c0 = arith.constant 0 : index
    %c0_0 = arith.constant 0 : index
    %0 = vector.load %arg0[%c0, %c0_0] : memref<64x64xf32, #tpu.memory_space<vmem>>, vector<64x64xf32>
    %c0_1 = arith.constant 0 : index
    %c0_2 = arith.constant 0 : index
    %1 = vector.load %arg1[%c0_1, %c0_2] : memref<64x12xf32, #tpu.memory_space<vmem>>, vector<64x12xf32>
    %2 = vector.extract_strided_slice %1 {offsets = [0, 0], sizes = [64, 8], strides = [1, 1]} : vector<64x12xf32> to vector<64x8xf32>
    %3 = vector.extract_strided_slice %1 {offsets = [0, 8], sizes = [64, 4], strides = [1, 1]} : vector<64x12xf32> to vector<64x4xf32>
    %c0_3 = arith.constant 0 : index
    %c0_4 = arith.constant 0 : index
    %4 = vector.load %arg2[%c0_3, %c0_4] : memref<16x8xf32, #tpu.memory_space<vmem>>, vector<16x8xf32>
    %5 = vector.extract_strided_slice %4 {offsets = [0, 0], sizes = [8, 8], strides = [1, 1]} : vector<16x8xf32> to vector<8x8xf32>
    %6 = vector.extract_strided_slice %4 {offsets = [8, 0], sizes = [8, 8], strides = [1, 1]} : vector<16x8xf32> to vector<8x8xf32>
    %c0_5 = arith.constant 0 : index
    %c0_6 = arith.constant 0 : index
    %7 = vector.load %arg3[%c0_5, %c0_6] : memref<1x16xf32, #tpu.memory_space<vmem>>, vector<1x16xf32>
    %cst = arith.constant dense<0.000000e+00> : vector<64x8xf32>
    %8 = tpu.matmul %2, %5, %cst {dimension_numbers = #tpu.dot_dimension_numbers<[1], [0], [0], [1], [0, 0, 1, 1], [], []>} : vector<64x8xf32>, vector<8x8xf32>, vector<64x8xf32> -> vector<64x8xf32>
    %cst_7 = arith.constant dense<0.000000e+00> : vector<64x8xf32>
    %9 = tpu.matmul %0, %8, %cst_7 {dimension_numbers = #tpu.dot_dimension_numbers<[1], [0], [0], [1], [0, 0, 1, 1], [], []>} : vector<64x64xf32>, vector<64x8xf32>, vector<64x8xf32> -> vector<64x8xf32>
    %10 = vector.extract_strided_slice %7 {offsets = [0, 0], sizes = [1, 8], strides = [1, 1]} : vector<1x16xf32> to vector<1x8xf32>
    %11 = vector.broadcast %10 : vector<1x8xf32> to vector<64x8xf32>
    %12 = arith.addf %9, %11 : vector<64x8xf32>
    %cst_8 = arith.constant dense<0.000000e+00> : vector<64x8xf32>
    %13 = tpu.matmul %12, %6, %cst_8 {dimension_numbers = #tpu.dot_dimension_numbers<[1], [0], [0], [1], [0, 0, 1, 1], [], []>} : vector<64x8xf32>, vector<8x8xf32>, vector<64x8xf32> -> vector<64x8xf32>
    %cst_9 = arith.constant dense<0.000000e+00> : vector<64x8xf32>
    %14 = tpu.matmul %0, %13, %cst_9 {dimension_numbers = #tpu.dot_dimension_numbers<[1], [0], [0], [1], [0, 0, 1, 1], [], []>} : vector<64x64xf32>, vector<64x8xf32>, vector<64x8xf32> -> vector<64x8xf32>
    %15 = vector.extract_strided_slice %7 {offsets = [0, 8], sizes = [1, 8], strides = [1, 1]} : vector<1x16xf32> to vector<1x8xf32>
    %16 = vector.broadcast %15 : vector<1x8xf32> to vector<64x8xf32>
    %17 = arith.addf %14, %16 : vector<64x8xf32>
    %18 = vector.extract_strided_slice %17 {offsets = [0, 0], sizes = [64, 4], strides = [1, 1]} : vector<64x8xf32> to vector<64x4xf32>
    %19 = vector.extract_strided_slice %17 {offsets = [0, 4], sizes = [64, 4], strides = [1, 1]} : vector<64x8xf32> to vector<64x4xf32>
    %cst_10 = arith.constant 5.000000e-01 : f32
    %20 = vector.broadcast %cst_10 : f32 to vector<64x4xf32>
    %21 = arith.mulf %20, %19 : vector<64x4xf32>
    %22 = math.exp %21 : vector<64x4xf32>
    %23 = arith.mulf %3, %22 : vector<64x4xf32>
    %24 = arith.addf %18, %23 : vector<64x4xf32>
    %c0_11 = arith.constant 0 : index
    %c0_12 = arith.constant 0 : index
    %25 = vector.load %arg4[%c0_11, %c0_12] : memref<16x64xf32, #tpu.memory_space<vmem>>, vector<16x64xf32>
    %26 = vector.extract_strided_slice %25 {offsets = [0, 0], sizes = [8, 64], strides = [1, 1]} : vector<16x64xf32> to vector<8x64xf32>
    %27 = vector.extract_strided_slice %25 {offsets = [8, 0], sizes = [8, 64], strides = [1, 1]} : vector<16x64xf32> to vector<8x64xf32>
    %cst_13 = arith.constant dense<0.000000e+00> : vector<8x8xf32>
    %28 = tpu.matmul %26, %17, %cst_13 {dimension_numbers = #tpu.dot_dimension_numbers<[1], [0], [0], [1], [0, 0, 1, 1], [], []>} : vector<8x64xf32>, vector<64x8xf32>, vector<8x8xf32> -> vector<8x8xf32>
    %cst_14 = arith.constant 0.000000e+00 : f32
    %29 = vector.broadcast %cst_14 : f32 to vector<8x8xf32>
    %30 = vector.extract_strided_slice %24 {offsets = [0, 0], sizes = [8, 4], strides = [1, 1]} : vector<64x4xf32> to vector<8x4xf32>
    %cst_15 = arith.constant dense<0.000000e+00> : vector<8x8xf32>
    %31 = tpu.matmul %30, %30, %cst_15 {dimension_numbers = #tpu.dot_dimension_numbers<[1], [1], [0], [0], [0, 0, 1, 0], [], []>} : vector<8x4xf32>, vector<8x4xf32>, vector<8x8xf32> -> vector<8x8xf32>
    %32 = arith.negf %31 : vector<8x8xf32>
    %33 = math.exp %32 : vector<8x8xf32>
    %cst_16 = arith.constant 1.000000e+00 : f32
    %34 = vector.broadcast %cst_16 : f32 to vector<8x8xf32>
    %35 = arith.addf %34, %33 : vector<8x8xf32>
    %36 = arith.divf %34, %35 : vector<8x8xf32>
    %37 = arith.addf %29, %36 : vector<8x8xf32>
    %38 = vector.extract_strided_slice %24 {offsets = [8, 0], sizes = [8, 4], strides = [1, 1]} : vector<64x4xf32> to vector<8x4xf32>
    %cst_17 = arith.constant dense<0.000000e+00> : vector<8x8xf32>
    %39 = tpu.matmul %38, %38, %cst_17 {dimension_numbers = #tpu.dot_dimension_numbers<[1], [1], [0], [0], [0, 0, 1, 0], [], []>} : vector<8x4xf32>, vector<8x4xf32>, vector<8x8xf32> -> vector<8x8xf32>
    %40 = arith.negf %39 : vector<8x8xf32>
    %41 = math.exp %40 : vector<8x8xf32>
    %cst_18 = arith.constant 1.000000e+00 : f32
    %42 = vector.broadcast %cst_18 : f32 to vector<8x8xf32>
    %43 = arith.addf %42, %41 : vector<8x8xf32>
    %44 = arith.divf %42, %43 : vector<8x8xf32>
    %45 = arith.addf %37, %44 : vector<8x8xf32>
    %46 = vector.extract_strided_slice %24 {offsets = [16, 0], sizes = [8, 4], strides = [1, 1]} : vector<64x4xf32> to vector<8x4xf32>
    %cst_19 = arith.constant dense<0.000000e+00> : vector<8x8xf32>
    %47 = tpu.matmul %46, %46, %cst_19 {dimension_numbers = #tpu.dot_dimension_numbers<[1], [1], [0], [0], [0, 0, 1, 0], [], []>} : vector<8x4xf32>, vector<8x4xf32>, vector<8x8xf32> -> vector<8x8xf32>
    %48 = arith.negf %47 : vector<8x8xf32>
    %49 = math.exp %48 : vector<8x8xf32>
    %cst_20 = arith.constant 1.000000e+00 : f32
    %50 = vector.broadcast %cst_20 : f32 to vector<8x8xf32>
    %51 = arith.addf %50, %49 : vector<8x8xf32>
    %52 = arith.divf %50, %51 : vector<8x8xf32>
    %53 = arith.addf %45, %52 : vector<8x8xf32>
    %54 = vector.extract_strided_slice %24 {offsets = [24, 0], sizes = [8, 4], strides = [1, 1]} : vector<64x4xf32> to vector<8x4xf32>
    %cst_21 = arith.constant dense<0.000000e+00> : vector<8x8xf32>
    %55 = tpu.matmul %54, %54, %cst_21 {dimension_numbers = #tpu.dot_dimension_numbers<[1], [1], [0], [0], [0, 0, 1, 0], [], []>} : vector<8x4xf32>, vector<8x4xf32>, vector<8x8xf32> -> vector<8x8xf32>
    %56 = arith.negf %55 : vector<8x8xf32>
    %57 = math.exp %56 : vector<8x8xf32>
    %cst_22 = arith.constant 1.000000e+00 : f32
    %58 = vector.broadcast %cst_22 : f32 to vector<8x8xf32>
    %59 = arith.addf %58, %57 : vector<8x8xf32>
    %60 = arith.divf %58, %59 : vector<8x8xf32>
    %61 = arith.addf %53, %60 : vector<8x8xf32>
    %62 = vector.extract_strided_slice %24 {offsets = [32, 0], sizes = [8, 4], strides = [1, 1]} : vector<64x4xf32> to vector<8x4xf32>
    %cst_23 = arith.constant dense<0.000000e+00> : vector<8x8xf32>
    %63 = tpu.matmul %62, %62, %cst_23 {dimension_numbers = #tpu.dot_dimension_numbers<[1], [1], [0], [0], [0, 0, 1, 0], [], []>} : vector<8x4xf32>, vector<8x4xf32>, vector<8x8xf32> -> vector<8x8xf32>
    %64 = arith.negf %63 : vector<8x8xf32>
    %65 = math.exp %64 : vector<8x8xf32>
    %cst_24 = arith.constant 1.000000e+00 : f32
    %66 = vector.broadcast %cst_24 : f32 to vector<8x8xf32>
    %67 = arith.addf %66, %65 : vector<8x8xf32>
    %68 = arith.divf %66, %67 : vector<8x8xf32>
    %69 = arith.addf %61, %68 : vector<8x8xf32>
    %70 = vector.extract_strided_slice %24 {offsets = [40, 0], sizes = [8, 4], strides = [1, 1]} : vector<64x4xf32> to vector<8x4xf32>
    %cst_25 = arith.constant dense<0.000000e+00> : vector<8x8xf32>
    %71 = tpu.matmul %70, %70, %cst_25 {dimension_numbers = #tpu.dot_dimension_numbers<[1], [1], [0], [0], [0, 0, 1, 0], [], []>} : vector<8x4xf32>, vector<8x4xf32>, vector<8x8xf32> -> vector<8x8xf32>
    %72 = arith.negf %71 : vector<8x8xf32>
    %73 = math.exp %72 : vector<8x8xf32>
    %cst_26 = arith.constant 1.000000e+00 : f32
    %74 = vector.broadcast %cst_26 : f32 to vector<8x8xf32>
    %75 = arith.addf %74, %73 : vector<8x8xf32>
    %76 = arith.divf %74, %75 : vector<8x8xf32>
    %77 = arith.addf %69, %76 : vector<8x8xf32>
    %78 = vector.extract_strided_slice %24 {offsets = [48, 0], sizes = [8, 4], strides = [1, 1]} : vector<64x4xf32> to vector<8x4xf32>
    %cst_27 = arith.constant dense<0.000000e+00> : vector<8x8xf32>
    %79 = tpu.matmul %78, %78, %cst_27 {dimension_numbers = #tpu.dot_dimension_numbers<[1], [1], [0], [0], [0, 0, 1, 0], [], []>} : vector<8x4xf32>, vector<8x4xf32>, vector<8x8xf32> -> vector<8x8xf32>
    %80 = arith.negf %79 : vector<8x8xf32>
    %81 = math.exp %80 : vector<8x8xf32>
    %cst_28 = arith.constant 1.000000e+00 : f32
    %82 = vector.broadcast %cst_28 : f32 to vector<8x8xf32>
    %83 = arith.addf %82, %81 : vector<8x8xf32>
    %84 = arith.divf %82, %83 : vector<8x8xf32>
    %85 = arith.addf %77, %84 : vector<8x8xf32>
    %86 = vector.extract_strided_slice %24 {offsets = [56, 0], sizes = [8, 4], strides = [1, 1]} : vector<64x4xf32> to vector<8x4xf32>
    %cst_29 = arith.constant dense<0.000000e+00> : vector<8x8xf32>
    %87 = tpu.matmul %86, %86, %cst_29 {dimension_numbers = #tpu.dot_dimension_numbers<[1], [1], [0], [0], [0, 0, 1, 0], [], []>} : vector<8x4xf32>, vector<8x4xf32>, vector<8x8xf32> -> vector<8x8xf32>
    %88 = arith.negf %87 : vector<8x8xf32>
    %89 = math.exp %88 : vector<8x8xf32>
    %cst_30 = arith.constant 1.000000e+00 : f32
    %90 = vector.broadcast %cst_30 : f32 to vector<8x8xf32>
    %91 = arith.addf %90, %89 : vector<8x8xf32>
    %92 = arith.divf %90, %91 : vector<8x8xf32>
    %93 = arith.addf %85, %92 : vector<8x8xf32>
    %cst_31 = arith.constant 1.250000e-01 : f32
    %94 = vector.broadcast %cst_31 : f32 to vector<8x8xf32>
    %95 = arith.mulf %93, %94 : vector<8x8xf32>
    %96 = tpu.concatenate %28, %95 in 1 : vector<8x8xf32>, vector<8x8xf32> -> vector<8x16xf32>
    %c0_32 = arith.constant 0 : index
    %c0_33 = arith.constant 0 : index
    %97 = vector.load %arg10[%c0_32, %c0_33] : memref<8x16xf32, #tpu.memory_space<vmem>>, vector<8x16xf32>
    tpu.vector_store %arg10[%c0_32, %c0_33], %96 {strides = array<i32>} : memref<8x16xf32, #tpu.memory_space<vmem>>, vector<8x16xf32>,
    %c0_34 = arith.constant 0 : index
    %c0_35 = arith.constant 0 : index
    %98 = vector.load %arg5[%c0_34, %c0_35] : memref<64x384xf32, #tpu.memory_space<vmem>>, vector<64x384xf32>
    %99 = vector.extract_strided_slice %24 {offsets = [0, 0], sizes = [64, 1], strides = [1, 1]} : vector<64x4xf32> to vector<64x1xf32>
    %100 = vector.extract_strided_slice %98 {offsets = [0, 0], sizes = [64, 96], strides = [1, 1]} : vector<64x384xf32> to vector<64x96xf32>
    %101 = vector.broadcast %99 : vector<64x1xf32> to vector<64x96xf32>
    %102 = arith.mulf %101, %100 : vector<64x96xf32>
    %103 = vector.extract_strided_slice %24 {offsets = [0, 1], sizes = [64, 1], strides = [1, 1]} : vector<64x4xf32> to vector<64x1xf32>
    %104 = vector.extract_strided_slice %98 {offsets = [0, 96], sizes = [64, 96], strides = [1, 1]} : vector<64x384xf32> to vector<64x96xf32>
    %105 = vector.broadcast %103 : vector<64x1xf32> to vector<64x96xf32>
    %106 = arith.mulf %105, %104 : vector<64x96xf32>
    %107 = arith.addf %102, %106 : vector<64x96xf32>
    %108 = vector.extract_strided_slice %24 {offsets = [0, 2], sizes = [64, 1], strides = [1, 1]} : vector<64x4xf32> to vector<64x1xf32>
    %109 = vector.extract_strided_slice %98 {offsets = [0, 192], sizes = [64, 96], strides = [1, 1]} : vector<64x384xf32> to vector<64x96xf32>
    %110 = vector.broadcast %108 : vector<64x1xf32> to vector<64x96xf32>
    %111 = arith.mulf %110, %109 : vector<64x96xf32>
    %112 = arith.addf %107, %111 : vector<64x96xf32>
    %113 = vector.extract_strided_slice %24 {offsets = [0, 3], sizes = [64, 1], strides = [1, 1]} : vector<64x4xf32> to vector<64x1xf32>
    %114 = vector.extract_strided_slice %98 {offsets = [0, 288], sizes = [64, 96], strides = [1, 1]} : vector<64x384xf32> to vector<64x96xf32>
    %115 = vector.broadcast %113 : vector<64x1xf32> to vector<64x96xf32>
    %116 = arith.mulf %115, %114 : vector<64x96xf32>
    %117 = arith.addf %112, %116 : vector<64x96xf32>
    %c0_36 = arith.constant 0 : index
    %c0_37 = arith.constant 0 : index
    %118 = vector.load %arg7[%c0_36, %c0_37] : memref<4x96xf32, #tpu.memory_space<vmem>>, vector<4x96xf32>
    %cst_38 = arith.constant dense<0.000000e+00> : vector<8x96xf32>
    %119 = tpu.matmul %27, %117, %cst_38 {dimension_numbers = #tpu.dot_dimension_numbers<[1], [0], [0], [1], [0, 0, 1, 1], [], []>} : vector<8x64xf32>, vector<64x96xf32>, vector<8x96xf32> -> vector<8x96xf32>
    %120 = vector.extract_strided_slice %118 {offsets = [0, 0], sizes = [1, 96], strides = [1, 1]} : vector<4x96xf32> to vector<1x96xf32>
    %121 = vector.broadcast %120 : vector<1x96xf32> to vector<8x96xf32>
    %122 = arith.addf %119, %121 : vector<8x96xf32>
    %c0_39 = arith.constant 0 : index
    %c0_40 = arith.constant 0 : index
    %c0_41 = arith.constant 0 : index
    %123 = vector.load %arg6[%c0_39, %c0_40, %c0_41] : memref<3x32x96xf32, #tpu.memory_space<vmem>>, vector<1x32x96xf32>
    %124 = vector.shape_cast %123 : vector<1x32x96xf32> to vector<32x96xf32>
    %c1 = arith.constant 1 : index
    %c0_42 = arith.constant 0 : index
    %c0_43 = arith.constant 0 : index
    %125 = vector.load %arg6[%c1, %c0_42, %c0_43] : memref<3x32x96xf32, #tpu.memory_space<vmem>>, vector<1x32x96xf32>
    %126 = vector.shape_cast %125 : vector<1x32x96xf32> to vector<32x96xf32>
    %c2 = arith.constant 2 : index
    %c0_44 = arith.constant 0 : index
    %c0_45 = arith.constant 0 : index
    %127 = vector.load %arg6[%c2, %c0_44, %c0_45] : memref<3x32x96xf32, #tpu.memory_space<vmem>>, vector<1x32x96xf32>
    %128 = vector.shape_cast %127 : vector<1x32x96xf32> to vector<32x96xf32>
    %129 = vector.extract_strided_slice %118 {offsets = [1, 0], sizes = [1, 96], strides = [1, 1]} : vector<4x96xf32> to vector<1x96xf32>
    %130 = vector.extract_strided_slice %118 {offsets = [2, 0], sizes = [1, 96], strides = [1, 1]} : vector<4x96xf32> to vector<1x96xf32>
    %131 = vector.extract_strided_slice %118 {offsets = [3, 0], sizes = [1, 96], strides = [1, 1]} : vector<4x96xf32> to vector<1x96xf32>
    %cst_46 = arith.constant 0.000000e+00 : f32
    %132 = vector.broadcast %cst_46 : f32 to vector<1x32xf32>
    %cst_47 = arith.constant 0.000000e+00 : f32
    %133 = vector.broadcast %cst_47 : f32 to vector<1x32xf32>
    %cst_48 = arith.constant dense<0.000000e+00> : vector<1x96xf32>
    %134 = tpu.matmul %132, %124, %cst_48 {dimension_numbers = #tpu.dot_dimension_numbers<[1], [0], [0], [1], [0, 0, 1, 1], [], []>} : vector<1x32xf32>, vector<32x96xf32>, vector<1x96xf32> -> vector<1x96xf32>
    %135 = arith.addf %134, %129 : vector<1x96xf32>
    %136 = vector.extract_strided_slice %122 {offsets = [0, 0], sizes = [1, 96], strides = [1, 1]} : vector<8x96xf32> to vector<1x96xf32>
    %137 = vector.extract_strided_slice %136 {offsets = [0, 0], sizes = [1, 32], strides = [1, 1]} : vector<1x96xf32> to vector<1x32xf32>
    %138 = vector.extract_strided_slice %135 {offsets = [0, 0], sizes = [1, 32], strides = [1, 1]} : vector<1x96xf32> to vector<1x32xf32>
    %139 = arith.addf %137, %138 : vector<1x32xf32>
    %140 = arith.negf %139 : vector<1x32xf32>
    %141 = math.exp %140 : vector<1x32xf32>
    %cst_49 = arith.constant 1.000000e+00 : f32
    %142 = vector.broadcast %cst_49 : f32 to vector<1x32xf32>
    %143 = arith.addf %142, %141 : vector<1x32xf32>
    %144 = arith.divf %142, %143 : vector<1x32xf32>
    %145 = vector.extract_strided_slice %136 {offsets = [0, 32], sizes = [1, 32], strides = [1, 1]} : vector<1x96xf32> to vector<1x32xf32>
    %146 = vector.extract_strided_slice %135 {offsets = [0, 32], sizes = [1, 32], strides = [1, 1]} : vector<1x96xf32> to vector<1x32xf32>
    %147 = arith.addf %145, %146 : vector<1x32xf32>
    %148 = arith.negf %147 : vector<1x32xf32>
    %149 = math.exp %148 : vector<1x32xf32>
    %cst_50 = arith.constant 1.000000e+00 : f32
    %150 = vector.broadcast %cst_50 : f32 to vector<1x32xf32>
    %151 = arith.addf %150, %149 : vector<1x32xf32>
    %152 = arith.divf %150, %151 : vector<1x32xf32>
    %153 = vector.extract_strided_slice %136 {offsets = [0, 64], sizes = [1, 32], strides = [1, 1]} : vector<1x96xf32> to vector<1x32xf32>
    %154 = vector.extract_strided_slice %135 {offsets = [0, 64], sizes = [1, 32], strides = [1, 1]} : vector<1x96xf32> to vector<1x32xf32>
    %155 = arith.mulf %144, %154 : vector<1x32xf32>
    %156 = arith.addf %153, %155 : vector<1x32xf32>
    %157 = math.tanh %156 : vector<1x32xf32>
    %cst_51 = arith.constant 1.000000e+00 : f32
    %158 = vector.broadcast %cst_51 : f32 to vector<1x32xf32>
    %159 = arith.subf %158, %152 : vector<1x32xf32>
    %160 = arith.mulf %159, %157 : vector<1x32xf32>
    %161 = arith.mulf %152, %132 : vector<1x32xf32>
    %162 = arith.addf %160, %161 : vector<1x32xf32>
    %cst_52 = arith.constant dense<0.000000e+00> : vector<1x96xf32>
    %163 = tpu.matmul %162, %126, %cst_52 {dimension_numbers = #tpu.dot_dimension_numbers<[1], [0], [0], [1], [0, 0, 1, 1], [], []>} : vector<1x32xf32>, vector<32x96xf32>, vector<1x96xf32> -> vector<1x96xf32>
    %164 = arith.addf %163, %130 : vector<1x96xf32>
    %cst_53 = arith.constant dense<0.000000e+00> : vector<1x96xf32>
    %165 = tpu.matmul %133, %128, %cst_53 {dimension_numbers = #tpu.dot_dimension_numbers<[1], [0], [0], [1], [0, 0, 1, 1], [], []>} : vector<1x32xf32>, vector<32x96xf32>, vector<1x96xf32> -> vector<1x96xf32>
    %166 = arith.addf %165, %131 : vector<1x96xf32>
    %167 = vector.extract_strided_slice %164 {offsets = [0, 0], sizes = [1, 32], strides = [1, 1]} : vector<1x96xf32> to vector<1x32xf32>
    %168 = vector.extract_strided_slice %166 {offsets = [0, 0], sizes = [1, 32], strides = [1, 1]} : vector<1x96xf32> to vector<1x32xf32>
    %169 = arith.addf %167, %168 : vector<1x32xf32>
    %170 = arith.negf %169 : vector<1x32xf32>
    %171 = math.exp %170 : vector<1x32xf32>
    %cst_54 = arith.constant 1.000000e+00 : f32
    %172 = vector.broadcast %cst_54 : f32 to vector<1x32xf32>
    %173 = arith.addf %172, %171 : vector<1x32xf32>
    %174 = arith.divf %172, %173 : vector<1x32xf32>
    %175 = vector.extract_strided_slice %164 {offsets = [0, 32], sizes = [1, 32], strides = [1, 1]} : vector<1x96xf32> to vector<1x32xf32>
    %176 = vector.extract_strided_slice %166 {offsets = [0, 32], sizes = [1, 32], strides = [1, 1]} : vector<1x96xf32> to vector<1x32xf32>
    %177 = arith.addf %175, %176 : vector<1x32xf32>
    %178 = arith.negf %177 : vector<1x32xf32>
    %179 = math.exp %178 : vector<1x32xf32>
    %cst_55 = arith.constant 1.000000e+00 : f32
    %180 = vector.broadcast %cst_55 : f32 to vector<1x32xf32>
    %181 = arith.addf %180, %179 : vector<1x32xf32>
    %182 = arith.divf %180, %181 : vector<1x32xf32>
    %183 = vector.extract_strided_slice %164 {offsets = [0, 64], sizes = [1, 32], strides = [1, 1]} : vector<1x96xf32> to vector<1x32xf32>
    %184 = vector.extract_strided_slice %166 {offsets = [0, 64], sizes = [1, 32], strides = [1, 1]} : vector<1x96xf32> to vector<1x32xf32>
    %185 = arith.mulf %174, %184 : vector<1x32xf32>
    %186 = arith.addf %183, %185 : vector<1x32xf32>
    %187 = math.tanh %186 : vector<1x32xf32>
    %cst_56 = arith.constant 1.000000e+00 : f32
    %188 = vector.broadcast %cst_56 : f32 to vector<1x32xf32>
    %189 = arith.subf %188, %182 : vector<1x32xf32>
    %190 = arith.mulf %189, %187 : vector<1x32xf32>
    %191 = arith.mulf %182, %133 : vector<1x32xf32>
    %192 = arith.addf %190, %191 : vector<1x32xf32>
    %cst_57 = arith.constant dense<0.000000e+00> : vector<1x96xf32>
    %193 = tpu.matmul %162, %124, %cst_57 {dimension_numbers = #tpu.dot_dimension_numbers<[1], [0], [0], [1], [0, 0, 1, 1], [], []>} : vector<1x32xf32>, vector<32x96xf32>, vector<1x96xf32> -> vector<1x96xf32>
    %194 = arith.addf %193, %129 : vector<1x96xf32>
    %195 = vector.extract_strided_slice %122 {offsets = [1, 0], sizes = [1, 96], strides = [1, 1]} : vector<8x96xf32> to vector<1x96xf32>
    %196 = vector.extract_strided_slice %195 {offsets = [0, 0], sizes = [1, 32], strides = [1, 1]} : vector<1x96xf32> to vector<1x32xf32>
    %197 = vector.extract_strided_slice %194 {offsets = [0, 0], sizes = [1, 32], strides = [1, 1]} : vector<1x96xf32> to vector<1x32xf32>
    %198 = arith.addf %196, %197 : vector<1x32xf32>
    %199 = arith.negf %198 : vector<1x32xf32>
    %200 = math.exp %199 : vector<1x32xf32>
    %cst_58 = arith.constant 1.000000e+00 : f32
    %201 = vector.broadcast %cst_58 : f32 to vector<1x32xf32>
    %202 = arith.addf %201, %200 : vector<1x32xf32>
    %203 = arith.divf %201, %202 : vector<1x32xf32>
    %204 = vector.extract_strided_slice %195 {offsets = [0, 32], sizes = [1, 32], strides = [1, 1]} : vector<1x96xf32> to vector<1x32xf32>
    %205 = vector.extract_strided_slice %194 {offsets = [0, 32], sizes = [1, 32], strides = [1, 1]} : vector<1x96xf32> to vector<1x32xf32>
    %206 = arith.addf %204, %205 : vector<1x32xf32>
    %207 = arith.negf %206 : vector<1x32xf32>
    %208 = math.exp %207 : vector<1x32xf32>
    %cst_59 = arith.constant 1.000000e+00 : f32
    %209 = vector.broadcast %cst_59 : f32 to vector<1x32xf32>
    %210 = arith.addf %209, %208 : vector<1x32xf32>
    %211 = arith.divf %209, %210 : vector<1x32xf32>
    %212 = vector.extract_strided_slice %195 {offsets = [0, 64], sizes = [1, 32], strides = [1, 1]} : vector<1x96xf32> to vector<1x32xf32>
    %213 = vector.extract_strided_slice %194 {offsets = [0, 64], sizes = [1, 32], strides = [1, 1]} : vector<1x96xf32> to vector<1x32xf32>
    %214 = arith.mulf %203, %213 : vector<1x32xf32>
    %215 = arith.addf %212, %214 : vector<1x32xf32>
    %216 = math.tanh %215 : vector<1x32xf32>
    %cst_60 = arith.constant 1.000000e+00 : f32
    %217 = vector.broadcast %cst_60 : f32 to vector<1x32xf32>
    %218 = arith.subf %217, %211 : vector<1x32xf32>
    %219 = arith.mulf %218, %216 : vector<1x32xf32>
    %220 = arith.mulf %211, %162 : vector<1x32xf32>
    %221 = arith.addf %219, %220 : vector<1x32xf32>
    %cst_61 = arith.constant dense<0.000000e+00> : vector<1x96xf32>
    %222 = tpu.matmul %221, %126, %cst_61 {dimension_numbers = #tpu.dot_dimension_numbers<[1], [0], [0], [1], [0, 0, 1, 1], [], []>} : vector<1x32xf32>, vector<32x96xf32>, vector<1x96xf32> -> vector<1x96xf32>
    %223 = arith.addf %222, %130 : vector<1x96xf32>
    %cst_62 = arith.constant dense<0.000000e+00> : vector<1x96xf32>
    %224 = tpu.matmul %192, %128, %cst_62 {dimension_numbers = #tpu.dot_dimension_numbers<[1], [0], [0], [1], [0, 0, 1, 1], [], []>} : vector<1x32xf32>, vector<32x96xf32>, vector<1x96xf32> -> vector<1x96xf32>
    %225 = arith.addf %224, %131 : vector<1x96xf32>
    %226 = vector.extract_strided_slice %223 {offsets = [0, 0], sizes = [1, 32], strides = [1, 1]} : vector<1x96xf32> to vector<1x32xf32>
    %227 = vector.extract_strided_slice %225 {offsets = [0, 0], sizes = [1, 32], strides = [1, 1]} : vector<1x96xf32> to vector<1x32xf32>
    %228 = arith.addf %226, %227 : vector<1x32xf32>
    %229 = arith.negf %228 : vector<1x32xf32>
    %230 = math.exp %229 : vector<1x32xf32>
    %cst_63 = arith.constant 1.000000e+00 : f32
    %231 = vector.broadcast %cst_63 : f32 to vector<1x32xf32>
    %232 = arith.addf %231, %230 : vector<1x32xf32>
    %233 = arith.divf %231, %232 : vector<1x32xf32>
    %234 = vector.extract_strided_slice %223 {offsets = [0, 32], sizes = [1, 32], strides = [1, 1]} : vector<1x96xf32> to vector<1x32xf32>
    %235 = vector.extract_strided_slice %225 {offsets = [0, 32], sizes = [1, 32], strides = [1, 1]} : vector<1x96xf32> to vector<1x32xf32>
    %236 = arith.addf %234, %235 : vector<1x32xf32>
    %237 = arith.negf %236 : vector<1x32xf32>
    %238 = math.exp %237 : vector<1x32xf32>
    %cst_64 = arith.constant 1.000000e+00 : f32
    %239 = vector.broadcast %cst_64 : f32 to vector<1x32xf32>
    %240 = arith.addf %239, %238 : vector<1x32xf32>
    %241 = arith.divf %239, %240 : vector<1x32xf32>
    %242 = vector.extract_strided_slice %223 {offsets = [0, 64], sizes = [1, 32], strides = [1, 1]} : vector<1x96xf32> to vector<1x32xf32>
    %243 = vector.extract_strided_slice %225 {offsets = [0, 64], sizes = [1, 32], strides = [1, 1]} : vector<1x96xf32> to vector<1x32xf32>
    %244 = arith.mulf %233, %243 : vector<1x32xf32>
    %245 = arith.addf %242, %244 : vector<1x32xf32>
    %246 = math.tanh %245 : vector<1x32xf32>
    %cst_65 = arith.constant 1.000000e+00 : f32
    %247 = vector.broadcast %cst_65 : f32 to vector<1x32xf32>
    %248 = arith.subf %247, %241 : vector<1x32xf32>
    %249 = arith.mulf %248, %246 : vector<1x32xf32>
    %250 = arith.mulf %241, %192 : vector<1x32xf32>
    %251 = arith.addf %249, %250 : vector<1x32xf32>
    %cst_66 = arith.constant dense<0.000000e+00> : vector<1x96xf32>
    %252 = tpu.matmul %221, %124, %cst_66 {dimension_numbers = #tpu.dot_dimension_numbers<[1], [0], [0], [1], [0, 0, 1, 1], [], []>} : vector<1x32xf32>, vector<32x96xf32>, vector<1x96xf32> -> vector<1x96xf32>
    %253 = arith.addf %252, %129 : vector<1x96xf32>
    %254 = vector.extract_strided_slice %122 {offsets = [2, 0], sizes = [1, 96], strides = [1, 1]} : vector<8x96xf32> to vector<1x96xf32>
    %255 = vector.extract_strided_slice %254 {offsets = [0, 0], sizes = [1, 32], strides = [1, 1]} : vector<1x96xf32> to vector<1x32xf32>
    %256 = vector.extract_strided_slice %253 {offsets = [0, 0], sizes = [1, 32], strides = [1, 1]} : vector<1x96xf32> to vector<1x32xf32>
    %257 = arith.addf %255, %256 : vector<1x32xf32>
    %258 = arith.negf %257 : vector<1x32xf32>
    %259 = math.exp %258 : vector<1x32xf32>
    %cst_67 = arith.constant 1.000000e+00 : f32
    %260 = vector.broadcast %cst_67 : f32 to vector<1x32xf32>
    %261 = arith.addf %260, %259 : vector<1x32xf32>
    %262 = arith.divf %260, %261 : vector<1x32xf32>
    %263 = vector.extract_strided_slice %254 {offsets = [0, 32], sizes = [1, 32], strides = [1, 1]} : vector<1x96xf32> to vector<1x32xf32>
    %264 = vector.extract_strided_slice %253 {offsets = [0, 32], sizes = [1, 32], strides = [1, 1]} : vector<1x96xf32> to vector<1x32xf32>
    %265 = arith.addf %263, %264 : vector<1x32xf32>
    %266 = arith.negf %265 : vector<1x32xf32>
    %267 = math.exp %266 : vector<1x32xf32>
    %cst_68 = arith.constant 1.000000e+00 : f32
    %268 = vector.broadcast %cst_68 : f32 to vector<1x32xf32>
    %269 = arith.addf %268, %267 : vector<1x32xf32>
    %270 = arith.divf %268, %269 : vector<1x32xf32>
    %271 = vector.extract_strided_slice %254 {offsets = [0, 64], sizes = [1, 32], strides = [1, 1]} : vector<1x96xf32> to vector<1x32xf32>
    %272 = vector.extract_strided_slice %253 {offsets = [0, 64], sizes = [1, 32], strides = [1, 1]} : vector<1x96xf32> to vector<1x32xf32>
    %273 = arith.mulf %262, %272 : vector<1x32xf32>
    %274 = arith.addf %271, %273 : vector<1x32xf32>
    %275 = math.tanh %274 : vector<1x32xf32>
    %cst_69 = arith.constant 1.000000e+00 : f32
    %276 = vector.broadcast %cst_69 : f32 to vector<1x32xf32>
    %277 = arith.subf %276, %270 : vector<1x32xf32>
    %278 = arith.mulf %277, %275 : vector<1x32xf32>
    %279 = arith.mulf %270, %221 : vector<1x32xf32>
    %280 = arith.addf %278, %279 : vector<1x32xf32>
    %cst_70 = arith.constant dense<0.000000e+00> : vector<1x96xf32>
    %281 = tpu.matmul %280, %126, %cst_70 {dimension_numbers = #tpu.dot_dimension_numbers<[1], [0], [0], [1], [0, 0, 1, 1], [], []>} : vector<1x32xf32>, vector<32x96xf32>, vector<1x96xf32> -> vector<1x96xf32>
    %282 = arith.addf %281, %130 : vector<1x96xf32>
    %cst_71 = arith.constant dense<0.000000e+00> : vector<1x96xf32>
    %283 = tpu.matmul %251, %128, %cst_71 {dimension_numbers = #tpu.dot_dimension_numbers<[1], [0], [0], [1], [0, 0, 1, 1], [], []>} : vector<1x32xf32>, vector<32x96xf32>, vector<1x96xf32> -> vector<1x96xf32>
    %284 = arith.addf %283, %131 : vector<1x96xf32>
    %285 = vector.extract_strided_slice %282 {offsets = [0, 0], sizes = [1, 32], strides = [1, 1]} : vector<1x96xf32> to vector<1x32xf32>
    %286 = vector.extract_strided_slice %284 {offsets = [0, 0], sizes = [1, 32], strides = [1, 1]} : vector<1x96xf32> to vector<1x32xf32>
    %287 = arith.addf %285, %286 : vector<1x32xf32>
    %288 = arith.negf %287 : vector<1x32xf32>
    %289 = math.exp %288 : vector<1x32xf32>
    %cst_72 = arith.constant 1.000000e+00 : f32
    %290 = vector.broadcast %cst_72 : f32 to vector<1x32xf32>
    %291 = arith.addf %290, %289 : vector<1x32xf32>
    %292 = arith.divf %290, %291 : vector<1x32xf32>
    %293 = vector.extract_strided_slice %282 {offsets = [0, 32], sizes = [1, 32], strides = [1, 1]} : vector<1x96xf32> to vector<1x32xf32>
    %294 = vector.extract_strided_slice %284 {offsets = [0, 32], sizes = [1, 32], strides = [1, 1]} : vector<1x96xf32> to vector<1x32xf32>
    %295 = arith.addf %293, %294 : vector<1x32xf32>
    %296 = arith.negf %295 : vector<1x32xf32>
    %297 = math.exp %296 : vector<1x32xf32>
    %cst_73 = arith.constant 1.000000e+00 : f32
    %298 = vector.broadcast %cst_73 : f32 to vector<1x32xf32>
    %299 = arith.addf %298, %297 : vector<1x32xf32>
    %300 = arith.divf %298, %299 : vector<1x32xf32>
    %301 = vector.extract_strided_slice %282 {offsets = [0, 64], sizes = [1, 32], strides = [1, 1]} : vector<1x96xf32> to vector<1x32xf32>
    %302 = vector.extract_strided_slice %284 {offsets = [0, 64], sizes = [1, 32], strides = [1, 1]} : vector<1x96xf32> to vector<1x32xf32>
    %303 = arith.mulf %292, %302 : vector<1x32xf32>
    %304 = arith.addf %301, %303 : vector<1x32xf32>
    %305 = math.tanh %304 : vector<1x32xf32>
    %cst_74 = arith.constant 1.000000e+00 : f32
    %306 = vector.broadcast %cst_74 : f32 to vector<1x32xf32>
    %307 = arith.subf %306, %300 : vector<1x32xf32>
    %308 = arith.mulf %307, %305 : vector<1x32xf32>
    %309 = arith.mulf %300, %251 : vector<1x32xf32>
    %310 = arith.addf %308, %309 : vector<1x32xf32>
    %cst_75 = arith.constant dense<0.000000e+00> : vector<1x96xf32>
    %311 = tpu.matmul %280, %124, %cst_75 {dimension_numbers = #tpu.dot_dimension_numbers<[1], [0], [0], [1], [0, 0, 1, 1], [], []>} : vector<1x32xf32>, vector<32x96xf32>, vector<1x96xf32> -> vector<1x96xf32>
    %312 = arith.addf %311, %129 : vector<1x96xf32>
    %313 = vector.extract_strided_slice %122 {offsets = [3, 0], sizes = [1, 96], strides = [1, 1]} : vector<8x96xf32> to vector<1x96xf32>
    %314 = vector.extract_strided_slice %313 {offsets = [0, 0], sizes = [1, 32], strides = [1, 1]} : vector<1x96xf32> to vector<1x32xf32>
    %315 = vector.extract_strided_slice %312 {offsets = [0, 0], sizes = [1, 32], strides = [1, 1]} : vector<1x96xf32> to vector<1x32xf32>
    %316 = arith.addf %314, %315 : vector<1x32xf32>
    %317 = arith.negf %316 : vector<1x32xf32>
    %318 = math.exp %317 : vector<1x32xf32>
    %cst_76 = arith.constant 1.000000e+00 : f32
    %319 = vector.broadcast %cst_76 : f32 to vector<1x32xf32>
    %320 = arith.addf %319, %318 : vector<1x32xf32>
    %321 = arith.divf %319, %320 : vector<1x32xf32>
    %322 = vector.extract_strided_slice %313 {offsets = [0, 32], sizes = [1, 32], strides = [1, 1]} : vector<1x96xf32> to vector<1x32xf32>
    %323 = vector.extract_strided_slice %312 {offsets = [0, 32], sizes = [1, 32], strides = [1, 1]} : vector<1x96xf32> to vector<1x32xf32>
    %324 = arith.addf %322, %323 : vector<1x32xf32>
    %325 = arith.negf %324 : vector<1x32xf32>
    %326 = math.exp %325 : vector<1x32xf32>
    %cst_77 = arith.constant 1.000000e+00 : f32
    %327 = vector.broadcast %cst_77 : f32 to vector<1x32xf32>
    %328 = arith.addf %327, %326 : vector<1x32xf32>
    %329 = arith.divf %327, %328 : vector<1x32xf32>
    %330 = vector.extract_strided_slice %313 {offsets = [0, 64], sizes = [1, 32], strides = [1, 1]} : vector<1x96xf32> to vector<1x32xf32>
    %331 = vector.extract_strided_slice %312 {offsets = [0, 64], sizes = [1, 32], strides = [1, 1]} : vector<1x96xf32> to vector<1x32xf32>
    %332 = arith.mulf %321, %331 : vector<1x32xf32>
    %333 = arith.addf %330, %332 : vector<1x32xf32>
    %334 = math.tanh %333 : vector<1x32xf32>
    %cst_78 = arith.constant 1.000000e+00 : f32
    %335 = vector.broadcast %cst_78 : f32 to vector<1x32xf32>
    %336 = arith.subf %335, %329 : vector<1x32xf32>
    %337 = arith.mulf %336, %334 : vector<1x32xf32>
    %338 = arith.mulf %329, %280 : vector<1x32xf32>
    %339 = arith.addf %337, %338 : vector<1x32xf32>
    %cst_79 = arith.constant dense<0.000000e+00> : vector<1x96xf32>
    %340 = tpu.matmul %339, %126, %cst_79 {dimension_numbers = #tpu.dot_dimension_numbers<[1], [0], [0], [1], [0, 0, 1, 1], [], []>} : vector<1x32xf32>, vector<32x96xf32>, vector<1x96xf32> -> vector<1x96xf32>
    %341 = arith.addf %340, %130 : vector<1x96xf32>
    %cst_80 = arith.constant dense<0.000000e+00> : vector<1x96xf32>
    %342 = tpu.matmul %310, %128, %cst_80 {dimension_numbers = #tpu.dot_dimension_numbers<[1], [0], [0], [1], [0, 0, 1, 1], [], []>} : vector<1x32xf32>, vector<32x96xf32>, vector<1x96xf32> -> vector<1x96xf32>
    %343 = arith.addf %342, %131 : vector<1x96xf32>
    %344 = vector.extract_strided_slice %341 {offsets = [0, 0], sizes = [1, 32], strides = [1, 1]} : vector<1x96xf32> to vector<1x32xf32>
    %345 = vector.extract_strided_slice %343 {offsets = [0, 0], sizes = [1, 32], strides = [1, 1]} : vector<1x96xf32> to vector<1x32xf32>
    %346 = arith.addf %344, %345 : vector<1x32xf32>
    %347 = arith.negf %346 : vector<1x32xf32>
    %348 = math.exp %347 : vector<1x32xf32>
    %cst_81 = arith.constant 1.000000e+00 : f32
    %349 = vector.broadcast %cst_81 : f32 to vector<1x32xf32>
    %350 = arith.addf %349, %348 : vector<1x32xf32>
    %351 = arith.divf %349, %350 : vector<1x32xf32>
    %352 = vector.extract_strided_slice %341 {offsets = [0, 32], sizes = [1, 32], strides = [1, 1]} : vector<1x96xf32> to vector<1x32xf32>
    %353 = vector.extract_strided_slice %343 {offsets = [0, 32], sizes = [1, 32], strides = [1, 1]} : vector<1x96xf32> to vector<1x32xf32>
    %354 = arith.addf %352, %353 : vector<1x32xf32>
    %355 = arith.negf %354 : vector<1x32xf32>
    %356 = math.exp %355 : vector<1x32xf32>
    %cst_82 = arith.constant 1.000000e+00 : f32
    %357 = vector.broadcast %cst_82 : f32 to vector<1x32xf32>
    %358 = arith.addf %357, %356 : vector<1x32xf32>
    %359 = arith.divf %357, %358 : vector<1x32xf32>
    %360 = vector.extract_strided_slice %341 {offsets = [0, 64], sizes = [1, 32], strides = [1, 1]} : vector<1x96xf32> to vector<1x32xf32>
    %361 = vector.extract_strided_slice %343 {offsets = [0, 64], sizes = [1, 32], strides = [1, 1]} : vector<1x96xf32> to vector<1x32xf32>
    %362 = arith.mulf %351, %361 : vector<1x32xf32>
    %363 = arith.addf %360, %362 : vector<1x32xf32>
    %364 = math.tanh %363 : vector<1x32xf32>
    %cst_83 = arith.constant 1.000000e+00 : f32
    %365 = vector.broadcast %cst_83 : f32 to vector<1x32xf32>
    %366 = arith.subf %365, %359 : vector<1x32xf32>
    %367 = arith.mulf %366, %364 : vector<1x32xf32>
    %368 = arith.mulf %359, %310 : vector<1x32xf32>
    %369 = arith.addf %367, %368 : vector<1x32xf32>
    %cst_84 = arith.constant dense<0.000000e+00> : vector<1x96xf32>
    %370 = tpu.matmul %339, %124, %cst_84 {dimension_numbers = #tpu.dot_dimension_numbers<[1], [0], [0], [1], [0, 0, 1, 1], [], []>} : vector<1x32xf32>, vector<32x96xf32>, vector<1x96xf32> -> vector<1x96xf32>
    %371 = arith.addf %370, %129 : vector<1x96xf32>
    %372 = vector.extract_strided_slice %122 {offsets = [4, 0], sizes = [1, 96], strides = [1, 1]} : vector<8x96xf32> to vector<1x96xf32>
    %373 = vector.extract_strided_slice %372 {offsets = [0, 0], sizes = [1, 32], strides = [1, 1]} : vector<1x96xf32> to vector<1x32xf32>
    %374 = vector.extract_strided_slice %371 {offsets = [0, 0], sizes = [1, 32], strides = [1, 1]} : vector<1x96xf32> to vector<1x32xf32>
    %375 = arith.addf %373, %374 : vector<1x32xf32>
    %376 = arith.negf %375 : vector<1x32xf32>
    %377 = math.exp %376 : vector<1x32xf32>
    %cst_85 = arith.constant 1.000000e+00 : f32
    %378 = vector.broadcast %cst_85 : f32 to vector<1x32xf32>
    %379 = arith.addf %378, %377 : vector<1x32xf32>
    %380 = arith.divf %378, %379 : vector<1x32xf32>
    %381 = vector.extract_strided_slice %372 {offsets = [0, 32], sizes = [1, 32], strides = [1, 1]} : vector<1x96xf32> to vector<1x32xf32>
    %382 = vector.extract_strided_slice %371 {offsets = [0, 32], sizes = [1, 32], strides = [1, 1]} : vector<1x96xf32> to vector<1x32xf32>
    %383 = arith.addf %381, %382 : vector<1x32xf32>
    %384 = arith.negf %383 : vector<1x32xf32>
    %385 = math.exp %384 : vector<1x32xf32>
    %cst_86 = arith.constant 1.000000e+00 : f32
    %386 = vector.broadcast %cst_86 : f32 to vector<1x32xf32>
    %387 = arith.addf %386, %385 : vector<1x32xf32>
    %388 = arith.divf %386, %387 : vector<1x32xf32>
    %389 = vector.extract_strided_slice %372 {offsets = [0, 64], sizes = [1, 32], strides = [1, 1]} : vector<1x96xf32> to vector<1x32xf32>
    %390 = vector.extract_strided_slice %371 {offsets = [0, 64], sizes = [1, 32], strides = [1, 1]} : vector<1x96xf32> to vector<1x32xf32>
    %391 = arith.mulf %380, %390 : vector<1x32xf32>
    %392 = arith.addf %389, %391 : vector<1x32xf32>
    %393 = math.tanh %392 : vector<1x32xf32>
    %cst_87 = arith.constant 1.000000e+00 : f32
    %394 = vector.broadcast %cst_87 : f32 to vector<1x32xf32>
    %395 = arith.subf %394, %388 : vector<1x32xf32>
    %396 = arith.mulf %395, %393 : vector<1x32xf32>
    %397 = arith.mulf %388, %339 : vector<1x32xf32>
    %398 = arith.addf %396, %397 : vector<1x32xf32>
    %cst_88 = arith.constant dense<0.000000e+00> : vector<1x96xf32>
    %399 = tpu.matmul %398, %126, %cst_88 {dimension_numbers = #tpu.dot_dimension_numbers<[1], [0], [0], [1], [0, 0, 1, 1], [], []>} : vector<1x32xf32>, vector<32x96xf32>, vector<1x96xf32> -> vector<1x96xf32>
    %400 = arith.addf %399, %130 : vector<1x96xf32>
    %cst_89 = arith.constant dense<0.000000e+00> : vector<1x96xf32>
    %401 = tpu.matmul %369, %128, %cst_89 {dimension_numbers = #tpu.dot_dimension_numbers<[1], [0], [0], [1], [0, 0, 1, 1], [], []>} : vector<1x32xf32>, vector<32x96xf32>, vector<1x96xf32> -> vector<1x96xf32>
    %402 = arith.addf %401, %131 : vector<1x96xf32>
    %403 = vector.extract_strided_slice %400 {offsets = [0, 0], sizes = [1, 32], strides = [1, 1]} : vector<1x96xf32> to vector<1x32xf32>
    %404 = vector.extract_strided_slice %402 {offsets = [0, 0], sizes = [1, 32], strides = [1, 1]} : vector<1x96xf32> to vector<1x32xf32>
    %405 = arith.addf %403, %404 : vector<1x32xf32>
    %406 = arith.negf %405 : vector<1x32xf32>
    %407 = math.exp %406 : vector<1x32xf32>
    %cst_90 = arith.constant 1.000000e+00 : f32
    %408 = vector.broadcast %cst_90 : f32 to vector<1x32xf32>
    %409 = arith.addf %408, %407 : vector<1x32xf32>
    %410 = arith.divf %408, %409 : vector<1x32xf32>
    %411 = vector.extract_strided_slice %400 {offsets = [0, 32], sizes = [1, 32], strides = [1, 1]} : vector<1x96xf32> to vector<1x32xf32>
    %412 = vector.extract_strided_slice %402 {offsets = [0, 32], sizes = [1, 32], strides = [1, 1]} : vector<1x96xf32> to vector<1x32xf32>
    %413 = arith.addf %411, %412 : vector<1x32xf32>
    %414 = arith.negf %413 : vector<1x32xf32>
    %415 = math.exp %414 : vector<1x32xf32>
    %cst_91 = arith.constant 1.000000e+00 : f32
    %416 = vector.broadcast %cst_91 : f32 to vector<1x32xf32>
    %417 = arith.addf %416, %415 : vector<1x32xf32>
    %418 = arith.divf %416, %417 : vector<1x32xf32>
    %419 = vector.extract_strided_slice %400 {offsets = [0, 64], sizes = [1, 32], strides = [1, 1]} : vector<1x96xf32> to vector<1x32xf32>
    %420 = vector.extract_strided_slice %402 {offsets = [0, 64], sizes = [1, 32], strides = [1, 1]} : vector<1x96xf32> to vector<1x32xf32>
    %421 = arith.mulf %410, %420 : vector<1x32xf32>
    %422 = arith.addf %419, %421 : vector<1x32xf32>
    %423 = math.tanh %422 : vector<1x32xf32>
    %cst_92 = arith.constant 1.000000e+00 : f32
    %424 = vector.broadcast %cst_92 : f32 to vector<1x32xf32>
    %425 = arith.subf %424, %418 : vector<1x32xf32>
    %426 = arith.mulf %425, %423 : vector<1x32xf32>
    %427 = arith.mulf %418, %369 : vector<1x32xf32>
    %428 = arith.addf %426, %427 : vector<1x32xf32>
    %cst_93 = arith.constant dense<0.000000e+00> : vector<1x96xf32>
    %429 = tpu.matmul %398, %124, %cst_93 {dimension_numbers = #tpu.dot_dimension_numbers<[1], [0], [0], [1], [0, 0, 1, 1], [], []>} : vector<1x32xf32>, vector<32x96xf32>, vector<1x96xf32> -> vector<1x96xf32>
    %430 = arith.addf %429, %129 : vector<1x96xf32>
    %431 = vector.extract_strided_slice %122 {offsets = [5, 0], sizes = [1, 96], strides = [1, 1]} : vector<8x96xf32> to vector<1x96xf32>
    %432 = vector.extract_strided_slice %431 {offsets = [0, 0], sizes = [1, 32], strides = [1, 1]} : vector<1x96xf32> to vector<1x32xf32>
    %433 = vector.extract_strided_slice %430 {offsets = [0, 0], sizes = [1, 32], strides = [1, 1]} : vector<1x96xf32> to vector<1x32xf32>
    %434 = arith.addf %432, %433 : vector<1x32xf32>
    %435 = arith.negf %434 : vector<1x32xf32>
    %436 = math.exp %435 : vector<1x32xf32>
    %cst_94 = arith.constant 1.000000e+00 : f32
    %437 = vector.broadcast %cst_94 : f32 to vector<1x32xf32>
    %438 = arith.addf %437, %436 : vector<1x32xf32>
    %439 = arith.divf %437, %438 : vector<1x32xf32>
    %440 = vector.extract_strided_slice %431 {offsets = [0, 32], sizes = [1, 32], strides = [1, 1]} : vector<1x96xf32> to vector<1x32xf32>
    %441 = vector.extract_strided_slice %430 {offsets = [0, 32], sizes = [1, 32], strides = [1, 1]} : vector<1x96xf32> to vector<1x32xf32>
    %442 = arith.addf %440, %441 : vector<1x32xf32>
    %443 = arith.negf %442 : vector<1x32xf32>
    %444 = math.exp %443 : vector<1x32xf32>
    %cst_95 = arith.constant 1.000000e+00 : f32
    %445 = vector.broadcast %cst_95 : f32 to vector<1x32xf32>
    %446 = arith.addf %445, %444 : vector<1x32xf32>
    %447 = arith.divf %445, %446 : vector<1x32xf32>
    %448 = vector.extract_strided_slice %431 {offsets = [0, 64], sizes = [1, 32], strides = [1, 1]} : vector<1x96xf32> to vector<1x32xf32>
    %449 = vector.extract_strided_slice %430 {offsets = [0, 64], sizes = [1, 32], strides = [1, 1]} : vector<1x96xf32> to vector<1x32xf32>
    %450 = arith.mulf %439, %449 : vector<1x32xf32>
    %451 = arith.addf %448, %450 : vector<1x32xf32>
    %452 = math.tanh %451 : vector<1x32xf32>
    %cst_96 = arith.constant 1.000000e+00 : f32
    %453 = vector.broadcast %cst_96 : f32 to vector<1x32xf32>
    %454 = arith.subf %453, %447 : vector<1x32xf32>
    %455 = arith.mulf %454, %452 : vector<1x32xf32>
    %456 = arith.mulf %447, %398 : vector<1x32xf32>
    %457 = arith.addf %455, %456 : vector<1x32xf32>
    %cst_97 = arith.constant dense<0.000000e+00> : vector<1x96xf32>
    %458 = tpu.matmul %457, %126, %cst_97 {dimension_numbers = #tpu.dot_dimension_numbers<[1], [0], [0], [1], [0, 0, 1, 1], [], []>} : vector<1x32xf32>, vector<32x96xf32>, vector<1x96xf32> -> vector<1x96xf32>
    %459 = arith.addf %458, %130 : vector<1x96xf32>
    %cst_98 = arith.constant dense<0.000000e+00> : vector<1x96xf32>
    %460 = tpu.matmul %428, %128, %cst_98 {dimension_numbers = #tpu.dot_dimension_numbers<[1], [0], [0], [1], [0, 0, 1, 1], [], []>} : vector<1x32xf32>, vector<32x96xf32>, vector<1x96xf32> -> vector<1x96xf32>
    %461 = arith.addf %460, %131 : vector<1x96xf32>
    %462 = vector.extract_strided_slice %459 {offsets = [0, 0], sizes = [1, 32], strides = [1, 1]} : vector<1x96xf32> to vector<1x32xf32>
    %463 = vector.extract_strided_slice %461 {offsets = [0, 0], sizes = [1, 32], strides = [1, 1]} : vector<1x96xf32> to vector<1x32xf32>
    %464 = arith.addf %462, %463 : vector<1x32xf32>
    %465 = arith.negf %464 : vector<1x32xf32>
    %466 = math.exp %465 : vector<1x32xf32>
    %cst_99 = arith.constant 1.000000e+00 : f32
    %467 = vector.broadcast %cst_99 : f32 to vector<1x32xf32>
    %468 = arith.addf %467, %466 : vector<1x32xf32>
    %469 = arith.divf %467, %468 : vector<1x32xf32>
    %470 = vector.extract_strided_slice %459 {offsets = [0, 32], sizes = [1, 32], strides = [1, 1]} : vector<1x96xf32> to vector<1x32xf32>
    %471 = vector.extract_strided_slice %461 {offsets = [0, 32], sizes = [1, 32], strides = [1, 1]} : vector<1x96xf32> to vector<1x32xf32>
    %472 = arith.addf %470, %471 : vector<1x32xf32>
    %473 = arith.negf %472 : vector<1x32xf32>
    %474 = math.exp %473 : vector<1x32xf32>
    %cst_100 = arith.constant 1.000000e+00 : f32
    %475 = vector.broadcast %cst_100 : f32 to vector<1x32xf32>
    %476 = arith.addf %475, %474 : vector<1x32xf32>
    %477 = arith.divf %475, %476 : vector<1x32xf32>
    %478 = vector.extract_strided_slice %459 {offsets = [0, 64], sizes = [1, 32], strides = [1, 1]} : vector<1x96xf32> to vector<1x32xf32>
    %479 = vector.extract_strided_slice %461 {offsets = [0, 64], sizes = [1, 32], strides = [1, 1]} : vector<1x96xf32> to vector<1x32xf32>
    %480 = arith.mulf %469, %479 : vector<1x32xf32>
    %481 = arith.addf %478, %480 : vector<1x32xf32>
    %482 = math.tanh %481 : vector<1x32xf32>
    %cst_101 = arith.constant 1.000000e+00 : f32
    %483 = vector.broadcast %cst_101 : f32 to vector<1x32xf32>
    %484 = arith.subf %483, %477 : vector<1x32xf32>
    %485 = arith.mulf %484, %482 : vector<1x32xf32>
    %486 = arith.mulf %477, %428 : vector<1x32xf32>
    %487 = arith.addf %485, %486 : vector<1x32xf32>
    %cst_102 = arith.constant dense<0.000000e+00> : vector<1x96xf32>
    %488 = tpu.matmul %457, %124, %cst_102 {dimension_numbers = #tpu.dot_dimension_numbers<[1], [0], [0], [1], [0, 0, 1, 1], [], []>} : vector<1x32xf32>, vector<32x96xf32>, vector<1x96xf32> -> vector<1x96xf32>
    %489 = arith.addf %488, %129 : vector<1x96xf32>
    %490 = vector.extract_strided_slice %122 {offsets = [6, 0], sizes = [1, 96], strides = [1, 1]} : vector<8x96xf32> to vector<1x96xf32>
    %491 = vector.extract_strided_slice %490 {offsets = [0, 0], sizes = [1, 32], strides = [1, 1]} : vector<1x96xf32> to vector<1x32xf32>
    %492 = vector.extract_strided_slice %489 {offsets = [0, 0], sizes = [1, 32], strides = [1, 1]} : vector<1x96xf32> to vector<1x32xf32>
    %493 = arith.addf %491, %492 : vector<1x32xf32>
    %494 = arith.negf %493 : vector<1x32xf32>
    %495 = math.exp %494 : vector<1x32xf32>
    %cst_103 = arith.constant 1.000000e+00 : f32
    %496 = vector.broadcast %cst_103 : f32 to vector<1x32xf32>
    %497 = arith.addf %496, %495 : vector<1x32xf32>
    %498 = arith.divf %496, %497 : vector<1x32xf32>
    %499 = vector.extract_strided_slice %490 {offsets = [0, 32], sizes = [1, 32], strides = [1, 1]} : vector<1x96xf32> to vector<1x32xf32>
    %500 = vector.extract_strided_slice %489 {offsets = [0, 32], sizes = [1, 32], strides = [1, 1]} : vector<1x96xf32> to vector<1x32xf32>
    %501 = arith.addf %499, %500 : vector<1x32xf32>
    %502 = arith.negf %501 : vector<1x32xf32>
    %503 = math.exp %502 : vector<1x32xf32>
    %cst_104 = arith.constant 1.000000e+00 : f32
    %504 = vector.broadcast %cst_104 : f32 to vector<1x32xf32>
    %505 = arith.addf %504, %503 : vector<1x32xf32>
    %506 = arith.divf %504, %505 : vector<1x32xf32>
    %507 = vector.extract_strided_slice %490 {offsets = [0, 64], sizes = [1, 32], strides = [1, 1]} : vector<1x96xf32> to vector<1x32xf32>
    %508 = vector.extract_strided_slice %489 {offsets = [0, 64], sizes = [1, 32], strides = [1, 1]} : vector<1x96xf32> to vector<1x32xf32>
    %509 = arith.mulf %498, %508 : vector<1x32xf32>
    %510 = arith.addf %507, %509 : vector<1x32xf32>
    %511 = math.tanh %510 : vector<1x32xf32>
    %cst_105 = arith.constant 1.000000e+00 : f32
    %512 = vector.broadcast %cst_105 : f32 to vector<1x32xf32>
    %513 = arith.subf %512, %506 : vector<1x32xf32>
    %514 = arith.mulf %513, %511 : vector<1x32xf32>
    %515 = arith.mulf %506, %457 : vector<1x32xf32>
    %516 = arith.addf %514, %515 : vector<1x32xf32>
    %cst_106 = arith.constant dense<0.000000e+00> : vector<1x96xf32>
    %517 = tpu.matmul %516, %126, %cst_106 {dimension_numbers = #tpu.dot_dimension_numbers<[1], [0], [0], [1], [0, 0, 1, 1], [], []>} : vector<1x32xf32>, vector<32x96xf32>, vector<1x96xf32> -> vector<1x96xf32>
    %518 = arith.addf %517, %130 : vector<1x96xf32>
    %cst_107 = arith.constant dense<0.000000e+00> : vector<1x96xf32>
    %519 = tpu.matmul %487, %128, %cst_107 {dimension_numbers = #tpu.dot_dimension_numbers<[1], [0], [0], [1], [0, 0, 1, 1], [], []>} : vector<1x32xf32>, vector<32x96xf32>, vector<1x96xf32> -> vector<1x96xf32>
    %520 = arith.addf %519, %131 : vector<1x96xf32>
    %521 = vector.extract_strided_slice %518 {offsets = [0, 0], sizes = [1, 32], strides = [1, 1]} : vector<1x96xf32> to vector<1x32xf32>
    %522 = vector.extract_strided_slice %520 {offsets = [0, 0], sizes = [1, 32], strides = [1, 1]} : vector<1x96xf32> to vector<1x32xf32>
    %523 = arith.addf %521, %522 : vector<1x32xf32>
    %524 = arith.negf %523 : vector<1x32xf32>
    %525 = math.exp %524 : vector<1x32xf32>
    %cst_108 = arith.constant 1.000000e+00 : f32
    %526 = vector.broadcast %cst_108 : f32 to vector<1x32xf32>
    %527 = arith.addf %526, %525 : vector<1x32xf32>
    %528 = arith.divf %526, %527 : vector<1x32xf32>
    %529 = vector.extract_strided_slice %518 {offsets = [0, 32], sizes = [1, 32], strides = [1, 1]} : vector<1x96xf32> to vector<1x32xf32>
    %530 = vector.extract_strided_slice %520 {offsets = [0, 32], sizes = [1, 32], strides = [1, 1]} : vector<1x96xf32> to vector<1x32xf32>
    %531 = arith.addf %529, %530 : vector<1x32xf32>
    %532 = arith.negf %531 : vector<1x32xf32>
    %533 = math.exp %532 : vector<1x32xf32>
    %cst_109 = arith.constant 1.000000e+00 : f32
    %534 = vector.broadcast %cst_109 : f32 to vector<1x32xf32>
    %535 = arith.addf %534, %533 : vector<1x32xf32>
    %536 = arith.divf %534, %535 : vector<1x32xf32>
    %537 = vector.extract_strided_slice %518 {offsets = [0, 64], sizes = [1, 32], strides = [1, 1]} : vector<1x96xf32> to vector<1x32xf32>
    %538 = vector.extract_strided_slice %520 {offsets = [0, 64], sizes = [1, 32], strides = [1, 1]} : vector<1x96xf32> to vector<1x32xf32>
    %539 = arith.mulf %528, %538 : vector<1x32xf32>
    %540 = arith.addf %537, %539 : vector<1x32xf32>
    %541 = math.tanh %540 : vector<1x32xf32>
    %cst_110 = arith.constant 1.000000e+00 : f32
    %542 = vector.broadcast %cst_110 : f32 to vector<1x32xf32>
    %543 = arith.subf %542, %536 : vector<1x32xf32>
    %544 = arith.mulf %543, %541 : vector<1x32xf32>
    %545 = arith.mulf %536, %487 : vector<1x32xf32>
    %546 = arith.addf %544, %545 : vector<1x32xf32>
    %cst_111 = arith.constant dense<0.000000e+00> : vector<1x96xf32>
    %547 = tpu.matmul %516, %124, %cst_111 {dimension_numbers = #tpu.dot_dimension_numbers<[1], [0], [0], [1], [0, 0, 1, 1], [], []>} : vector<1x32xf32>, vector<32x96xf32>, vector<1x96xf32> -> vector<1x96xf32>
    %548 = arith.addf %547, %129 : vector<1x96xf32>
    %549 = vector.extract_strided_slice %122 {offsets = [7, 0], sizes = [1, 96], strides = [1, 1]} : vector<8x96xf32> to vector<1x96xf32>
    %550 = vector.extract_strided_slice %549 {offsets = [0, 0], sizes = [1, 32], strides = [1, 1]} : vector<1x96xf32> to vector<1x32xf32>
    %551 = vector.extract_strided_slice %548 {offsets = [0, 0], sizes = [1, 32], strides = [1, 1]} : vector<1x96xf32> to vector<1x32xf32>
    %552 = arith.addf %550, %551 : vector<1x32xf32>
    %553 = arith.negf %552 : vector<1x32xf32>
    %554 = math.exp %553 : vector<1x32xf32>
    %cst_112 = arith.constant 1.000000e+00 : f32
    %555 = vector.broadcast %cst_112 : f32 to vector<1x32xf32>
    %556 = arith.addf %555, %554 : vector<1x32xf32>
    %557 = arith.divf %555, %556 : vector<1x32xf32>
    %558 = vector.extract_strided_slice %549 {offsets = [0, 32], sizes = [1, 32], strides = [1, 1]} : vector<1x96xf32> to vector<1x32xf32>
    %559 = vector.extract_strided_slice %548 {offsets = [0, 32], sizes = [1, 32], strides = [1, 1]} : vector<1x96xf32> to vector<1x32xf32>
    %560 = arith.addf %558, %559 : vector<1x32xf32>
    %561 = arith.negf %560 : vector<1x32xf32>
    %562 = math.exp %561 : vector<1x32xf32>
    %cst_113 = arith.constant 1.000000e+00 : f32
    %563 = vector.broadcast %cst_113 : f32 to vector<1x32xf32>
    %564 = arith.addf %563, %562 : vector<1x32xf32>
    %565 = arith.divf %563, %564 : vector<1x32xf32>
    %566 = vector.extract_strided_slice %549 {offsets = [0, 64], sizes = [1, 32], strides = [1, 1]} : vector<1x96xf32> to vector<1x32xf32>
    %567 = vector.extract_strided_slice %548 {offsets = [0, 64], sizes = [1, 32], strides = [1, 1]} : vector<1x96xf32> to vector<1x32xf32>
    %568 = arith.mulf %557, %567 : vector<1x32xf32>
    %569 = arith.addf %566, %568 : vector<1x32xf32>
    %570 = math.tanh %569 : vector<1x32xf32>
    %cst_114 = arith.constant 1.000000e+00 : f32
    %571 = vector.broadcast %cst_114 : f32 to vector<1x32xf32>
    %572 = arith.subf %571, %565 : vector<1x32xf32>
    %573 = arith.mulf %572, %570 : vector<1x32xf32>
    %574 = arith.mulf %565, %516 : vector<1x32xf32>
    %575 = arith.addf %573, %574 : vector<1x32xf32>
    %cst_115 = arith.constant dense<0.000000e+00> : vector<1x96xf32>
    %576 = tpu.matmul %575, %126, %cst_115 {dimension_numbers = #tpu.dot_dimension_numbers<[1], [0], [0], [1], [0, 0, 1, 1], [], []>} : vector<1x32xf32>, vector<32x96xf32>, vector<1x96xf32> -> vector<1x96xf32>
    %577 = arith.addf %576, %130 : vector<1x96xf32>
    %cst_116 = arith.constant dense<0.000000e+00> : vector<1x96xf32>
    %578 = tpu.matmul %546, %128, %cst_116 {dimension_numbers = #tpu.dot_dimension_numbers<[1], [0], [0], [1], [0, 0, 1, 1], [], []>} : vector<1x32xf32>, vector<32x96xf32>, vector<1x96xf32> -> vector<1x96xf32>
    %579 = arith.addf %578, %131 : vector<1x96xf32>
    %580 = vector.extract_strided_slice %577 {offsets = [0, 0], sizes = [1, 32], strides = [1, 1]} : vector<1x96xf32> to vector<1x32xf32>
    %581 = vector.extract_strided_slice %579 {offsets = [0, 0], sizes = [1, 32], strides = [1, 1]} : vector<1x96xf32> to vector<1x32xf32>
    %582 = arith.addf %580, %581 : vector<1x32xf32>
    %583 = arith.negf %582 : vector<1x32xf32>
    %584 = math.exp %583 : vector<1x32xf32>
    %cst_117 = arith.constant 1.000000e+00 : f32
    %585 = vector.broadcast %cst_117 : f32 to vector<1x32xf32>
    %586 = arith.addf %585, %584 : vector<1x32xf32>
    %587 = arith.divf %585, %586 : vector<1x32xf32>
    %588 = vector.extract_strided_slice %577 {offsets = [0, 32], sizes = [1, 32], strides = [1, 1]} : vector<1x96xf32> to vector<1x32xf32>
    %589 = vector.extract_strided_slice %579 {offsets = [0, 32], sizes = [1, 32], strides = [1, 1]} : vector<1x96xf32> to vector<1x32xf32>
    %590 = arith.addf %588, %589 : vector<1x32xf32>
    %591 = arith.negf %590 : vector<1x32xf32>
    %592 = math.exp %591 : vector<1x32xf32>
    %cst_118 = arith.constant 1.000000e+00 : f32
    %593 = vector.broadcast %cst_118 : f32 to vector<1x32xf32>
    %594 = arith.addf %593, %592 : vector<1x32xf32>
    %595 = arith.divf %593, %594 : vector<1x32xf32>
    %596 = vector.extract_strided_slice %577 {offsets = [0, 64], sizes = [1, 32], strides = [1, 1]} : vector<1x96xf32> to vector<1x32xf32>
    %597 = vector.extract_strided_slice %579 {offsets = [0, 64], sizes = [1, 32], strides = [1, 1]} : vector<1x96xf32> to vector<1x32xf32>
    %598 = arith.mulf %587, %597 : vector<1x32xf32>
    %599 = arith.addf %596, %598 : vector<1x32xf32>
    %600 = math.tanh %599 : vector<1x32xf32>
    %cst_119 = arith.constant 1.000000e+00 : f32
    %601 = vector.broadcast %cst_119 : f32 to vector<1x32xf32>
    %602 = arith.subf %601, %595 : vector<1x32xf32>
    %603 = arith.mulf %602, %600 : vector<1x32xf32>
    %604 = arith.mulf %595, %546 : vector<1x32xf32>
    %605 = arith.addf %603, %604 : vector<1x32xf32>
    %c0_120 = arith.constant 0 : index
    %c0_121 = arith.constant 0 : index
    %606 = vector.load %arg8[%c0_120, %c0_121] : memref<33x1xf32, #tpu.memory_space<vmem>>, vector<33x1xf32>
    %607 = tpu.concatenate %192, %251, %310, %369, %428, %487, %546, %605 in 0 : vector<1x32xf32>, vector<1x32xf32>, vector<1x32xf32>, vector<1x32xf32>, vector<1x32xf32>, vector<1x32xf32>, vector<1x32xf32>, vector<1x32xf32> -> vector<8x32xf32>
    %608 = vector.extract_strided_slice %606 {offsets = [0, 0], sizes = [32, 1], strides = [1, 1]} : vector<33x1xf32> to vector<32x1xf32>
    %cst_122 = arith.constant dense<0.000000e+00> : vector<8x1xf32>
    %609 = tpu.matmul %607, %608, %cst_122 {dimension_numbers = #tpu.dot_dimension_numbers<[1], [0], [0], [1], [0, 0, 1, 1], [], []>} : vector<8x32xf32>, vector<32x1xf32>, vector<8x1xf32> -> vector<8x1xf32>
    %610 = vector.extract_strided_slice %606 {offsets = [32, 0], sizes = [1, 1], strides = [1, 1]} : vector<33x1xf32> to vector<1x1xf32>
    %611 = vector.broadcast %610 : vector<1x1xf32> to vector<8x1xf32>
    %612 = arith.addf %609, %611 : vector<8x1xf32>
    %c0_123 = arith.constant 0 : index
    %c0_124 = arith.constant 0 : index
    %613 = vector.load %arg9[%c0_123, %c0_124] : memref<8x1xf32, #tpu.memory_space<vmem>>, vector<8x1xf32>
    tpu.vector_store %arg9[%c0_123, %c0_124], %612 {strides = array<i32>} : memref<8x1xf32, #tpu.memory_space<vmem>>, vector<8x1xf32>,
    return
  }
}

</mosaic_0001>

<llo_original>
// kernel: tpu_custom_call.1
$region0: #{tpu_custom_call.1}
  #allocation0 [shape = 'u32[]', space=smem, size = 0x4, offset = 0x4, fixed_abs, tag = 'smem constant byte address 0x4 - core index']
  #allocation1 [shape = 'u32[144,128]{1,0:T(1,128)}', space=vmem, size = 0x12000, scoped, tag = 'internal scratch']
  %s0 = inlined_call_operand.vmem [shape: f32[64,64], index: 0, kind: input, shape index: {}]
  %s1 = inlined_call_operand.vmem [shape: f32[64,12], index: 1, kind: input, shape index: {}]
  %s2 = inlined_call_operand.vmem [shape: f32[16,8], index: 2, kind: input, shape index: {}]
  %s3 = inlined_call_operand.vmem [shape: f32[1,16], index: 3, kind: input, shape index: {}]
  %s4 = inlined_call_operand.hbm [shape: f32[16,64], index: 4, kind: input, shape index: {}]
  %s5 = inlined_call_operand.hbm [shape: f32[64,384], index: 5, kind: input, shape index: {}]
  %s6 = inlined_call_operand.vmem [shape: f32[3,32,96], index: 6, kind: input, shape index: {}]
  %s7 = inlined_call_operand.vmem [shape: f32[4,96], index: 7, kind: input, shape index: {}]
  %s8 = inlined_call_operand.vmem [shape: f32[33,1], index: 8, kind: input, shape index: {}]
  %s9 = inlined_call_operand.vmem [shape: f32[8,1], index: 9, kind: output, shape index: {0}]
  %s10 = inlined_call_operand.hbm [shape: f32[8,16], index: 10, kind: output, shape index: {1}]
  %11 = xla_tuple %s9, %s10
  %s12 = sld [smem:[#allocation0]]
  $region62: #{tpu_custom_call.1} parent=0
    _
  %s14 = ssub.s32 1, %s12
  %s15 = scalar_select 0, %s14, %s12
  $region1: #{tpu_custom_call.1} parent=0
    #allocation2 [shape = 'u8[8192]{0}', space=vmem, size = 0x2000, scoped, tag = 'input window, operand 4, single buffered']
    #allocation3 [shape = 's32[1]{0}', space=sflag, size = 0x4, scoped, tag = 'scoped memory for tpu_custom_call.1']
    #allocation4 [shape = 's32[1]{0}', space=sflag, size = 0x4, scoped, tag = 'scoped memory for tpu_custom_call.1']
    #allocation5 [shape = 'u8[98304]{0}', space=vmem, size = 0x18000, scoped, tag = 'input window, operand 5, single buffered']
    #allocation6 [shape = 's32[1]{0}', space=sflag, size = 0x4, scoped, tag = 'scoped memory for tpu_custom_call.1']
    #allocation7 [shape = 'u8[4096]{0}', space=vmem, size = 0x1000, scoped, tag = 'output window, operand 1, single buffered']
    %16 = vsyncpa [#allocation3], 0
    %17 = vsyncpa [#allocation6], 0
    %18 = vsyncpa [#allocation4], 0
    // Predicated region
    $region2: #{tpu_custom_call.1} parent=1 // pred_check
      _
    $region3: #{tpu_custom_call.1} parent=1 // pred_check_branch
      %20 = sbr.rel (0) target = $region5
    $region4: #{tpu_custom_call.1} parent=1 // pred_region
      _
    $region5: #{tpu_custom_call.1} parent=1 // pred_fallthru
      _
    // Predicated region
    $region6: #{tpu_custom_call.1} parent=1 // pred_check
      _
    $region7: #{tpu_custom_call.1} parent=1 // pred_check_branch
      %22 = sbr.rel (0) target = $region9
    $region8: #{tpu_custom_call.1} parent=1 // pred_region
      _
    $region9: #{tpu_custom_call.1} parent=1 // pred_fallthru
      _
    // Predicated region
    $region10: #{tpu_custom_call.1} parent=1 // pred_check
      _
    $region11: #{tpu_custom_call.1} parent=1 // pred_check_branch
      %24 = sbr.rel (0) target = $region13
    $region12: #{tpu_custom_call.1} parent=1 // pred_region
      _
    $region13: #{tpu_custom_call.1} parent=1 // pred_fallthru
      _
    // Predicated region
    $region14: #{tpu_custom_call.1} parent=1 // pred_check
      _
    $region15: #{tpu_custom_call.1} parent=1 // pred_check_branch
      %26 = sbr.rel (0) target = $region17
    $region16: #{tpu_custom_call.1} parent=1 // pred_region
      _
    $region17: #{tpu_custom_call.1} parent=1 // pred_fallthru
      _
    // Predicated region
    $region18: #{tpu_custom_call.1} parent=1 // pred_check
      _
    $region19: #{tpu_custom_call.1} parent=1 // pred_check_branch
      %28 = sbr.rel (0) target = $region21
    $region20: #{tpu_custom_call.1} parent=1 // pred_region
      %s30 = ssub.s32 256, 256
      %31 = vsyncadd [#allocation3], %s30
      %s32 = sshll.u32 [#allocation2], 4
      %s33 = int_to_ptr.vmem [resolvable:$true] %s32
      %38 = dma.hbm_to_vmem [thread:$0]  %s4, 256, %s33, [#allocation3], 128, 128, 8
    $region21: #{tpu_custom_call.1} parent=1 // pred_fallthru
      _
    // Predicated region
    $region22: #{tpu_custom_call.1} parent=1 // pred_check
      _
    $region23: #{tpu_custom_call.1} parent=1 // pred_check_branch
      %40 = sbr.rel (0) target = $region25
    $region24: #{tpu_custom_call.1} parent=1 // pred_region
      %s42 = ssub.s32 3072, 3072
      %43 = vsyncadd [#allocation6], %s42
      %s44 = sshll.u32 [#allocation5], 4
      %s45 = int_to_ptr.vmem [resolvable:$true] %s44
      %50 = dma.hbm_to_vmem [thread:$0]  %s5, 3072, %s45, [#allocation6], 384, 384, 24
    $region25: #{tpu_custom_call.1} parent=1 // pred_fallthru
      _
    // Predicated region
    $region26: #{tpu_custom_call.1} parent=1 // pred_check
      _
    $region27: #{tpu_custom_call.1} parent=1 // pred_check_branch
      %52 = sbr.rel (0) target = $region29
    $region28: #{tpu_custom_call.1} parent=1 // pred_region
      _
    $region29: #{tpu_custom_call.1} parent=1 // pred_fallthru
      _
    // Predicated region
    $region30: #{tpu_custom_call.1} parent=1 // pred_check
      _
    $region31: #{tpu_custom_call.1} parent=1 // pred_check_branch
      %54 = sbr.rel (0) target = $region33
    $region32: #{tpu_custom_call.1} parent=1 // pred_region
      _
    $region33: #{tpu_custom_call.1} parent=1 // pred_fallthru
      _
    // Predicated region
    $region34: #{tpu_custom_call.1} parent=1 // pred_check
      _
    $region35: #{tpu_custom_call.1} parent=1 // pred_check_branch
      %56 = sbr.rel (0) target = $region37
    $region36: #{tpu_custom_call.1} parent=1 // pred_region
      _
    $region37: #{tpu_custom_call.1} parent=1 // pred_fallthru
      _
    // Predicated region
    $region38: #{tpu_custom_call.1} parent=1 // pred_check
      _
    $region39: #{tpu_custom_call.1} parent=1 // pred_check_branch
      %58 = sbr.rel (0) target = $region41
    $region40: #{tpu_custom_call.1} parent=1 // pred_region
      %59 = dma.done [#allocation3], 256
    $region41: #{tpu_custom_call.1} parent=1 // pred_fallthru
      _
    // Predicated region
    $region42: #{tpu_custom_call.1} parent=1 // pred_check
      _
    $region43: #{tpu_custom_call.1} parent=1 // pred_check_branch
      %61 = sbr.rel (0) target = $region45
    $region44: #{tpu_custom_call.1} parent=1 // pred_region
      %62 = dma.done [#allocation6], 3072
    $region45: #{tpu_custom_call.1} parent=1 // pred_fallthru
      _
    %v63 = vld [vmem:[%s0] sm:$0xff]
    %v64 = vld [vmem:[%s0 + $0x8] sm:$0xff]
    %v65 = vld [vmem:[%s0 + $0x10] sm:$0xff]
    %v66 = vld [vmem:[%s0 + $0x18] sm:$0xff]
    %v67 = vld [vmem:[%s0 + $0x20] sm:$0xff]
    %v68 = vld [vmem:[%s0 + $0x28] sm:$0xff]
    %v69 = vld [vmem:[%s0 + $0x30] sm:$0xff]
    %v70 = vld [vmem:[%s0 + $0x38] sm:$0xff]
    %v71 = vld [vmem:[%s1] sm:$0xff]
    %v72 = vld [vmem:[%s1 + $0x8] sm:$0xff]
    %v73 = vld [vmem:[%s1 + $0x10] sm:$0xff]
    %v74 = vld [vmem:[%s1 + $0x18] sm:$0xff]
    %v75 = vld [vmem:[%s1 + $0x20] sm:$0xff]
    %v76 = vld [vmem:[%s1 + $0x28] sm:$0xff]
    %v77 = vld [vmem:[%s1 + $0x30] sm:$0xff]
    %v78 = vld [vmem:[%s1 + $0x38] sm:$0xff]
    %v79 = vld [vmem:[%s2] sm:$0xff]
    %v80 = vld [vmem:[%s2 + $0x8] sm:$0xff]
    %v81 = vld [vmem:[%s3] sm:$0x1]
    %vm82 = vcmask 64512
    %v84 = vsel %vm82, %v71, 0
    %v87 = vsel %vm82, %v72, 0
    %v90 = vsel %vm82, %v73, 0
    %v93 = vsel %vm82, %v74, 0
    %v96 = vsel %vm82, %v75, 0
    %v99 = vsel %vm82, %v76, 0
    %v102 = vsel %vm82, %v77, 0
    %v105 = vsel %vm82, %v78, 0
    %107 = vmatprep.subr.mxu0 0.0
    %108 = vmatpush1.msra.mxu0 %v79
    %109 = vmatprep.subr.mxu0 0.0
    %110 = vmatpush1.msra.mxu0 0.0
    %111 = vmatprep.subr.mxu0 0.0
    %112 = vmatpush1.msra.mxu0 0.0
    %113 = vmatprep.subr.mxu0 0.0
    %114 = vmatpush1.msra.mxu0 0.0
    %115 = vmatprep.subr.mxu0 0.0
    %116 = vmatpush1.msra.mxu0 0.0
    %117 = vmatprep.subr.mxu0 0.0
    %118 = vmatpush1.msra.mxu0 0.0
    %119 = vmatprep.subr.mxu0 0.0
    %120 = vmatpush1.msra.mxu0 0.0
    %121 = vmatprep.subr.mxu0 0.0
    %122 = vmatpush1.msra.mxu0 0.0
    %123 = vmatprep.subr.mxu0 0.0
    %124 = vmatpush1.msra.mxu0 0.0
    %125 = vmatprep.subr.mxu0 0.0
    %126 = vmatpush1.msra.mxu0 0.0
    %127 = vmatprep.subr.mxu0 0.0
    %128 = vmatpush1.msra.mxu0 0.0
    %129 = vmatprep.subr.mxu0 0.0
    %130 = vmatpush1.msra.mxu0 0.0
    %131 = vmatprep.subr.mxu0 0.0
    %132 = vmatpush1.msra.mxu0 0.0
    %133 = vmatprep.subr.mxu0 0.0
    %134 = vmatpush1.msra.mxu0 0.0
    %135 = vmatprep.subr.mxu0 0.0
    %136 = vmatpush1.msra.mxu0 0.0
    %137 = vmatprep.subr.mxu0 0.0
    %138 = vmatpush1.msra.mxu0 0.0
    %139 = vmatprep.subr.mxu0 0.0
    %140 = vmatpush1.msra.mxu0 0.0
    %141 = vmatprep.subr.mxu0 0.0
    %142 = vmatpush1.msra.mxu0 0.0
    %143 = vmatprep.subr.mxu0 0.0
    %144 = vmatpush1.msra.mxu0 0.0
    %145 = vmatprep.subr.mxu0 0.0
    %146 = vmatpush1.msra.mxu0 0.0
    %147 = vmatprep.subr.mxu0 0.0
    %148 = vmatpush1.msra.mxu0 0.0
    %149 = vmatprep.subr.mxu0 0.0
    %150 = vmatpush1.msra.mxu0 0.0
    %151 = vmatprep.subr.mxu0 0.0
    %152 = vmatpush1.msra.mxu0 0.0
    %153 = vmatprep.subr.mxu0 0.0
    %154 = vmatpush1.msra.mxu0 0.0
    %155 = vmatprep.subr.mxu0 0.0
    %156 = vmatpush1.msra.mxu0 0.0
    %157 = vmatprep.subr.mxu0 0.0
    %158 = vmatpush1.msra.mxu0 0.0
    %159 = vmatprep.subr.mxu0 0.0
    %160 = vmatpush1.msra.mxu0 0.0
    %161 = vmatprep.subr.mxu0 0.0
    %162 = vmatpush1.msra.mxu0 0.0
    %163 = vmatprep.subr.mxu0 0.0
    %164 = vmatpush1.msra.mxu0 0.0
    %165 = vmatprep.subr.mxu0 0.0
    %166 = vmatpush1.msra.mxu0 0.0
    %167 = vmatprep.subr.mxu0 0.0
    %168 = vmatpush1.msra.mxu0 0.0
    %169 = vmatprep.subr.mxu0 0.0
    %170 = vmatpush1.msra.mxu0 0.0
    %171 = vmatprep.mubr.f32.mxu0 0.0
    %172 = vmatmul.mubr.f32.gmra.mrb[0].mxu0 %v84
    %v173 = vpop.f32.mrb[0].mxu0
    %v174 = vadd.f32 0.0, %v173
    %v175 = vpop.f32.mrb[0].mxu0
    %176 = vmatprep.mubr.f32.mxu0 0.0
    %177 = vmatmul.mubr.f32.gmra.mrb[0].mxu0 %v87
    %v178 = vpop.f32.mrb[0].mxu0
    %v179 = vadd.f32 0.0, %v178
    %v180 = vpop.f32.mrb[0].mxu0
    %181 = vmatprep.mubr.f32.mxu0 0.0
    %182 = vmatmul.mubr.f32.gmra.mrb[0].mxu0 %v90
    %v183 = vpop.f32.mrb[0].mxu0
    %v184 = vadd.f32 0.0, %v183
    %v185 = vpop.f32.mrb[0].mxu0
    %186 = vmatprep.mubr.f32.mxu0 0.0
    %187 = vmatmul.mubr.f32.gmra.mrb[0].mxu0 %v93
    %v188 = vpop.f32.mrb[0].mxu0
    %v189 = vadd.f32 0.0, %v188
    %v190 = vpop.f32.mrb[0].mxu0
    %191 = vmatprep.mubr.f32.mxu0 0.0
    %192 = vmatmul.mubr.f32.gmra.mrb[0].mxu0 %v96
    %v193 = vpop.f32.mrb[0].mxu0
    %v194 = vadd.f32 0.0, %v193
    %v195 = vpop.f32.mrb[0].mxu0
    %196 = vmatprep.mubr.f32.mxu0 0.0
    %197 = vmatmul.mubr.f32.gmra.mrb[0].mxu0 %v99
    %v198 = vpop.f32.mrb[0].mxu0
    %v199 = vadd.f32 0.0, %v198
    %v200 = vpop.f32.mrb[0].mxu0
    %201 = vmatprep.mubr.f32.mxu0 0.0
    %202 = vmatmul.mubr.f32.gmra.mrb[0].mxu0 %v102
    %v203 = vpop.f32.mrb[0].mxu0
    %v204 = vadd.f32 0.0, %v203
    %v205 = vpop.f32.mrb[0].mxu0
    %206 = vmatprep.mubr.f32.mxu0 0.0
    %207 = vmatmul.mubr.f32.gmra.mrb[0].mxu0 %v105
    %v208 = vpop.f32.mrb[0].mxu0
    %v209 = vadd.f32 0.0, %v208
    %v210 = vpop.f32.mrb[0].mxu0
    %211 = vdwg.mxu0
    %v213 = vlaneseq
    %v214 = vshrl.u32 %v213, 7
    %v215 = vsub.s32 0, %v214
    %v216 = vrot.slane %v81, %v215
    %vm218 = vcmask 523264
    %v220 = vsel %vm218, %v63, 0
    %v223 = vsel %vm218, %v64, 0
    %v226 = vsel %vm218, %v65, 0
    %v229 = vsel %vm218, %v66, 0
    %v232 = vsel %vm218, %v67, 0
    %v235 = vsel %vm218, %v68, 0
    %v238 = vsel %vm218, %v69, 0
    %v241 = vsel %vm218, %v70, 0
    %243 = vmatprep.subr.mxu0 0.0
    %244 = vmatpush1.msra.mxu0 %v174
    %245 = vmatprep.subr.mxu0 0.0
    %246 = vmatpush1.msra.mxu0 %v179
    %247 = vmatprep.subr.mxu0 0.0
    %248 = vmatpush1.msra.mxu0 %v184
    %249 = vmatprep.subr.mxu0 0.0
    %250 = vmatpush1.msra.mxu0 %v189
    %251 = vmatprep.subr.mxu0 0.0
    %252 = vmatpush1.msra.mxu0 %v194
    %253 = vmatprep.subr.mxu0 0.0
    %254 = vmatpush1.msra.mxu0 %v199
    %255 = vmatprep.subr.mxu0 0.0
    %256 = vmatpush1.msra.mxu0 %v204
    %257 = vmatprep.subr.mxu0 0.0
    %258 = vmatpush1.msra.mxu0 %v209
    %259 = vmatprep.subr.mxu0 0.0
    %260 = vmatpush1.msra.mxu0 0.0
    %261 = vmatprep.subr.mxu0 0.0
    %262 = vmatpush1.msra.mxu0 0.0
    %263 = vmatprep.subr.mxu0 0.0
    %264 = vmatpush1.msra.mxu0 0.0
    %265 = vmatprep.subr.mxu0 0.0
    %266 = vmatpush1.msra.mxu0 0.0
    %267 = vmatprep.subr.mxu0 0.0
    %268 = vmatpush1.msra.mxu0 0.0
    %269 = vmatprep.subr.mxu0 0.0
    %270 = vmatpush1.msra.mxu0 0.0
    %271 = vmatprep.subr.mxu0 0.0
    %272 = vmatpush1.msra.mxu0 0.0
    %273 = vmatprep.subr.mxu0 0.0
    %274 = vmatpush1.msra.mxu0 0.0
    %275 = vmatprep.subr.mxu0 0.0
    %276 = vmatpush1.msra.mxu0 0.0
    %277 = vmatprep.subr.mxu0 0.0
    %278 = vmatpush1.msra.mxu0 0.0
    %279 = vmatprep.subr.mxu0 0.0
    %280 = vmatpush1.msra.mxu0 0.0
    %281 = vmatprep.subr.mxu0 0.0
    %282 = vmatpush1.msra.mxu0 0.0
    %283 = vmatprep.subr.mxu0 0.0
    %284 = vmatpush1.msra.mxu0 0.0
    %285 = vmatprep.subr.mxu0 0.0
    %286 = vmatpush1.msra.mxu0 0.0
    %287 = vmatprep.subr.mxu0 0.0
    %288 = vmatpush1.msra.mxu0 0.0
    %289 = vmatprep.subr.mxu0 0.0
    %290 = vmatpush1.msra.mxu0 0.0
    %291 = vmatprep.subr.mxu0 0.0
    %292 = vmatpush1.msra.mxu0 0.0
    %293 = vmatprep.subr.mxu0 0.0
    %294 = vmatpush1.msra.mxu0 0.0
    %295 = vmatprep.subr.mxu0 0.0
    %296 = vmatpush1.msra.mxu0 0.0
    %297 = vmatprep.subr.mxu0 0.0
    %298 = vmatpush1.msra.mxu0 0.0
    %299 = vmatprep.subr.mxu0 0.0
    %300 = vmatpush1.msra.mxu0 0.0
    %301 = vmatprep.subr.mxu0 0.0
    %302 = vmatpush1.msra.mxu0 0.0
    %303 = vmatprep.subr.mxu0 0.0
    %304 = vmatpush1.msra.mxu0 0.0
    %305 = vmatprep.subr.mxu0 0.0
    %306 = vmatpush1.msra.mxu0 0.0
    %307 = vmatprep.mubr.f32.mxu0 0.0
    %308 = vmatmul.mubr.f32.gmra.mrb[0].mxu0 %v220
    %v309 = vpop.f32.mrb[0].mxu0
    %v310 = vadd.f32 %v216, %v309
    %v311 = vpop.f32.mrb[0].mxu0
    %312 = vmatprep.mubr.f32.mxu0 0.0
    %313 = vmatmul.mubr.f32.gmra.mrb[0].mxu0 %v223
    %v314 = vpop.f32.mrb[0].mxu0
    %v315 = vadd.f32 %v216, %v314
    %v316 = vpop.f32.mrb[0].mxu0
    %317 = vmatprep.mubr.f32.mxu0 0.0
    %318 = vmatmul.mubr.f32.gmra.mrb[0].mxu0 %v226
    %v319 = vpop.f32.mrb[0].mxu0
    %v320 = vadd.f32 %v216, %v319
    %v321 = vpop.f32.mrb[0].mxu0
    %322 = vmatprep.mubr.f32.mxu0 0.0
    %323 = vmatmul.mubr.f32.gmra.mrb[0].mxu0 %v229
    %v324 = vpop.f32.mrb[0].mxu0
    %v325 = vadd.f32 %v216, %v324
    %v326 = vpop.f32.mrb[0].mxu0
    %327 = vmatprep.mubr.f32.mxu0 0.0
    %328 = vmatmul.mubr.f32.gmra.mrb[0].mxu0 %v232
    %v329 = vpop.f32.mrb[0].mxu0
    %v330 = vadd.f32 %v216, %v329
    %v331 = vpop.f32.mrb[0].mxu0
    %332 = vmatprep.mubr.f32.mxu0 0.0
    %333 = vmatmul.mubr.f32.gmra.mrb[0].mxu0 %v235
    %v334 = vpop.f32.mrb[0].mxu0
    %v335 = vadd.f32 %v216, %v334
    %v336 = vpop.f32.mrb[0].mxu0
    %337 = vmatprep.mubr.f32.mxu0 0.0
    %338 = vmatmul.mubr.f32.gmra.mrb[0].mxu0 %v238
    %v339 = vpop.f32.mrb[0].mxu0
    %v340 = vadd.f32 %v216, %v339
    %v341 = vpop.f32.mrb[0].mxu0
    %342 = vmatprep.mubr.f32.mxu0 0.0
    %343 = vmatmul.mubr.f32.gmra.mrb[0].mxu0 %v241
    %v344 = vpop.f32.mrb[0].mxu0
    %v345 = vadd.f32 %v216, %v344
    %v346 = vpop.f32.mrb[0].mxu0
    %347 = vdwg.mxu0
    %v349 = vsel %vm82, %v310, 0
    %v352 = vsel %vm82, %v315, 0
    %v355 = vsel %vm82, %v320, 0
    %v358 = vsel %vm82, %v325, 0
    %v361 = vsel %vm82, %v330, 0
    %v364 = vsel %vm82, %v335, 0
    %v367 = vsel %vm82, %v340, 0
    %v370 = vsel %vm82, %v345, 0
    %372 = vmatprep.subr.mxu0 0.0
    %373 = vmatpush1.msra.mxu0 %v80
    %374 = vmatprep.subr.mxu0 0.0
    %375 = vmatpush1.msra.mxu0 0.0
    %376 = vmatprep.subr.mxu0 0.0
    %377 = vmatpush1.msra.mxu0 0.0
    %378 = vmatprep.subr.mxu0 0.0
    %379 = vmatpush1.msra.mxu0 0.0
    %380 = vmatprep.subr.mxu0 0.0
    %381 = vmatpush1.msra.mxu0 0.0
    %382 = vmatprep.subr.mxu0 0.0
    %383 = vmatpush1.msra.mxu0 0.0
    %384 = vmatprep.subr.mxu0 0.0
    %385 = vmatpush1.msra.mxu0 0.0
    %386 = vmatprep.subr.mxu0 0.0
    %387 = vmatpush1.msra.mxu0 0.0
    %388 = vmatprep.subr.mxu0 0.0
    %389 = vmatpush1.msra.mxu0 0.0
    %390 = vmatprep.subr.mxu0 0.0
    %391 = vmatpush1.msra.mxu0 0.0
    %392 = vmatprep.subr.mxu0 0.0
    %393 = vmatpush1.msra.mxu0 0.0
    %394 = vmatprep.subr.mxu0 0.0
    %395 = vmatpush1.msra.mxu0 0.0
    %396 = vmatprep.subr.mxu0 0.0
    %397 = vmatpush1.msra.mxu0 0.0
    %398 = vmatprep.subr.mxu0 0.0
    %399 = vmatpush1.msra.mxu0 0.0
    %400 = vmatprep.subr.mxu0 0.0
    %401 = vmatpush1.msra.mxu0 0.0
    %402 = vmatprep.subr.mxu0 0.0
    %403 = vmatpush1.msra.mxu0 0.0
    %404 = vmatprep.subr.mxu0 0.0
    %405 = vmatpush1.msra.mxu0 0.0
    %406 = vmatprep.subr.mxu0 0.0
    %407 = vmatpush1.msra.mxu0 0.0
    %408 = vmatprep.subr.mxu0 0.0
    %409 = vmatpush1.msra.mxu0 0.0
    %410 = vmatprep.subr.mxu0 0.0
    %411 = vmatpush1.msra.mxu0 0.0
    %412 = vmatprep.subr.mxu0 0.0
    %413 = vmatpush1.msra.mxu0 0.0
    %414 = vmatprep.subr.mxu0 0.0
    %415 = vmatpush1.msra.mxu0 0.0
    %416 = vmatprep.subr.mxu0 0.0
    %417 = vmatpush1.msra.mxu0 0.0
    %418 = vmatprep.subr.mxu0 0.0
    %419 = vmatpush1.msra.mxu0 0.0
    %420 = vmatprep.subr.mxu0 0.0
    %421 = vmatpush1.msra.mxu0 0.0
    %422 = vmatprep.subr.mxu0 0.0
    %423 = vmatpush1.msra.mxu0 0.0
    %424 = vmatprep.subr.mxu0 0.0
    %425 = vmatpush1.msra.mxu0 0.0
    %426 = vmatprep.subr.mxu0 0.0
    %427 = vmatpush1.msra.mxu0 0.0
    %428 = vmatprep.subr.mxu0 0.0
    %429 = vmatpush1.msra.mxu0 0.0
    %430 = vmatprep.subr.mxu0 0.0
    %431 = vmatpush1.msra.mxu0 0.0
    %432 = vmatprep.subr.mxu0 0.0
    %433 = vmatpush1.msra.mxu0 0.0
    %434 = vmatprep.subr.mxu0 0.0
    %435 = vmatpush1.msra.mxu0 0.0
    %436 = vmatprep.mubr.f32.mxu0 0.0
    %437 = vmatmul.mubr.f32.gmra.mrb[0].mxu0 %v349
    %v438 = vpop.f32.mrb[0].mxu0
    %v439 = vadd.f32 0.0, %v438
    %v440 = vpop.f32.mrb[0].mxu0
    %441 = vmatprep.mubr.f32.mxu0 0.0
    %442 = vmatmul.mubr.f32.gmra.mrb[0].mxu0 %v352
    %v443 = vpop.f32.mrb[0].mxu0
    %v444 = vadd.f32 0.0, %v443
    %v445 = vpop.f32.mrb[0].mxu0
    %446 = vmatprep.mubr.f32.mxu0 0.0
    %447 = vmatmul.mubr.f32.gmra.mrb[0].mxu0 %v355
    %v448 = vpop.f32.mrb[0].mxu0
    %v449 = vadd.f32 0.0, %v448
    %v450 = vpop.f32.mrb[0].mxu0
    %451 = vmatprep.mubr.f32.mxu0 0.0
    %452 = vmatmul.mubr.f32.gmra.mrb[0].mxu0 %v358
    %v453 = vpop.f32.mrb[0].mxu0
    %v454 = vadd.f32 0.0, %v453
    %v455 = vpop.f32.mrb[0].mxu0
    %456 = vmatprep.mubr.f32.mxu0 0.0
    %457 = vmatmul.mubr.f32.gmra.mrb[0].mxu0 %v361
    %v458 = vpop.f32.mrb[0].mxu0
    %v459 = vadd.f32 0.0, %v458
    %v460 = vpop.f32.mrb[0].mxu0
    %461 = vmatprep.mubr.f32.mxu0 0.0
    %462 = vmatmul.mubr.f32.gmra.mrb[0].mxu0 %v364
    %v463 = vpop.f32.mrb[0].mxu0
    %v464 = vadd.f32 0.0, %v463
    %v465 = vpop.f32.mrb[0].mxu0
    %466 = vmatprep.mubr.f32.mxu0 0.0
    %467 = vmatmul.mubr.f32.gmra.mrb[0].mxu0 %v367
    %v468 = vpop.f32.mrb[0].mxu0
    %v469 = vadd.f32 0.0, %v468
    %v470 = vpop.f32.mrb[0].mxu0
    %471 = vmatprep.mubr.f32.mxu0 0.0
    %472 = vmatmul.mubr.f32.gmra.mrb[0].mxu0 %v370
    %v473 = vpop.f32.mrb[0].mxu0
    %v474 = vadd.f32 0.0, %v473
    %v475 = vpop.f32.mrb[0].mxu0
    %476 = vdwg.mxu0
    %477 = vrot.lane.b32.xlu0 %v216, 120
    %v478 = vpop.permute.xlu0 %477
    %480 = vmatprep.subr.mxu0 0.0
    %481 = vmatpush1.msra.mxu0 %v439
    %482 = vmatprep.subr.mxu0 0.0
    %483 = vmatpush1.msra.mxu0 %v444
    %484 = vmatprep.subr.mxu0 0.0
    %485 = vmatpush1.msra.mxu0 %v449
    %486 = vmatprep.subr.mxu0 0.0
    %487 = vmatpush1.msra.mxu0 %v454
    %488 = vmatprep.subr.mxu0 0.0
    %489 = vmatpush1.msra.mxu0 %v459
    %490 = vmatprep.subr.mxu0 0.0
    %491 = vmatpush1.msra.mxu0 %v464
    %492 = vmatprep.subr.mxu0 0.0
    %493 = vmatpush1.msra.mxu0 %v469
    %494 = vmatprep.subr.mxu0 0.0
    %495 = vmatpush1.msra.mxu0 %v474
    %496 = vmatprep.subr.mxu0 0.0
    %497 = vmatpush1.msra.mxu0 0.0
    %498 = vmatprep.subr.mxu0 0.0
    %499 = vmatpush1.msra.mxu0 0.0
    %500 = vmatprep.subr.mxu0 0.0
    %501 = vmatpush1.msra.mxu0 0.0
    %502 = vmatprep.subr.mxu0 0.0
    %503 = vmatpush1.msra.mxu0 0.0
    %504 = vmatprep.subr.mxu0 0.0
    %505 = vmatpush1.msra.mxu0 0.0
    %506 = vmatprep.subr.mxu0 0.0
    %507 = vmatpush1.msra.mxu0 0.0
    %508 = vmatprep.subr.mxu0 0.0
    %509 = vmatpush1.msra.mxu0 0.0
    %510 = vmatprep.subr.mxu0 0.0
    %511 = vmatpush1.msra.mxu0 0.0
    %512 = vmatprep.subr.mxu0 0.0
    %513 = vmatpush1.msra.mxu0 0.0
    %514 = vmatprep.subr.mxu0 0.0
    %515 = vmatpush1.msra.mxu0 0.0
    %516 = vmatprep.subr.mxu0 0.0
    %517 = vmatpush1.msra.mxu0 0.0
    %518 = vmatprep.subr.mxu0 0.0
    %519 = vmatpush1.msra.mxu0 0.0
    %520 = vmatprep.subr.mxu0 0.0
    %521 = vmatpush1.msra.mxu0 0.0
    %522 = vmatprep.subr.mxu0 0.0
    %523 = vmatpush1.msra.mxu0 0.0
    %524 = vmatprep.subr.mxu0 0.0
    %525 = vmatpush1.msra.mxu0 0.0
    %526 = vmatprep.subr.mxu0 0.0
    %527 = vmatpush1.msra.mxu0 0.0
    %528 = vmatprep.subr.mxu0 0.0
    %529 = vmatpush1.msra.mxu0 0.0
    %530 = vmatprep.subr.mxu0 0.0
    %531 = vmatpush1.msra.mxu0 0.0
    %532 = vmatprep.subr.mxu0 0.0
    %533 = vmatpush1.msra.mxu0 0.0
    %534 = vmatprep.subr.mxu0 0.0
    %535 = vmatpush1.msra.mxu0 0.0
    %536 = vmatprep.subr.mxu0 0.0
    %537 = vmatpush1.msra.mxu0 0.0
    %538 = vmatprep.subr.mxu0 0.0
    %539 = vmatpush1.msra.mxu0 0.0
    %540 = vmatprep.subr.mxu0 0.0
    %541 = vmatpush1.msra.mxu0 0.0
    %542 = vmatprep.subr.mxu0 0.0
    %543 = vmatpush1.msra.mxu0 0.0
    %544 = vmatprep.mubr.f32.mxu0 0.0
    %545 = vmatmul.mubr.f32.gmra.mrb[0].mxu0 %v220
    %v546 = vpop.f32.mrb[0].mxu0
    %v547 = vadd.f32 %v478, %v546
    %v548 = vpop.f32.mrb[0].mxu0
    %549 = vmatprep.mubr.f32.mxu0 0.0
    %550 = vmatmul.mubr.f32.gmra.mrb[0].mxu0 %v223
    %v551 = vpop.f32.mrb[0].mxu0
    %v552 = vadd.f32 %v478, %v551
    %v553 = vpop.f32.mrb[0].mxu0
    %554 = vmatprep.mubr.f32.mxu0 0.0
    %555 = vmatmul.mubr.f32.gmra.mrb[0].mxu0 %v226
    %v556 = vpop.f32.mrb[0].mxu0
    %v557 = vadd.f32 %v478, %v556
    %v558 = vpop.f32.mrb[0].mxu0
    %559 = vmatprep.mubr.f32.mxu0 0.0
    %560 = vmatmul.mubr.f32.gmra.mrb[0].mxu0 %v229
    %v561 = vpop.f32.mrb[0].mxu0
    %v562 = vadd.f32 %v478, %v561
    %v563 = vpop.f32.mrb[0].mxu0
    %564 = vmatprep.mubr.f32.mxu0 0.0
    %565 = vmatmul.mubr.f32.gmra.mrb[0].mxu0 %v232
    %v566 = vpop.f32.mrb[0].mxu0
    %v567 = vadd.f32 %v478, %v566
    %v568 = vpop.f32.mrb[0].mxu0
    %569 = vmatprep.mubr.f32.mxu0 0.0
    %570 = vmatmul.mubr.f32.gmra.mrb[0].mxu0 %v235
    %v571 = vpop.f32.mrb[0].mxu0
    %v572 = vadd.f32 %v478, %v571
    %v573 = vpop.f32.mrb[0].mxu0
    %574 = vmatprep.mubr.f32.mxu0 0.0
    %575 = vmatmul.mubr.f32.gmra.mrb[0].mxu0 %v238
    %v576 = vpop.f32.mrb[0].mxu0
    %v577 = vadd.f32 %v478, %v576
    %v578 = vpop.f32.mrb[0].mxu0
    %579 = vmatprep.mubr.f32.mxu0 0.0
    %580 = vmatmul.mubr.f32.gmra.mrb[0].mxu0 %v241
    %v581 = vpop.f32.mrb[0].mxu0
    %v582 = vadd.f32 %v478, %v581
    %v583 = vpop.f32.mrb[0].mxu0
    %584 = vdwg.mxu0
    %v585 = vmul.f32 %v547, 0.5
    %v586 = vmul.f32 %v552, 0.5
    %v587 = vmul.f32 %v557, 0.5
    %v588 = vmul.f32 %v562, 0.5
    %v589 = vmul.f32 %v567, 0.5
    %v590 = vmul.f32 %v572, 0.5
    %v591 = vmul.f32 %v577, 0.5
    %v592 = vmul.f32 %v582, 0.5
    %v593 = vmul.f32 %v585, 1.442695
    %v594 = vpow.pop %v593
    %v595 = vmul.f32 %v586, 1.442695
    %v596 = vpow.pop %v595
    %v597 = vmul.f32 %v587, 1.442695
    %v598 = vpow.pop %v597
    %v599 = vmul.f32 %v588, 1.442695
    %v600 = vpow.pop %v599
    %v601 = vmul.f32 %v589, 1.442695
    %v602 = vpow.pop %v601
    %v603 = vmul.f32 %v590, 1.442695
    %v604 = vpow.pop %v603
    %v605 = vmul.f32 %v591, 1.442695
    %v606 = vpow.pop %v605
    %v607 = vmul.f32 %v592, 1.442695
    %v608 = vpow.pop %v607
    %617 = vrot.lane.b32.xlu0 %v594, 4
    %v618 = vpop.permute.xlu0 %617
    %619 = vrot.lane.b32.xlu0 %v596, 4
    %v620 = vpop.permute.xlu0 %619
    %621 = vrot.lane.b32.xlu0 %v598, 4
    %v622 = vpop.permute.xlu0 %621
    %623 = vrot.lane.b32.xlu0 %v600, 4
    %v624 = vpop.permute.xlu0 %623
    %625 = vrot.lane.b32.xlu0 %v602, 4
    %v626 = vpop.permute.xlu0 %625
    %627 = vrot.lane.b32.xlu0 %v604, 4
    %v628 = vpop.permute.xlu0 %627
    %629 = vrot.lane.b32.xlu0 %v606, 4
    %v630 = vpop.permute.xlu0 %629
    %631 = vrot.lane.b32.xlu0 %v608, 4
    %v632 = vpop.permute.xlu0 %631
    %v641 = vmul.f32 %v71, %v618
    %v642 = vmul.f32 %v72, %v620
    %v643 = vmul.f32 %v73, %v622
    %v644 = vmul.f32 %v74, %v624
    %v645 = vmul.f32 %v75, %v626
    %v646 = vmul.f32 %v76, %v628
    %v647 = vmul.f32 %v77, %v630
    %v648 = vmul.f32 %v78, %v632
    %657 = vrot.lane.b32.xlu0 %v641, 120
    %v658 = vpop.permute.xlu0 %657
    %659 = vrot.lane.b32.xlu0 %v642, 120
    %v660 = vpop.permute.xlu0 %659
    %661 = vrot.lane.b32.xlu0 %v643, 120
    %v662 = vpop.permute.xlu0 %661
    %663 = vrot.lane.b32.xlu0 %v644, 120
    %v664 = vpop.permute.xlu0 %663
    %665 = vrot.lane.b32.xlu0 %v645, 120
    %v666 = vpop.permute.xlu0 %665
    %667 = vrot.lane.b32.xlu0 %v646, 120
    %v668 = vpop.permute.xlu0 %667
    %669 = vrot.lane.b32.xlu0 %v647, 120
    %v670 = vpop.permute.xlu0 %669
    %671 = vrot.lane.b32.xlu0 %v648, 120
    %v672 = vpop.permute.xlu0 %671
    %v681 = vadd.f32 %v547, %v658
    %v682 = vadd.f32 %v552, %v660
    %v683 = vadd.f32 %v557, %v662
    %v684 = vadd.f32 %v562, %v664
    %v685 = vadd.f32 %v567, %v666
    %v686 = vadd.f32 %v572, %v668
    %v687 = vadd.f32 %v577, %v670
    %v688 = vadd.f32 %v582, %v672
    %v689 = vld [vmem:[#allocation2] sm:$0xff]
    %v690 = vld [vmem:[#allocation2 + $0x8] sm:$0xff]
    %v692 = vsel %vm218, %v689, 0
    %694 = vmatprep.subr.mxu0 0.0
    %695 = vmatpush1.msra.mxu0 %v547
    %696 = vmatprep.subr.mxu0 0.0
    %697 = vmatpush1.msra.mxu0 %v552
    %698 = vmatprep.subr.mxu0 0.0
    %699 = vmatpush1.msra.mxu0 %v557
    %700 = vmatprep.subr.mxu0 0.0
    %701 = vmatpush1.msra.mxu0 %v562
    %702 = vmatprep.subr.mxu0 0.0
    %703 = vmatpush1.msra.mxu0 %v567
    %704 = vmatprep.subr.mxu0 0.0
    %705 = vmatpush1.msra.mxu0 %v572
    %706 = vmatprep.subr.mxu0 0.0
    %707 = vmatpush1.msra.mxu0 %v577
    %708 = vmatprep.subr.mxu0 0.0
    %709 = vmatpush1.msra.mxu0 %v582
    %710 = vmatprep.subr.mxu0 0.0
    %711 = vmatpush1.msra.mxu0 0.0
    %712 = vmatprep.subr.mxu0 0.0
    %713 = vmatpush1.msra.mxu0 0.0
    %714 = vmatprep.subr.mxu0 0.0
    %715 = vmatpush1.msra.mxu0 0.0
    %716 = vmatprep.subr.mxu0 0.0
    %717 = vmatpush1.msra.mxu0 0.0
    %718 = vmatprep.subr.mxu0 0.0
    %719 = vmatpush1.msra.mxu0 0.0
    %720 = vmatprep.subr.mxu0 0.0
    %721 = vmatpush1.msra.mxu0 0.0
    %722 = vmatprep.subr.mxu0 0.0
    %723 = vmatpush1.msra.mxu0 0.0
    %724 = vmatprep.subr.mxu0 0.0
    %725 = vmatpush1.msra.mxu0 0.0
    %726 = vmatprep.subr.mxu0 0.0
    %727 = vmatpush1.msra.mxu0 0.0
    %728 = vmatprep.subr.mxu0 0.0
    %729 = vmatpush1.msra.mxu0 0.0
    %730 = vmatprep.subr.mxu0 0.0
    %731 = vmatpush1.msra.mxu0 0.0
    %732 = vmatprep.subr.mxu0 0.0
    %733 = vmatpush1.msra.mxu0 0.0
    %734 = vmatprep.subr.mxu0 0.0
    %735 = vmatpush1.msra.mxu0 0.0
    %736 = vmatprep.subr.mxu0 0.0
    %737 = vmatpush1.msra.mxu0 0.0
    %738 = vmatprep.subr.mxu0 0.0
    %739 = vmatpush1.msra.mxu0 0.0
    %740 = vmatprep.subr.mxu0 0.0
    %741 = vmatpush1.msra.mxu0 0.0
    %742 = vmatprep.subr.mxu0 0.0
    %743 = vmatpush1.msra.mxu0 0.0
    %744 = vmatprep.subr.mxu0 0.0
    %745 = vmatpush1.msra.mxu0 0.0
    %746 = vmatprep.subr.mxu0 0.0
    %747 = vmatpush1.msra.mxu0 0.0
    %748 = vmatprep.subr.mxu0 0.0
    %749 = vmatpush1.msra.mxu0 0.0
    %750 = vmatprep.subr.mxu0 0.0
    %751 = vmatpush1.msra.mxu0 0.0
    %752 = vmatprep.subr.mxu0 0.0
    %753 = vmatpush1.msra.mxu0 0.0
    %754 = vmatprep.subr.mxu0 0.0
    %755 = vmatpush1.msra.mxu0 0.0
    %756 = vmatprep.subr.mxu0 0.0
    %757 = vmatpush1.msra.mxu0 0.0
    %758 = vmatprep.mubr.f32.mxu0 0.0
    %759 = vmatmul.mubr.f32.gmra.mrb[0].mxu0 %v692
    %v760 = vpop.f32.mrb[0].mxu0
    %v761 = vadd.f32 0.0, %v760
    %v762 = vpop.f32.mrb[0].mxu0
    %763 = vdwg.mxu0
    %vm764 = vcmask 31744
    %v766 = vsel %vm764, %v681, 0
    %768 = vmatprep.subr.mxu0 0.0
    %769 = vmatpush1.xpose.msra.mxu0 %v766
    %770 = vmatprep.subr.mxu0 0.0
    %771 = vmatpush1.xpose.msra.mxu0 0.0
    %772 = vmatprep.subr.mxu0 0.0
    %773 = vmatpush1.xpose.msra.mxu0 0.0
    %774 = vmatprep.subr.mxu0 0.0
    %775 = vmatpush1.xpose.msra.mxu0 0.0
    %776 = vmatprep.subr.mxu0 0.0
    %777 = vmatpush1.xpose.msra.mxu0 0.0
    %778 = vmatprep.subr.mxu0 0.0
    %779 = vmatpush1.xpose.msra.mxu0 0.0
    %780 = vmatprep.subr.mxu0 0.0
    %781 = vmatpush1.xpose.msra.mxu0 0.0
    %782 = vmatprep.subr.mxu0 0.0
    %783 = vmatpush1.xpose.msra.mxu0 0.0
    %784 = vmatprep.subr.mxu0 0.0
    %785 = vmatpush1.xpose.msra.mxu0 0.0
    %786 = vmatprep.subr.mxu0 0.0
    %787 = vmatpush1.xpose.msra.mxu0 0.0
    %788 = vmatprep.subr.mxu0 0.0
    %789 = vmatpush1.xpose.msra.mxu0 0.0
    %790 = vmatprep.subr.mxu0 0.0
    %791 = vmatpush1.xpose.msra.mxu0 0.0
    %792 = vmatprep.subr.mxu0 0.0
    %793 = vmatpush1.xpose.msra.mxu0 0.0
    %794 = vmatprep.subr.mxu0 0.0
    %795 = vmatpush1.xpose.msra.mxu0 0.0
    %796 = vmatprep.subr.mxu0 0.0
    %797 = vmatpush1.xpose.msra.mxu0 0.0
    %798 = vmatprep.subr.mxu0 0.0
    %799 = vmatpush1.xpose.msra.mxu0 0.0
    %800 = vmatprep.subr.mxu0 0.0
    %801 = vmatpush1.xpose.msra.mxu0 0.0
    %802 = vmatprep.subr.mxu0 0.0
    %803 = vmatpush1.xpose.msra.mxu0 0.0
    %804 = vmatprep.subr.mxu0 0.0
    %805 = vmatpush1.xpose.msra.mxu0 0.0
    %806 = vmatprep.subr.mxu0 0.0
    %807 = vmatpush1.xpose.msra.mxu0 0.0
    %808 = vmatprep.subr.mxu0 0.0
    %809 = vmatpush1.xpose.msra.mxu0 0.0
    %810 = vmatprep.subr.mxu0 0.0
    %811 = vmatpush1.xpose.msra.mxu0 0.0
    %812 = vmatprep.subr.mxu0 0.0
    %813 = vmatpush1.xpose.msra.mxu0 0.0
    %814 = vmatprep.subr.mxu0 0.0
    %815 = vmatpush1.xpose.msra.mxu0 0.0
    %816 = vmatprep.subr.mxu0 0.0
    %817 = vmatpush1.xpose.msra.mxu0 0.0
    %818 = vmatprep.subr.mxu0 0.0
    %819 = vmatpush1.xpose.msra.mxu0 0.0
    %820 = vmatprep.subr.mxu0 0.0
    %821 = vmatpush1.xpose.msra.mxu0 0.0
    %822 = vmatprep.subr.mxu0 0.0
    %823 = vmatpush1.xpose.msra.mxu0 0.0
    %824 = vmatprep.subr.mxu0 0.0
    %825 = vmatpush1.xpose.msra.mxu0 0.0
    %826 = vmatprep.subr.mxu0 0.0
    %827 = vmatpush1.xpose.msra.mxu0 0.0
    %828 = vmatprep.subr.mxu0 0.0
    %829 = vmatpush1.xpose.msra.mxu0 0.0
    %830 = vmatprep.subr.mxu0 0.0
    %831 = vmatpush1.xpose.msra.mxu0 0.0
    %832 = vmatprep.mubr.f32.mxu0 0.0
    %833 = vmatmul.mubr.f32.gmra.mrb[0].mxu0 %v766
    %v834 = vpop.f32.mrb[0].mxu0
    %v835 = vadd.f32 0.0, %v834
    %v836 = vpop.f32.mrb[0].mxu0
    %837 = vdwg.mxu0
    %v838 = vxor.u32 %v835, 2147483648
    %v839 = vmul.f32 %v838, 1.442695
    %v840 = vpow.pop %v839
    %v841 = vadd.f32 %v840, 1.0
    %v842 = vrcp.pop %v841
    %v843 = vmul.f32 1.0, %v842
    %v844 = vadd.f32 %v843, 0.0
    %v846 = vsel %vm764, %v682, 0
    %848 = vmatprep.subr.mxu0 0.0
    %849 = vmatpush1.xpose.msra.mxu0 %v846
    %850 = vmatprep.subr.mxu0 0.0
    %851 = vmatpush1.xpose.msra.mxu0 0.0
    %852 = vmatprep.subr.mxu0 0.0
    %853 = vmatpush1.xpose.msra.mxu0 0.0
    %854 = vmatprep.subr.mxu0 0.0
    %855 = vmatpush1.xpose.msra.mxu0 0.0
    %856 = vmatprep.subr.mxu0 0.0
    %857 = vmatpush1.xpose.msra.mxu0 0.0
    %858 = vmatprep.subr.mxu0 0.0
    %859 = vmatpush1.xpose.msra.mxu0 0.0
    %860 = vmatprep.subr.mxu0 0.0
    %861 = vmatpush1.xpose.msra.mxu0 0.0
    %862 = vmatprep.subr.mxu0 0.0
    %863 = vmatpush1.xpose.msra.mxu0 0.0
    %864 = vmatprep.subr.mxu0 0.0
    %865 = vmatpush1.xpose.msra.mxu0 0.0
    %866 = vmatprep.subr.mxu0 0.0
    %867 = vmatpush1.xpose.msra.mxu0 0.0
    %868 = vmatprep.subr.mxu0 0.0
    %869 = vmatpush1.xpose.msra.mxu0 0.0
    %870 = vmatprep.subr.mxu0 0.0
    %871 = vmatpush1.xpose.msra.mxu0 0.0
    %872 = vmatprep.subr.mxu0 0.0
    %873 = vmatpush1.xpose.msra.mxu0 0.0
    %874 = vmatprep.subr.mxu0 0.0
    %875 = vmatpush1.xpose.msra.mxu0 0.0
    %876 = vmatprep.subr.mxu0 0.0
    %877 = vmatpush1.xpose.msra.mxu0 0.0
    %878 = vmatprep.subr.mxu0 0.0
    %879 = vmatpush1.xpose.msra.mxu0 0.0
    %880 = vmatprep.subr.mxu0 0.0
    %881 = vmatpush1.xpose.msra.mxu0 0.0
    %882 = vmatprep.subr.mxu0 0.0
    %883 = vmatpush1.xpose.msra.mxu0 0.0
    %884 = vmatprep.subr.mxu0 0.0
    %885 = vmatpush1.xpose.msra.mxu0 0.0
    %886 = vmatprep.subr.mxu0 0.0
    %887 = vmatpush1.xpose.msra.mxu0 0.0
    %888 = vmatprep.subr.mxu0 0.0
    %889 = vmatpush1.xpose.msra.mxu0 0.0
    %890 = vmatprep.subr.mxu0 0.0
    %891 = vmatpush1.xpose.msra.mxu0 0.0
    %892 = vmatprep.subr.mxu0 0.0
    %893 = vmatpush1.xpose.msra.mxu0 0.0
    %894 = vmatprep.subr.mxu0 0.0
    %895 = vmatpush1.xpose.msra.mxu0 0.0
    %896 = vmatprep.subr.mxu0 0.0
    %897 = vmatpush1.xpose.msra.mxu0 0.0
    %898 = vmatprep.subr.mxu0 0.0
    %899 = vmatpush1.xpose.msra.mxu0 0.0
    %900 = vmatprep.subr.mxu0 0.0
    %901 = vmatpush1.xpose.msra.mxu0 0.0
    %902 = vmatprep.subr.mxu0 0.0
    %903 = vmatpush1.xpose.msra.mxu0 0.0
    %904 = vmatprep.subr.mxu0 0.0
    %905 = vmatpush1.xpose.msra.mxu0 0.0
    %906 = vmatprep.subr.mxu0 0.0
    %907 = vmatpush1.xpose.msra.mxu0 0.0
    %908 = vmatprep.subr.mxu0 0.0
    %909 = vmatpush1.xpose.msra.mxu0 0.0
    %910 = vmatprep.subr.mxu0 0.0
    %911 = vmatpush1.xpose.msra.mxu0 0.0
    %912 = vmatprep.mubr.f32.mxu0 0.0
    %913 = vmatmul.mubr.f32.gmra.mrb[0].mxu0 %v846
    %v914 = vpop.f32.mrb[0].mxu0
    %v915 = vadd.f32 0.0, %v914
    %v916 = vpop.f32.mrb[0].mxu0
    %917 = vdwg.mxu0
    %v918 = vxor.u32 %v915, 2147483648
    %v919 = vmul.f32 %v918, 1.442695
    %v920 = vpow.pop %v919
    %v921 = vadd.f32 %v920, 1.0
    %v922 = vrcp.pop %v921
    %v923 = vmul.f32 1.0, %v922
    %v924 = vadd.f32 %v844, %v923
    %v926 = vsel %vm764, %v683, 0
    %928 = vmatprep.subr.mxu0 0.0
    %929 = vmatpush1.xpose.msra.mxu0 %v926
    %930 = vmatprep.subr.mxu0 0.0
    %931 = vmatpush1.xpose.msra.mxu0 0.0
    %932 = vmatprep.subr.mxu0 0.0
    %933 = vmatpush1.xpose.msra.mxu0 0.0
    %934 = vmatprep.subr.mxu0 0.0
    %935 = vmatpush1.xpose.msra.mxu0 0.0
    %936 = vmatprep.subr.mxu0 0.0
    %937 = vmatpush1.xpose.msra.mxu0 0.0
    %938 = vmatprep.subr.mxu0 0.0
    %939 = vmatpush1.xpose.msra.mxu0 0.0
    %940 = vmatprep.subr.mxu0 0.0
    %941 = vmatpush1.xpose.msra.mxu0 0.0
    %942 = vmatprep.subr.mxu0 0.0
    %943 = vmatpush1.xpose.msra.mxu0 0.0
    %944 = vmatprep.subr.mxu0 0.0
    %945 = vmatpush1.xpose.msra.mxu0 0.0
    %946 = vmatprep.subr.mxu0 0.0
    %947 = vmatpush1.xpose.msra.mxu0 0.0
    %948 = vmatprep.subr.mxu0 0.0
    %949 = vmatpush1.xpose.msra.mxu0 0.0
    %950 = vmatprep.subr.mxu0 0.0
    %951 = vmatpush1.xpose.msra.mxu0 0.0
    %952 = vmatprep.subr.mxu0 0.0
    %953 = vmatpush1.xpose.msra.mxu0 0.0
    %954 = vmatprep.subr.mxu0 0.0
    %955 = vmatpush1.xpose.msra.mxu0 0.0
    %956 = vmatprep.subr.mxu0 0.0
    %957 = vmatpush1.xpose.msra.mxu0 0.0
    %958 = vmatprep.subr.mxu0 0.0
    %959 = vmatpush1.xpose.msra.mxu0 0.0
    %960 = vmatprep.subr.mxu0 0.0
    %961 = vmatpush1.xpose.msra.mxu0 0.0
    %962 = vmatprep.subr.mxu0 0.0
    %963 = vmatpush1.xpose.msra.mxu0 0.0
    %964 = vmatprep.subr.mxu0 0.0
    %965 = vmatpush1.xpose.msra.mxu0 0.0
    %966 = vmatprep.subr.mxu0 0.0
    %967 = vmatpush1.xpose.msra.mxu0 0.0
    %968 = vmatprep.subr.mxu0 0.0
    %969 = vmatpush1.xpose.msra.mxu0 0.0
    %970 = vmatprep.subr.mxu0 0.0
    %971 = vmatpush1.xpose.msra.mxu0 0.0
    %972 = vmatprep.subr.mxu0 0.0
    %973 = vmatpush1.xpose.msra.mxu0 0.0
    %974 = vmatprep.subr.mxu0 0.0
    %975 = vmatpush1.xpose.msra.mxu0 0.0
    %976 = vmatprep.subr.mxu0 0.0
    %977 = vmatpush1.xpose.msra.mxu0 0.0
    %978 = vmatprep.subr.mxu0 0.0
    %979 = vmatpush1.xpose.msra.mxu0 0.0
    %980 = vmatprep.subr.mxu0 0.0
    %981 = vmatpush1.xpose.msra.mxu0 0.0
    %982 = vmatprep.subr.mxu0 0.0
    %983 = vmatpush1.xpose.msra.mxu0 0.0
    %984 = vmatprep.subr.mxu0 0.0
    %985 = vmatpush1.xpose.msra.mxu0 0.0
    %986 = vmatprep.subr.mxu0 0.0
    %987 = vmatpush1.xpose.msra.mxu0 0.0
    %988 = vmatprep.subr.mxu0 0.0
    %989 = vmatpush1.xpose.msra.mxu0 0.0
    %990 = vmatprep.subr.mxu0 0.0
    %991 = vmatpush1.xpose.msra.mxu0 0.0
    %992 = vmatprep.mubr.f32.mxu0 0.0
    %993 = vmatmul.mubr.f32.gmra.mrb[0].mxu0 %v926
    %v994 = vpop.f32.mrb[0].mxu0
    %v995 = vadd.f32 0.0, %v994
    %v996 = vpop.f32.mrb[0].mxu0
    %997 = vdwg.mxu0
    %v998 = vxor.u32 %v995, 2147483648
    %v999 = vmul.f32 %v998, 1.442695
    %v1000 = vpow.pop %v999
    %v1001 = vadd.f32 %v1000, 1.0
    %v1002 = vrcp.pop %v1001
    %v1003 = vmul.f32 1.0, %v1002
    %v1004 = vadd.f32 %v924, %v1003
    %v1006 = vsel %vm764, %v684, 0
    %1008 = vmatprep.subr.mxu0 0.0
    %1009 = vmatpush1.xpose.msra.mxu0 %v1006
    %1010 = vmatprep.subr.mxu0 0.0
    %1011 = vmatpush1.xpose.msra.mxu0 0.0
    %1012 = vmatprep.subr.mxu0 0.0
    %1013 = vmatpush1.xpose.msra.mxu0 0.0
    %1014 = vmatprep.subr.mxu0 0.0
    %1015 = vmatpush1.xpose.msra.mxu0 0.0
    %1016 = vmatprep.subr.mxu0 0.0
    %1017 = vmatpush1.xpose.msra.mxu0 0.0
    %1018 = vmatprep.subr.mxu0 0.0
    %1019 = vmatpush1.xpose.msra.mxu0 0.0
    %1020 = vmatprep.subr.mxu0 0.0
    %1021 = vmatpush1.xpose.msra.mxu0 0.0
    %1022 = vmatprep.subr.mxu0 0.0
    %1023 = vmatpush1.xpose.msra.mxu0 0.0
    %1024 = vmatprep.subr.mxu0 0.0
    %1025 = vmatpush1.xpose.msra.mxu0 0.0
    %1026 = vmatprep.subr.mxu0 0.0
    %1027 = vmatpush1.xpose.msra.mxu0 0.0
    %1028 = vmatprep.subr.mxu0 0.0
    %1029 = vmatpush1.xpose.msra.mxu0 0.0
    %1030 = vmatprep.subr.mxu0 0.0
    %1031 = vmatpush1.xpose.msra.mxu0 0.0
    %1032 = vmatprep.subr.mxu0 0.0
    %1033 = vmatpush1.xpose.msra.mxu0 0.0
    %1034 = vmatprep.subr.mxu0 0.0
    %1035 = vmatpush1.xpose.msra.mxu0 0.0
    %1036 = vmatprep.subr.mxu0 0.0
    %1037 = vmatpush1.xpose.msra.mxu0 0.0
    %1038 = vmatprep.subr.mxu0 0.0
    %1039 = vmatpush1.xpose.msra.mxu0 0.0
    %1040 = vmatprep.subr.mxu0 0.0
    %1041 = vmatpush1.xpose.msra.mxu0 0.0
    %1042 = vmatprep.subr.mxu0 0.0
    %1043 = vmatpush1.xpose.msra.mxu0 0.0
    %1044 = vmatprep.subr.mxu0 0.0
    %1045 = vmatpush1.xpose.msra.mxu0 0.0
    %1046 = vmatprep.subr.mxu0 0.0
    %1047 = vmatpush1.xpose.msra.mxu0 0.0
    %1048 = vmatprep.subr.mxu0 0.0
    %1049 = vmatpush1.xpose.msra.mxu0 0.0
    %1050 = vmatprep.subr.mxu0 0.0
    %1051 = vmatpush1.xpose.msra.mxu0 0.0
    %1052 = vmatprep.subr.mxu0 0.0
    %1053 = vmatpush1.xpose.msra.mxu0 0.0
    %1054 = vmatprep.subr.mxu0 0.0
    %1055 = vmatpush1.xpose.msra.mxu0 0.0
    %1056 = vmatprep.subr.mxu0 0.0
    %1057 = vmatpush1.xpose.msra.mxu0 0.0
    %1058 = vmatprep.subr.mxu0 0.0
    %1059 = vmatpush1.xpose.msra.mxu0 0.0
    %1060 = vmatprep.subr.mxu0 0.0
    %1061 = vmatpush1.xpose.msra.mxu0 0.0
    %1062 = vmatprep.subr.mxu0 0.0
    %1063 = vmatpush1.xpose.msra.mxu0 0.0
    %1064 = vmatprep.subr.mxu0 0.0
    %1065 = vmatpush1.xpose.msra.mxu0 0.0
    %1066 = vmatprep.subr.mxu0 0.0
    %1067 = vmatpush1.xpose.msra.mxu0 0.0
    %1068 = vmatprep.subr.mxu0 0.0
    %1069 = vmatpush1.xpose.msra.mxu0 0.0
    %1070 = vmatprep.subr.mxu0 0.0
    %1071 = vmatpush1.xpose.msra.mxu0 0.0
    %1072 = vmatprep.mubr.f32.mxu0 0.0
    %1073 = vmatmul.mubr.f32.gmra.mrb[0].mxu0 %v1006
    %v1074 = vpop.f32.mrb[0].mxu0
    %v1075 = vadd.f32 0.0, %v1074
    %v1076 = vpop.f32.mrb[0].mxu0
    %1077 = vdwg.mxu0
    %v1078 = vxor.u32 %v1075, 2147483648
    %v1079 = vmul.f32 %v1078, 1.442695
    %v1080 = vpow.pop %v1079
    %v1081 = vadd.f32 %v1080, 1.0
    %v1082 = vrcp.pop %v1081
    %v1083 = vmul.f32 1.0, %v1082
    %v1084 = vadd.f32 %v1004, %v1083
    %v1086 = vsel %vm764, %v685, 0
    %1088 = vmatprep.subr.mxu0 0.0
    %1089 = vmatpush1.xpose.msra.mxu0 %v1086
    %1090 = vmatprep.subr.mxu0 0.0
    %1091 = vmatpush1.xpose.msra.mxu0 0.0
    %1092 = vmatprep.subr.mxu0 0.0
    %1093 = vmatpush1.xpose.msra.mxu0 0.0
    %1094 = vmatprep.subr.mxu0 0.0
    %1095 = vmatpush1.xpose.msra.mxu0 0.0
    %1096 = vmatprep.subr.mxu0 0.0
    %1097 = vmatpush1.xpose.msra.mxu0 0.0
    %1098 = vmatprep.subr.mxu0 0.0
    %1099 = vmatpush1.xpose.msra.mxu0 0.0
    %1100 = vmatprep.subr.mxu0 0.0
    %1101 = vmatpush1.xpose.msra.mxu0 0.0
    %1102 = vmatprep.subr.mxu0 0.0
    %1103 = vmatpush1.xpose.msra.mxu0 0.0
    %1104 = vmatprep.subr.mxu0 0.0
    %1105 = vmatpush1.xpose.msra.mxu0 0.0
    %1106 = vmatprep.subr.mxu0 0.0
    %1107 = vmatpush1.xpose.msra.mxu0 0.0
    %1108 = vmatprep.subr.mxu0 0.0
    %1109 = vmatpush1.xpose.msra.mxu0 0.0
    %1110 = vmatprep.subr.mxu0 0.0
    %1111 = vmatpush1.xpose.msra.mxu0 0.0
    %1112 = vmatprep.subr.mxu0 0.0
    %1113 = vmatpush1.xpose.msra.mxu0 0.0
    %1114 = vmatprep.subr.mxu0 0.0
    %1115 = vmatpush1.xpose.msra.mxu0 0.0
    %1116 = vmatprep.subr.mxu0 0.0
    %1117 = vmatpush1.xpose.msra.mxu0 0.0
    %1118 = vmatprep.subr.mxu0 0.0
    %1119 = vmatpush1.xpose.msra.mxu0 0.0
    %1120 = vmatprep.subr.mxu0 0.0
    %1121 = vmatpush1.xpose.msra.mxu0 0.0
    %1122 = vmatprep.subr.mxu0 0.0
    %1123 = vmatpush1.xpose.msra.mxu0 0.0
    %1124 = vmatprep.subr.mxu0 0.0
    %1125 = vmatpush1.xpose.msra.mxu0 0.0
    %1126 = vmatprep.subr.mxu0 0.0
    %1127 = vmatpush1.xpose.msra.mxu0 0.0
    %1128 = vmatprep.subr.mxu0 0.0
    %1129 = vmatpush1.xpose.msra.mxu0 0.0
    %1130 = vmatprep.subr.mxu0 0.0
    %1131 = vmatpush1.xpose.msra.mxu0 0.0
    %1132 = vmatprep.subr.mxu0 0.0
    %1133 = vmatpush1.xpose.msra.mxu0 0.0
    %1134 = vmatprep.subr.mxu0 0.0
    %1135 = vmatpush1.xpose.msra.mxu0 0.0
    %1136 = vmatprep.subr.mxu0 0.0
    %1137 = vmatpush1.xpose.msra.mxu0 0.0
    %1138 = vmatprep.subr.mxu0 0.0
    %1139 = vmatpush1.xpose.msra.mxu0 0.0
    %1140 = vmatprep.subr.mxu0 0.0
    %1141 = vmatpush1.xpose.msra.mxu0 0.0
    %1142 = vmatprep.subr.mxu0 0.0
    %1143 = vmatpush1.xpose.msra.mxu0 0.0
    %1144 = vmatprep.subr.mxu0 0.0
    %1145 = vmatpush1.xpose.msra.mxu0 0.0
    %1146 = vmatprep.subr.mxu0 0.0
    %1147 = vmatpush1.xpose.msra.mxu0 0.0
    %1148 = vmatprep.subr.mxu0 0.0
    %1149 = vmatpush1.xpose.msra.mxu0 0.0
    %1150 = vmatprep.subr.mxu0 0.0
    %1151 = vmatpush1.xpose.msra.mxu0 0.0
    %1152 = vmatprep.mubr.f32.mxu0 0.0
    %1153 = vmatmul.mubr.f32.gmra.mrb[0].mxu0 %v1086
    %v1154 = vpop.f32.mrb[0].mxu0
    %v1155 = vadd.f32 0.0, %v1154
    %v1156 = vpop.f32.mrb[0].mxu0
    %1157 = vdwg.mxu0
    %v1158 = vxor.u32 %v1155, 2147483648
    %v1159 = vmul.f32 %v1158, 1.442695
    %v1160 = vpow.pop %v1159
    %v1161 = vadd.f32 %v1160, 1.0
    %v1162 = vrcp.pop %v1161
    %v1163 = vmul.f32 1.0, %v1162
    %v1164 = vadd.f32 %v1084, %v1163
    %v1166 = vsel %vm764, %v686, 0
    %1168 = vmatprep.subr.mxu0 0.0
    %1169 = vmatpush1.xpose.msra.mxu0 %v1166
    %1170 = vmatprep.subr.mxu0 0.0
    %1171 = vmatpush1.xpose.msra.mxu0 0.0
    %1172 = vmatprep.subr.mxu0 0.0
    %1173 = vmatpush1.xpose.msra.mxu0 0.0
    %1174 = vmatprep.subr.mxu0 0.0
    %1175 = vmatpush1.xpose.msra.mxu0 0.0
    %1176 = vmatprep.subr.mxu0 0.0
    %1177 = vmatpush1.xpose.msra.mxu0 0.0
    %1178 = vmatprep.subr.mxu0 0.0
    %1179 = vmatpush1.xpose.msra.mxu0 0.0
    %1180 = vmatprep.subr.mxu0 0.0
    %1181 = vmatpush1.xpose.msra.mxu0 0.0
    %1182 = vmatprep.subr.mxu0 0.0
    %1183 = vmatpush1.xpose.msra.mxu0 0.0
    %1184 = vmatprep.subr.mxu0 0.0
    %1185 = vmatpush1.xpose.msra.mxu0 0.0
    %1186 = vmatprep.subr.mxu0 0.0
    %1187 = vmatpush1.xpose.msra.mxu0 0.0
    %1188 = vmatprep.subr.mxu0 0.0
    %1189 = vmatpush1.xpose.msra.mxu0 0.0
    %1190 = vmatprep.subr.mxu0 0.0
    %1191 = vmatpush1.xpose.msra.mxu0 0.0
    %1192 = vmatprep.subr.mxu0 0.0
    %1193 = vmatpush1.xpose.msra.mxu0 0.0
    %1194 = vmatprep.subr.mxu0 0.0
    %1195 = vmatpush1.xpose.msra.mxu0 0.0
    %1196 = vmatprep.subr.mxu0 0.0
    %1197 = vmatpush1.xpose.msra.mxu0 0.0
    %1198 = vmatprep.subr.mxu0 0.0
    %1199 = vmatpush1.xpose.msra.mxu0 0.0
    %1200 = vmatprep.subr.mxu0 0.0
    %1201 = vmatpush1.xpose.msra.mxu0 0.0
    %1202 = vmatprep.subr.mxu0 0.0
    %1203 = vmatpush1.xpose.msra.mxu0 0.0
    %1204 = vmatprep.subr.mxu0 0.0
    %1205 = vmatpush1.xpose.msra.mxu0 0.0
    %1206 = vmatprep.subr.mxu0 0.0
    %1207 = vmatpush1.xpose.msra.mxu0 0.0
    %1208 = vmatprep.subr.mxu0 0.0
    %1209 = vmatpush1.xpose.msra.mxu0 0.0
    %1210 = vmatprep.subr.mxu0 0.0
    %1211 = vmatpush1.xpose.msra.mxu0 0.0
    %1212 = vmatprep.subr.mxu0 0.0
    %1213 = vmatpush1.xpose.msra.mxu0 0.0
    %1214 = vmatprep.subr.mxu0 0.0
    %1215 = vmatpush1.xpose.msra.mxu0 0.0
    %1216 = vmatprep.subr.mxu0 0.0
    %1217 = vmatpush1.xpose.msra.mxu0 0.0
    %1218 = vmatprep.subr.mxu0 0.0
    %1219 = vmatpush1.xpose.msra.mxu0 0.0
    %1220 = vmatprep.subr.mxu0 0.0
    %1221 = vmatpush1.xpose.msra.mxu0 0.0
    %1222 = vmatprep.subr.mxu0 0.0
    %1223 = vmatpush1.xpose.msra.mxu0 0.0
    %1224 = vmatprep.subr.mxu0 0.0
    %1225 = vmatpush1.xpose.msra.mxu0 0.0
    %1226 = vmatprep.subr.mxu0 0.0
    %1227 = vmatpush1.xpose.msra.mxu0 0.0
    %1228 = vmatprep.subr.mxu0 0.0
    %1229 = vmatpush1.xpose.msra.mxu0 0.0
    %1230 = vmatprep.subr.mxu0 0.0
    %1231 = vmatpush1.xpose.msra.mxu0 0.0
    %1232 = vmatprep.mubr.f32.mxu0 0.0
    %1233 = vmatmul.mubr.f32.gmra.mrb[0].mxu0 %v1166
    %v1234 = vpop.f32.mrb[0].mxu0
    %v1235 = vadd.f32 0.0, %v1234
    %v1236 = vpop.f32.mrb[0].mxu0
    %1237 = vdwg.mxu0
    %v1238 = vxor.u32 %v1235, 2147483648
    %v1239 = vmul.f32 %v1238, 1.442695
    %v1240 = vpow.pop %v1239
    %v1241 = vadd.f32 %v1240, 1.0
    %v1242 = vrcp.pop %v1241
    %v1243 = vmul.f32 1.0, %v1242
    %v1244 = vadd.f32 %v1164, %v1243
    %v1246 = vsel %vm764, %v687, 0
    %1248 = vmatprep.subr.mxu0 0.0
    %1249 = vmatpush1.xpose.msra.mxu0 %v1246
    %1250 = vmatprep.subr.mxu0 0.0
    %1251 = vmatpush1.xpose.msra.mxu0 0.0
    %1252 = vmatprep.subr.mxu0 0.0
    %1253 = vmatpush1.xpose.msra.mxu0 0.0
    %1254 = vmatprep.subr.mxu0 0.0
    %1255 = vmatpush1.xpose.msra.mxu0 0.0
    %1256 = vmatprep.subr.mxu0 0.0
    %1257 = vmatpush1.xpose.msra.mxu0 0.0
    %1258 = vmatprep.subr.mxu0 0.0
    %1259 = vmatpush1.xpose.msra.mxu0 0.0
    %1260 = vmatprep.subr.mxu0 0.0
    %1261 = vmatpush1.xpose.msra.mxu0 0.0
    %1262 = vmatprep.subr.mxu0 0.0
    %1263 = vmatpush1.xpose.msra.mxu0 0.0
    %1264 = vmatprep.subr.mxu0 0.0
    %1265 = vmatpush1.xpose.msra.mxu0 0.0
    %1266 = vmatprep.subr.mxu0 0.0
    %1267 = vmatpush1.xpose.msra.mxu0 0.0
    %1268 = vmatprep.subr.mxu0 0.0
    %1269 = vmatpush1.xpose.msra.mxu0 0.0
    %1270 = vmatprep.subr.mxu0 0.0
    %1271 = vmatpush1.xpose.msra.mxu0 0.0
    %1272 = vmatprep.subr.mxu0 0.0
    %1273 = vmatpush1.xpose.msra.mxu0 0.0
    %1274 = vmatprep.subr.mxu0 0.0
    %1275 = vmatpush1.xpose.msra.mxu0 0.0
    %1276 = vmatprep.subr.mxu0 0.0
    %1277 = vmatpush1.xpose.msra.mxu0 0.0
    %1278 = vmatprep.subr.mxu0 0.0
    %1279 = vmatpush1.xpose.msra.mxu0 0.0
    %1280 = vmatprep.subr.mxu0 0.0
    %1281 = vmatpush1.xpose.msra.mxu0 0.0
    %1282 = vmatprep.subr.mxu0 0.0
    %1283 = vmatpush1.xpose.msra.mxu0 0.0
    %1284 = vmatprep.subr.mxu0 0.0
    %1285 = vmatpush1.xpose.msra.mxu0 0.0
    %1286 = vmatprep.subr.mxu0 0.0
    %1287 = vmatpush1.xpose.msra.mxu0 0.0
    %1288 = vmatprep.subr.mxu0 0.0
    %1289 = vmatpush1.xpose.msra.mxu0 0.0
    %1290 = vmatprep.subr.mxu0 0.0
    %1291 = vmatpush1.xpose.msra.mxu0 0.0
    %1292 = vmatprep.subr.mxu0 0.0
    %1293 = vmatpush1.xpose.msra.mxu0 0.0
    %1294 = vmatprep.subr.mxu0 0.0
    %1295 = vmatpush1.xpose.msra.mxu0 0.0
    %1296 = vmatprep.subr.mxu0 0.0
    %1297 = vmatpush1.xpose.msra.mxu0 0.0
    %1298 = vmatprep.subr.mxu0 0.0
    %1299 = vmatpush1.xpose.msra.mxu0 0.0
    %1300 = vmatprep.subr.mxu0 0.0
    %1301 = vmatpush1.xpose.msra.mxu0 0.0
    %1302 = vmatprep.subr.mxu0 0.0
    %1303 = vmatpush1.xpose.msra.mxu0 0.0
    %1304 = vmatprep.subr.mxu0 0.0
    %1305 = vmatpush1.xpose.msra.mxu0 0.0
    %1306 = vmatprep.subr.mxu0 0.0
    %1307 = vmatpush1.xpose.msra.mxu0 0.0
    %1308 = vmatprep.subr.mxu0 0.0
    %1309 = vmatpush1.xpose.msra.mxu0 0.0
    %1310 = vmatprep.subr.mxu0 0.0
    %1311 = vmatpush1.xpose.msra.mxu0 0.0
    %1312 = vmatprep.mubr.f32.mxu0 0.0
    %1313 = vmatmul.mubr.f32.gmra.mrb[0].mxu0 %v1246
    %v1314 = vpop.f32.mrb[0].mxu0
    %v1315 = vadd.f32 0.0, %v1314
    %v1316 = vpop.f32.mrb[0].mxu0
    %1317 = vdwg.mxu0
    %v1318 = vxor.u32 %v1315, 2147483648
    %v1319 = vmul.f32 %v1318, 1.442695
    %v1320 = vpow.pop %v1319
    %v1321 = vadd.f32 %v1320, 1.0
    %v1322 = vrcp.pop %v1321
    %v1323 = vmul.f32 1.0, %v1322
    %v1324 = vadd.f32 %v1244, %v1323
    %v1326 = vsel %vm764, %v688, 0
    %1328 = vmatprep.subr.mxu0 0.0
    %1329 = vmatpush1.xpose.msra.mxu0 %v1326
    %1330 = vmatprep.subr.mxu0 0.0
    %1331 = vmatpush1.xpose.msra.mxu0 0.0
    %1332 = vmatprep.subr.mxu0 0.0
    %1333 = vmatpush1.xpose.msra.mxu0 0.0
    %1334 = vmatprep.subr.mxu0 0.0
    %1335 = vmatpush1.xpose.msra.mxu0 0.0
    %1336 = vmatprep.subr.mxu0 0.0
    %1337 = vmatpush1.xpose.msra.mxu0 0.0
    %1338 = vmatprep.subr.mxu0 0.0
    %1339 = vmatpush1.xpose.msra.mxu0 0.0
    %1340 = vmatprep.subr.mxu0 0.0
    %1341 = vmatpush1.xpose.msra.mxu0 0.0
    %1342 = vmatprep.subr.mxu0 0.0
    %1343 = vmatpush1.xpose.msra.mxu0 0.0
    %1344 = vmatprep.subr.mxu0 0.0
    %1345 = vmatpush1.xpose.msra.mxu0 0.0
    %1346 = vmatprep.subr.mxu0 0.0
    %1347 = vmatpush1.xpose.msra.mxu0 0.0
    %1348 = vmatprep.subr.mxu0 0.0
    %1349 = vmatpush1.xpose.msra.mxu0 0.0
    %1350 = vmatprep.subr.mxu0 0.0
    %1351 = vmatpush1.xpose.msra.mxu0 0.0
    %1352 = vmatprep.subr.mxu0 0.0
    %1353 = vmatpush1.xpose.msra.mxu0 0.0
    %1354 = vmatprep.subr.mxu0 0.0
    %1355 = vmatpush1.xpose.msra.mxu0 0.0
    %1356 = vmatprep.subr.mxu0 0.0
    %1357 = vmatpush1.xpose.msra.mxu0 0.0
    %1358 = vmatprep.subr.mxu0 0.0
    %1359 = vmatpush1.xpose.msra.mxu0 0.0
    %1360 = vmatprep.subr.mxu0 0.0
    %1361 = vmatpush1.xpose.msra.mxu0 0.0
    %1362 = vmatprep.subr.mxu0 0.0
    %1363 = vmatpush1.xpose.msra.mxu0 0.0
    %1364 = vmatprep.subr.mxu0 0.0
    %1365 = vmatpush1.xpose.msra.mxu0 0.0
    %1366 = vmatprep.subr.mxu0 0.0
    %1367 = vmatpush1.xpose.msra.mxu0 0.0
    %1368 = vmatprep.subr.mxu0 0.0
    %1369 = vmatpush1.xpose.msra.mxu0 0.0
    %1370 = vmatprep.subr.mxu0 0.0
    %1371 = vmatpush1.xpose.msra.mxu0 0.0
    %1372 = vmatprep.subr.mxu0 0.0
    %1373 = vmatpush1.xpose.msra.mxu0 0.0
    %1374 = vmatprep.subr.mxu0 0.0
    %1375 = vmatpush1.xpose.msra.mxu0 0.0
    %1376 = vmatprep.subr.mxu0 0.0
    %1377 = vmatpush1.xpose.msra.mxu0 0.0
    %1378 = vmatprep.subr.mxu0 0.0
    %1379 = vmatpush1.xpose.msra.mxu0 0.0
    %1380 = vmatprep.subr.mxu0 0.0
    %1381 = vmatpush1.xpose.msra.mxu0 0.0
    %1382 = vmatprep.subr.mxu0 0.0
    %1383 = vmatpush1.xpose.msra.mxu0 0.0
    %1384 = vmatprep.subr.mxu0 0.0
    %1385 = vmatpush1.xpose.msra.mxu0 0.0
    %1386 = vmatprep.subr.mxu0 0.0
    %1387 = vmatpush1.xpose.msra.mxu0 0.0
    %1388 = vmatprep.subr.mxu0 0.0
    %1389 = vmatpush1.xpose.msra.mxu0 0.0
    %1390 = vmatprep.subr.mxu0 0.0
    %1391 = vmatpush1.xpose.msra.mxu0 0.0
    %1392 = vmatprep.mubr.f32.mxu0 0.0
    %1393 = vmatmul.mubr.f32.gmra.mrb[0].mxu0 %v1326
    %v1394 = vpop.f32.mrb[0].mxu0
    %v1395 = vadd.f32 0.0, %v1394
    %v1396 = vpop.f32.mrb[0].mxu0
    %1397 = vdwg.mxu0
    %v1398 = vxor.u32 %v1395, 2147483648
    %v1399 = vmul.f32 %v1398, 1.442695
    %v1400 = vpow.pop %v1399
    %v1401 = vadd.f32 %v1400, 1.0
    %v1402 = vrcp.pop %v1401
    %v1403 = vmul.f32 1.0, %v1402
    %v1404 = vadd.f32 %v1324, %v1403
    %v1405 = vmul.f32 %v1404, 0.125
    %1407 = vrot.lane.b32.xlu0 %v1405, 8
    %v1408 = vpop.permute.xlu0 %1407
    %v1410 = vsel %vm82, %v761, %v1408
    %vm1411 = vcmask 130048
    %1412 = vst.msk [vmem:[#allocation7] sm:$0xff] %vm1411, %v1410
    %v1413 = vld [vmem:[#allocation5] sm:$0xff]
    %v1414 = vld [vmem:[#allocation5 + $0x8] sm:$0xff]
    %v1415 = vld [vmem:[#allocation5 + $0x10] sm:$0xff]
    %v1416 = vld [vmem:[#allocation5 + $0x18] sm:$0xff]
    %v1417 = vld [vmem:[#allocation5 + $0x20] sm:$0xff]
    %v1418 = vld [vmem:[#allocation5 + $0x28] sm:$0xff]
    %v1419 = vld [vmem:[#allocation5 + $0x30] sm:$0xff]
    %v1420 = vld [vmem:[#allocation5 + $0x38] sm:$0xff]
    %v1421 = vld [vmem:[#allocation5 + $0x40] sm:$0xff]
    %v1422 = vld [vmem:[#allocation5 + $0x48] sm:$0xff]
    %v1423 = vld [vmem:[#allocation5 + $0x50] sm:$0xff]
    %v1424 = vld [vmem:[#allocation5 + $0x58] sm:$0xff]
    %v1425 = vld [vmem:[#allocation5 + $0x60] sm:$0xff]
    %v1426 = vld [vmem:[#allocation5 + $0x68] sm:$0xff]
    %v1427 = vld [vmem:[#allocation5 + $0x70] sm:$0xff]
    %v1428 = vld [vmem:[#allocation5 + $0x78] sm:$0xff]
    %v1429 = vld [vmem:[#allocation5 + $0x80] sm:$0xff]
    %v1430 = vld [vmem:[#allocation5 + $0x88] sm:$0xff]
    %v1431 = vld [vmem:[#allocation5 + $0x90] sm:$0xff]
    %v1432 = vld [vmem:[#allocation5 + $0x98] sm:$0xff]
    %v1433 = vld [vmem:[#allocation5 + $0xa0] sm:$0xff]
    %v1434 = vld [vmem:[#allocation5 + $0xa8] sm:$0xff]
    %v1435 = vld [vmem:[#allocation5 + $0xb0] sm:$0xff]
    %v1436 = vld [vmem:[#allocation5 + $0xb8] sm:$0xff]
    %1437 = vset.pattern.permute.xlu0 0
    %1438 = vperm.xlu0 %1437, %v681
    %v1439 = vpop.permute.xlu0 %1438
    %1441 = vset.pattern.permute.xlu0 0
    %1442 = vperm.xlu0 %1441, %v682
    %v1443 = vpop.permute.xlu0 %1442
    %1445 = vset.pattern.permute.xlu0 0
    %1446 = vperm.xlu0 %1445, %v683
    %v1447 = vpop.permute.xlu0 %1446
    %1449 = vset.pattern.permute.xlu0 0
    %1450 = vperm.xlu0 %1449, %v684
    %v1451 = vpop.permute.xlu0 %1450
    %1453 = vset.pattern.permute.xlu0 0
    %1454 = vperm.xlu0 %1453, %v685
    %v1455 = vpop.permute.xlu0 %1454
    %1457 = vset.pattern.permute.xlu0 0
    %1458 = vperm.xlu0 %1457, %v686
    %v1459 = vpop.permute.xlu0 %1458
    %1461 = vset.pattern.permute.xlu0 0
    %1462 = vperm.xlu0 %1461, %v687
    %v1463 = vpop.permute.xlu0 %1462
    %1465 = vset.pattern.permute.xlu0 0
    %1466 = vperm.xlu0 %1465, %v688
    %v1467 = vpop.permute.xlu0 %1466
    %v1469 = vmul.f32 %v1439, %v1413
    %v1470 = vmul.f32 %v1443, %v1416
    %v1471 = vmul.f32 %v1447, %v1419
    %v1472 = vmul.f32 %v1451, %v1422
    %v1473 = vmul.f32 %v1455, %v1425
    %v1474 = vmul.f32 %v1459, %v1428
    %v1475 = vmul.f32 %v1463, %v1431
    %v1476 = vmul.f32 %v1467, %v1434
    %1477 = vset.pattern.permute.xlu0 1
    %1478 = vperm.xlu0 %1477, %v681
    %v1479 = vpop.permute.xlu0 %1478
    %1481 = vset.pattern.permute.xlu0 1
    %1482 = vperm.xlu0 %1481, %v682
    %v1483 = vpop.permute.xlu0 %1482
    %1485 = vset.pattern.permute.xlu0 1
    %1486 = vperm.xlu0 %1485, %v683
    %v1487 = vpop.permute.xlu0 %1486
    %1489 = vset.pattern.permute.xlu0 1
    %1490 = vperm.xlu0 %1489, %v684
    %v1491 = vpop.permute.xlu0 %1490
    %1493 = vset.pattern.permute.xlu0 1
    %1494 = vperm.xlu0 %1493, %v685
    %v1495 = vpop.permute.xlu0 %1494
    %1497 = vset.pattern.permute.xlu0 1
    %1498 = vperm.xlu0 %1497, %v686
    %v1499 = vpop.permute.xlu0 %1498
    %1501 = vset.pattern.permute.xlu0 1
    %1502 = vperm.xlu0 %1501, %v687
    %v1503 = vpop.permute.xlu0 %1502
    %1505 = vset.pattern.permute.xlu0 1
    %1506 = vperm.xlu0 %1505, %v688
    %v1507 = vpop.permute.xlu0 %1506
    %v1509 = vmul.f32 %v1479, %v1413
    %v1510 = vmul.f32 %v1479, %v1414
    %v1511 = vmul.f32 %v1483, %v1416
    %v1512 = vmul.f32 %v1483, %v1417
    %v1513 = vmul.f32 %v1487, %v1419
    %v1514 = vmul.f32 %v1487, %v1420
    %v1515 = vmul.f32 %v1491, %v1422
    %v1516 = vmul.f32 %v1491, %v1423
    %v1517 = vmul.f32 %v1495, %v1425
    %v1518 = vmul.f32 %v1495, %v1426
    %v1519 = vmul.f32 %v1499, %v1428
    %v1520 = vmul.f32 %v1499, %v1429
    %v1521 = vmul.f32 %v1503, %v1431
    %v1522 = vmul.f32 %v1503, %v1432
    %v1523 = vmul.f32 %v1507, %v1434
    %v1524 = vmul.f32 %v1507, %v1435
    %1541 = vrot.lane.b32.xlu0 %v1509, 32
    %v1542 = vpop.permute.xlu0 %1541
    %1543 = vrot.lane.b32.xlu0 %v1510, 32
    %v1544 = vpop.permute.xlu0 %1543
    %1545 = vrot.lane.b32.xlu0 %v1511, 32
    %v1546 = vpop.permute.xlu0 %1545
    %1547 = vrot.lane.b32.xlu0 %v1512, 32
    %v1548 = vpop.permute.xlu0 %1547
    %1549 = vrot.lane.b32.xlu0 %v1513, 32
    %v1550 = vpop.permute.xlu0 %1549
    %1551 = vrot.lane.b32.xlu0 %v1514, 32
    %v1552 = vpop.permute.xlu0 %1551
    %1553 = vrot.lane.b32.xlu0 %v1515, 32
    %v1554 = vpop.permute.xlu0 %1553
    %1555 = vrot.lane.b32.xlu0 %v1516, 32
    %v1556 = vpop.permute.xlu0 %1555
    %1557 = vrot.lane.b32.xlu0 %v1517, 32
    %v1558 = vpop.permute.xlu0 %1557
    %1559 = vrot.lane.b32.xlu0 %v1518, 32
    %v1560 = vpop.permute.xlu0 %1559
    %1561 = vrot.lane.b32.xlu0 %v1519, 32
    %v1562 = vpop.permute.xlu0 %1561
    %1563 = vrot.lane.b32.xlu0 %v1520, 32
    %v1564 = vpop.permute.xlu0 %1563
    %1565 = vrot.lane.b32.xlu0 %v1521, 32
    %v1566 = vpop.permute.xlu0 %1565
    %1567 = vrot.lane.b32.xlu0 %v1522, 32
    %v1568 = vpop.permute.xlu0 %1567
    %1569 = vrot.lane.b32.xlu0 %v1523, 32
    %v1570 = vpop.permute.xlu0 %1569
    %1571 = vrot.lane.b32.xlu0 %v1524, 32
    %v1572 = vpop.permute.xlu0 %1571
    %vm1573 = vcmask 261120
    %v1574 = vsel %vm1573, %v1542, %v1544
    %v1575 = vsel %vm1573, %v1546, %v1548
    %v1576 = vsel %vm1573, %v1550, %v1552
    %v1577 = vsel %vm1573, %v1554, %v1556
    %v1578 = vsel %vm1573, %v1558, %v1560
    %v1579 = vsel %vm1573, %v1562, %v1564
    %v1580 = vsel %vm1573, %v1566, %v1568
    %v1581 = vsel %vm1573, %v1570, %v1572
    %v1590 = vadd.f32 %v1469, %v1574
    %v1591 = vadd.f32 %v1470, %v1575
    %v1592 = vadd.f32 %v1471, %v1576
    %v1593 = vadd.f32 %v1472, %v1577
    %v1594 = vadd.f32 %v1473, %v1578
    %v1595 = vadd.f32 %v1474, %v1579
    %v1596 = vadd.f32 %v1475, %v1580
    %v1597 = vadd.f32 %v1476, %v1581
    %1598 = vset.pattern.permute.xlu0 2
    %1599 = vperm.xlu0 %1598, %v681
    %v1600 = vpop.permute.xlu0 %1599
    %1602 = vset.pattern.permute.xlu0 2
    %1603 = vperm.xlu0 %1602, %v682
    %v1604 = vpop.permute.xlu0 %1603
    %1606 = vset.pattern.permute.xlu0 2
    %1607 = vperm.xlu0 %1606, %v683
    %v1608 = vpop.permute.xlu0 %1607
    %1610 = vset.pattern.permute.xlu0 2
    %1611 = vperm.xlu0 %1610, %v684
    %v1612 = vpop.permute.xlu0 %1611
    %1614 = vset.pattern.permute.xlu0 2
    %1615 = vperm.xlu0 %1614, %v685
    %v1616 = vpop.permute.xlu0 %1615
    %1618 = vset.pattern.permute.xlu0 2
    %1619 = vperm.xlu0 %1618, %v686
    %v1620 = vpop.permute.xlu0 %1619
    %1622 = vset.pattern.permute.xlu0 2
    %1623 = vperm.xlu0 %1622, %v687
    %v1624 = vpop.permute.xlu0 %1623
    %1626 = vset.pattern.permute.xlu0 2
    %1627 = vperm.xlu0 %1626, %v688
    %v1628 = vpop.permute.xlu0 %1627
    %v1630 = vmul.f32 %v1600, %v1414
    %v1631 = vmul.f32 %v1600, %v1415
    %v1632 = vmul.f32 %v1604, %v1417
    %v1633 = vmul.f32 %v1604, %v1418
    %v1634 = vmul.f32 %v1608, %v1420
    %v1635 = vmul.f32 %v1608, %v1421
    %v1636 = vmul.f32 %v1612, %v1423
    %v1637 = vmul.f32 %v1612, %v1424
    %v1638 = vmul.f32 %v1616, %v1426
    %v1639 = vmul.f32 %v1616, %v1427
    %v1640 = vmul.f32 %v1620, %v1429
    %v1641 = vmul.f32 %v1620, %v1430
    %v1642 = vmul.f32 %v1624, %v1432
    %v1643 = vmul.f32 %v1624, %v1433
    %v1644 = vmul.f32 %v1628, %v1435
    %v1645 = vmul.f32 %v1628, %v1436
    %1662 = vrot.lane.b32.xlu0 %v1630, 64
    %v1663 = vpop.permute.xlu0 %1662
    %1664 = vrot.lane.b32.xlu0 %v1631, 64
    %v1665 = vpop.permute.xlu0 %1664
    %1666 = vrot.lane.b32.xlu0 %v1632, 64
    %v1667 = vpop.permute.xlu0 %1666
    %1668 = vrot.lane.b32.xlu0 %v1633, 64
    %v1669 = vpop.permute.xlu0 %1668
    %1670 = vrot.lane.b32.xlu0 %v1634, 64
    %v1671 = vpop.permute.xlu0 %1670
    %1672 = vrot.lane.b32.xlu0 %v1635, 64
    %v1673 = vpop.permute.xlu0 %1672
    %1674 = vrot.lane.b32.xlu0 %v1636, 64
    %v1675 = vpop.permute.xlu0 %1674
    %1676 = vrot.lane.b32.xlu0 %v1637, 64
    %v1677 = vpop.permute.xlu0 %1676
    %1678 = vrot.lane.b32.xlu0 %v1638, 64
    %v1679 = vpop.permute.xlu0 %1678
    %1680 = vrot.lane.b32.xlu0 %v1639, 64
    %v1681 = vpop.permute.xlu0 %1680
    %1682 = vrot.lane.b32.xlu0 %v1640, 64
    %v1683 = vpop.permute.xlu0 %1682
    %1684 = vrot.lane.b32.xlu0 %v1641, 64
    %v1685 = vpop.permute.xlu0 %1684
    %1686 = vrot.lane.b32.xlu0 %v1642, 64
    %v1687 = vpop.permute.xlu0 %1686
    %1688 = vrot.lane.b32.xlu0 %v1643, 64
    %v1689 = vpop.permute.xlu0 %1688
    %1690 = vrot.lane.b32.xlu0 %v1644, 64
    %v1691 = vpop.permute.xlu0 %1690
    %1692 = vrot.lane.b32.xlu0 %v1645, 64
    %v1693 = vpop.permute.xlu0 %1692
    %v1694 = vsel %vm218, %v1663, %v1665
    %v1695 = vsel %vm218, %v1667, %v1669
    %v1696 = vsel %vm218, %v1671, %v1673
    %v1697 = vsel %vm218, %v1675, %v1677
    %v1698 = vsel %vm218, %v1679, %v1681
    %v1699 = vsel %vm218, %v1683, %v1685
    %v1700 = vsel %vm218, %v1687, %v1689
    %v1701 = vsel %vm218, %v1691, %v1693
    %v1710 = vadd.f32 %v1590, %v1694
    %v1711 = vadd.f32 %v1591, %v1695
    %v1712 = vadd.f32 %v1592, %v1696
    %v1713 = vadd.f32 %v1593, %v1697
    %v1714 = vadd.f32 %v1594, %v1698
    %v1715 = vadd.f32 %v1595, %v1699
    %v1716 = vadd.f32 %v1596, %v1700
    %v1717 = vadd.f32 %v1597, %v1701
    %1718 = vset.pattern.permute.xlu0 3
    %1719 = vperm.xlu0 %1718, %v681
    %v1720 = vpop.permute.xlu0 %1719
    %1722 = vset.pattern.permute.xlu0 3
    %1723 = vperm.xlu0 %1722, %v682
    %v1724 = vpop.permute.xlu0 %1723
    %1726 = vset.pattern.permute.xlu0 3
    %1727 = vperm.xlu0 %1726, %v683
    %v1728 = vpop.permute.xlu0 %1727
    %1730 = vset.pattern.permute.xlu0 3
    %1731 = vperm.xlu0 %1730, %v684
    %v1732 = vpop.permute.xlu0 %1731
    %1734 = vset.pattern.permute.xlu0 3
    %1735 = vperm.xlu0 %1734, %v685
    %v1736 = vpop.permute.xlu0 %1735
    %1738 = vset.pattern.permute.xlu0 3
    %1739 = vperm.xlu0 %1738, %v686
    %v1740 = vpop.permute.xlu0 %1739
    %1742 = vset.pattern.permute.xlu0 3
    %1743 = vperm.xlu0 %1742, %v687
    %v1744 = vpop.permute.xlu0 %1743
    %1746 = vset.pattern.permute.xlu0 3
    %1747 = vperm.xlu0 %1746, %v688
    %v1748 = vpop.permute.xlu0 %1747
    %v1750 = vmul.f32 %v1720, %v1415
    %v1751 = vmul.f32 %v1724, %v1418
    %v1752 = vmul.f32 %v1728, %v1421
    %v1753 = vmul.f32 %v1732, %v1424
    %v1754 = vmul.f32 %v1736, %v1427
    %v1755 = vmul.f32 %v1740, %v1430
    %v1756 = vmul.f32 %v1744, %v1433
    %v1757 = vmul.f32 %v1748, %v1436
    %1766 = vrot.lane.b32.xlu0 %v1750, 96
    %v1767 = vpop.permute.xlu0 %1766
    %1768 = vrot.lane.b32.xlu0 %v1751, 96
    %v1769 = vpop.permute.xlu0 %1768
    %1770 = vrot.lane.b32.xlu0 %v1752, 96
    %v1771 = vpop.permute.xlu0 %1770
    %1772 = vrot.lane.b32.xlu0 %v1753, 96
    %v1773 = vpop.permute.xlu0 %1772
    %1774 = vrot.lane.b32.xlu0 %v1754, 96
    %v1775 = vpop.permute.xlu0 %1774
    %1776 = vrot.lane.b32.xlu0 %v1755, 96
    %v1777 = vpop.permute.xlu0 %1776
    %1778 = vrot.lane.b32.xlu0 %v1756, 96
    %v1779 = vpop.permute.xlu0 %1778
    %1780 = vrot.lane.b32.xlu0 %v1757, 96
    %v1781 = vpop.permute.xlu0 %1780
    %v1790 = vadd.f32 %v1710, %v1767
    %v1791 = vadd.f32 %v1711, %v1769
    %v1792 = vadd.f32 %v1712, %v1771
    %v1793 = vadd.f32 %v1713, %v1773
    %v1794 = vadd.f32 %v1714, %v1775
    %v1795 = vadd.f32 %v1715, %v1777
    %v1796 = vadd.f32 %v1716, %v1779
    %v1797 = vadd.f32 %v1717, %v1781
    %v1798 = vld [vmem:[%s7] sm:$0xf]
    %v1799 = vlaneseq
    %v1800 = vshrl.u32 %v1799, 7
    %v1801 = vsub.s32 0, %v1800
    %v1802 = vrot.slane %v1798, %v1801
    %v1804 = vsel %vm218, %v690, 0
    %1806 = vmatprep.subr.mxu0 0.0
    %1807 = vmatpush1.msra.mxu0 %v1790
    %1808 = vmatprep.subr.mxu0 0.0
    %1809 = vmatpush1.msra.mxu0 %v1791
    %1810 = vmatprep.subr.mxu0 0.0
    %1811 = vmatpush1.msra.mxu0 %v1792
    %1812 = vmatprep.subr.mxu0 0.0
    %1813 = vmatpush1.msra.mxu0 %v1793
    %1814 = vmatprep.subr.mxu0 0.0
    %1815 = vmatpush1.msra.mxu0 %v1794
    %1816 = vmatprep.subr.mxu0 0.0
    %1817 = vmatpush1.msra.mxu0 %v1795
    %1818 = vmatprep.subr.mxu0 0.0
    %1819 = vmatpush1.msra.mxu0 %v1796
    %1820 = vmatprep.subr.mxu0 0.0
    %1821 = vmatpush1.msra.mxu0 %v1797
    %1822 = vmatprep.subr.mxu0 0.0
    %1823 = vmatpush1.msra.mxu0 0.0
    %1824 = vmatprep.subr.mxu0 0.0
    %1825 = vmatpush1.msra.mxu0 0.0
    %1826 = vmatprep.subr.mxu0 0.0
    %1827 = vmatpush1.msra.mxu0 0.0
    %1828 = vmatprep.subr.mxu0 0.0
    %1829 = vmatpush1.msra.mxu0 0.0
    %1830 = vmatprep.subr.mxu0 0.0
    %1831 = vmatpush1.msra.mxu0 0.0
    %1832 = vmatprep.subr.mxu0 0.0
    %1833 = vmatpush1.msra.mxu0 0.0
    %1834 = vmatprep.subr.mxu0 0.0
    %1835 = vmatpush1.msra.mxu0 0.0
    %1836 = vmatprep.subr.mxu0 0.0
    %1837 = vmatpush1.msra.mxu0 0.0
    %1838 = vmatprep.subr.mxu0 0.0
    %1839 = vmatpush1.msra.mxu0 0.0
    %1840 = vmatprep.subr.mxu0 0.0
    %1841 = vmatpush1.msra.mxu0 0.0
    %1842 = vmatprep.subr.mxu0 0.0
    %1843 = vmatpush1.msra.mxu0 0.0
    %1844 = vmatprep.subr.mxu0 0.0
    %1845 = vmatpush1.msra.mxu0 0.0
    %1846 = vmatprep.subr.mxu0 0.0
    %1847 = vmatpush1.msra.mxu0 0.0
    %1848 = vmatprep.subr.mxu0 0.0
    %1849 = vmatpush1.msra.mxu0 0.0
    %1850 = vmatprep.subr.mxu0 0.0
    %1851 = vmatpush1.msra.mxu0 0.0
    %1852 = vmatprep.subr.mxu0 0.0
    %1853 = vmatpush1.msra.mxu0 0.0
    %1854 = vmatprep.subr.mxu0 0.0
    %1855 = vmatpush1.msra.mxu0 0.0
    %1856 = vmatprep.subr.mxu0 0.0
    %1857 = vmatpush1.msra.mxu0 0.0
    %1858 = vmatprep.subr.mxu0 0.0
    %1859 = vmatpush1.msra.mxu0 0.0
    %1860 = vmatprep.subr.mxu0 0.0
    %1861 = vmatpush1.msra.mxu0 0.0
    %1862 = vmatprep.subr.mxu0 0.0
    %1863 = vmatpush1.msra.mxu0 0.0
    %1864 = vmatprep.subr.mxu0 0.0
    %1865 = vmatpush1.msra.mxu0 0.0
    %1866 = vmatprep.subr.mxu0 0.0
    %1867 = vmatpush1.msra.mxu0 0.0
    %1868 = vmatprep.subr.mxu0 0.0
    %1869 = vmatpush1.msra.mxu0 0.0
    %1870 = vmatprep.mubr.f32.mxu0 0.0
    %1871 = vmatmul.mubr.f32.gmra.mrb[0].mxu0 %v1804
    %v1872 = vpop.f32.mrb[0].mxu0
    %v1873 = vadd.f32 %v1802, %v1872
    %v1874 = vpop.f32.mrb[0].mxu0
    %1875 = vdwg.mxu0
    %v1876 = vld [vmem:[%s6] sm:$0xff]
    %v1877 = vld [vmem:[%s6 + $0x8] sm:$0xff]
    %v1878 = vld [vmem:[%s6 + $0x10] sm:$0xff]
    %v1879 = vld [vmem:[%s6 + $0x18] sm:$0xff]
    %s1880 = scalar_lea.vmem %s6, 32
    %v1881 = vld [vmem:[%s1880] sm:$0xff]
    %v1882 = vld [vmem:[%s1880 + $0x8] sm:$0xff]
    %v1883 = vld [vmem:[%s1880 + $0x10] sm:$0xff]
    %v1884 = vld [vmem:[%s1880 + $0x18] sm:$0xff]
    %s1885 = scalar_lea.vmem %s6, 64
    %v1886 = vld [vmem:[%s1885] sm:$0xff]
    %v1887 = vld [vmem:[%s1885 + $0x8] sm:$0xff]
    %v1888 = vld [vmem:[%s1885 + $0x10] sm:$0xff]
    %v1889 = vld [vmem:[%s1885 + $0x18] sm:$0xff]
    %v1891 = vrot.slane %v1798, 1
    %v1894 = vsel %vm1573, 0.0, 0
    %1896 = vmatprep.subr.mxu0 0.0
    %1897 = vmatpush1.msra.mxu0 %v1876
    %1898 = vmatprep.subr.mxu0 0.0
    %1899 = vmatpush1.msra.mxu0 %v1877
    %1900 = vmatprep.subr.mxu0 0.0
    %1901 = vmatpush1.msra.mxu0 %v1878
    %1902 = vmatprep.subr.mxu0 0.0
    %1903 = vmatpush1.msra.mxu0 %v1879
    %1904 = vmatprep.subr.mxu0 0.0
    %1905 = vmatpush1.msra.mxu0 0.0
    %1906 = vmatprep.subr.mxu0 0.0
    %1907 = vmatpush1.msra.mxu0 0.0
    %1908 = vmatprep.subr.mxu0 0.0
    %1909 = vmatpush1.msra.mxu0 0.0
    %1910 = vmatprep.subr.mxu0 0.0
    %1911 = vmatpush1.msra.mxu0 0.0
    %1912 = vmatprep.subr.mxu0 0.0
    %1913 = vmatpush1.msra.mxu0 0.0
    %1914 = vmatprep.subr.mxu0 0.0
    %1915 = vmatpush1.msra.mxu0 0.0
    %1916 = vmatprep.subr.mxu0 0.0
    %1917 = vmatpush1.msra.mxu0 0.0
    %1918 = vmatprep.subr.mxu0 0.0
    %1919 = vmatpush1.msra.mxu0 0.0
    %1920 = vmatprep.subr.mxu0 0.0
    %1921 = vmatpush1.msra.mxu0 0.0
    %1922 = vmatprep.subr.mxu0 0.0
    %1923 = vmatpush1.msra.mxu0 0.0
    %1924 = vmatprep.subr.mxu0 0.0
    %1925 = vmatpush1.msra.mxu0 0.0
    %1926 = vmatprep.subr.mxu0 0.0
    %1927 = vmatpush1.msra.mxu0 0.0
    %1928 = vmatprep.subr.mxu0 0.0
    %1929 = vmatpush1.msra.mxu0 0.0
    %1930 = vmatprep.subr.mxu0 0.0
    %1931 = vmatpush1.msra.mxu0 0.0
    %1932 = vmatprep.subr.mxu0 0.0
    %1933 = vmatpush1.msra.mxu0 0.0
    %1934 = vmatprep.subr.mxu0 0.0
    %1935 = vmatpush1.msra.mxu0 0.0
    %1936 = vmatprep.subr.mxu0 0.0
    %1937 = vmatpush1.msra.mxu0 0.0
    %1938 = vmatprep.subr.mxu0 0.0
    %1939 = vmatpush1.msra.mxu0 0.0
    %1940 = vmatprep.subr.mxu0 0.0
    %1941 = vmatpush1.msra.mxu0 0.0
    %1942 = vmatprep.subr.mxu0 0.0
    %1943 = vmatpush1.msra.mxu0 0.0
    %1944 = vmatprep.subr.mxu0 0.0
    %1945 = vmatpush1.msra.mxu0 0.0
    %1946 = vmatprep.subr.mxu0 0.0
    %1947 = vmatpush1.msra.mxu0 0.0
    %1948 = vmatprep.subr.mxu0 0.0
    %1949 = vmatpush1.msra.mxu0 0.0
    %1950 = vmatprep.subr.mxu0 0.0
    %1951 = vmatpush1.msra.mxu0 0.0
    %1952 = vmatprep.subr.mxu0 0.0
    %1953 = vmatpush1.msra.mxu0 0.0
    %1954 = vmatprep.subr.mxu0 0.0
    %1955 = vmatpush1.msra.mxu0 0.0
    %1956 = vmatprep.subr.mxu0 0.0
    %1957 = vmatpush1.msra.mxu0 0.0
    %1958 = vmatprep.subr.mxu0 0.0
    %1959 = vmatpush1.msra.mxu0 0.0
    %1960 = vmatprep.mubr.f32.mxu0 0.0
    %1961 = vmatmul.mubr.f32.gmra.mrb[0].mxu0 %v1894
    %v1962 = vpop.f32.mrb[0].mxu0
    %v1963 = vadd.f32 %v1891, %v1962
    %v1964 = vpop.f32.mrb[0].mxu0
    %1965 = vdwg.mxu0
    %v1966 = vadd.f32 %v1873, %v1963
    %v1967 = vxor.u32 %v1966, 2147483648
    %v1968 = vmul.f32 %v1967, 1.442695
    %v1969 = vpow.pop %v1968
    %v1970 = vadd.f32 %v1969, 1.0
    %v1971 = vrcp.pop %v1970
    %v1972 = vmul.f32 1.0, %v1971
    %1974 = vrot.lane.b32.xlu0 %v1963, 64
    %v1975 = vpop.permute.xlu0 %1974
    %v1977 = vmul.f32 %v1972, %v1975
    %1979 = vrot.lane.b32.xlu0 %v1977, 64
    %v1980 = vpop.permute.xlu0 %1979
    %v1982 = vadd.f32 %v1873, %v1980
    %v1983 = vtanh.pop %v1982
    %v1984 = vsub.f32 1.0, %v1972
    %1986 = vrot.lane.b32.xlu0 %v1983, 96
    %v1987 = vpop.permute.xlu0 %1986
    %v1989 = vmul.f32 %v1984, %v1987
    %v1990 = vmul.f32 %v1972, 0.0
    %v1991 = vadd.f32 %v1989, %v1990
    %1993 = vrot.lane.b32.xlu0 %v1991, 96
    %v1994 = vpop.permute.xlu0 %1993
    %v1995 = vrot.slane %v1798, 2
    %v1997 = vsel %vm1573, %v1994, 0
    %1999 = vmatprep.subr.mxu0 0.0
    %2000 = vmatpush1.msra.mxu0 %v1881
    %2001 = vmatprep.subr.mxu0 0.0
    %2002 = vmatpush1.msra.mxu0 %v1882
    %2003 = vmatprep.subr.mxu0 0.0
    %2004 = vmatpush1.msra.mxu0 %v1883
    %2005 = vmatprep.subr.mxu0 0.0
    %2006 = vmatpush1.msra.mxu0 %v1884
    %2007 = vmatprep.subr.mxu0 0.0
    %2008 = vmatpush1.msra.mxu0 0.0
    %2009 = vmatprep.subr.mxu0 0.0
    %2010 = vmatpush1.msra.mxu0 0.0
    %2011 = vmatprep.subr.mxu0 0.0
    %2012 = vmatpush1.msra.mxu0 0.0
    %2013 = vmatprep.subr.mxu0 0.0
    %2014 = vmatpush1.msra.mxu0 0.0
    %2015 = vmatprep.subr.mxu0 0.0
    %2016 = vmatpush1.msra.mxu0 0.0
    %2017 = vmatprep.subr.mxu0 0.0
    %2018 = vmatpush1.msra.mxu0 0.0
    %2019 = vmatprep.subr.mxu0 0.0
    %2020 = vmatpush1.msra.mxu0 0.0
    %2021 = vmatprep.subr.mxu0 0.0
    %2022 = vmatpush1.msra.mxu0 0.0
    %2023 = vmatprep.subr.mxu0 0.0
    %2024 = vmatpush1.msra.mxu0 0.0
    %2025 = vmatprep.subr.mxu0 0.0
    %2026 = vmatpush1.msra.mxu0 0.0
    %2027 = vmatprep.subr.mxu0 0.0
    %2028 = vmatpush1.msra.mxu0 0.0
    %2029 = vmatprep.subr.mxu0 0.0
    %2030 = vmatpush1.msra.mxu0 0.0
    %2031 = vmatprep.subr.mxu0 0.0
    %2032 = vmatpush1.msra.mxu0 0.0
    %2033 = vmatprep.subr.mxu0 0.0
    %2034 = vmatpush1.msra.mxu0 0.0
    %2035 = vmatprep.subr.mxu0 0.0
    %2036 = vmatpush1.msra.mxu0 0.0
    %2037 = vmatprep.subr.mxu0 0.0
    %2038 = vmatpush1.msra.mxu0 0.0
    %2039 = vmatprep.subr.mxu0 0.0
    %2040 = vmatpush1.msra.mxu0 0.0
    %2041 = vmatprep.subr.mxu0 0.0
    %2042 = vmatpush1.msra.mxu0 0.0
    %2043 = vmatprep.subr.mxu0 0.0
    %2044 = vmatpush1.msra.mxu0 0.0
    %2045 = vmatprep.subr.mxu0 0.0
    %2046 = vmatpush1.msra.mxu0 0.0
    %2047 = vmatprep.subr.mxu0 0.0
    %2048 = vmatpush1.msra.mxu0 0.0
    %2049 = vmatprep.subr.mxu0 0.0
    %2050 = vmatpush1.msra.mxu0 0.0
    %2051 = vmatprep.subr.mxu0 0.0
    %2052 = vmatpush1.msra.mxu0 0.0
    %2053 = vmatprep.subr.mxu0 0.0
    %2054 = vmatpush1.msra.mxu0 0.0
    %2055 = vmatprep.subr.mxu0 0.0
    %2056 = vmatpush1.msra.mxu0 0.0
    %2057 = vmatprep.subr.mxu0 0.0
    %2058 = vmatpush1.msra.mxu0 0.0
    %2059 = vmatprep.subr.mxu0 0.0
    %2060 = vmatpush1.msra.mxu0 0.0
    %2061 = vmatprep.subr.mxu0 0.0
    %2062 = vmatpush1.msra.mxu0 0.0
    %2063 = vmatprep.mubr.f32.mxu0 0.0
    %2064 = vmatmul.mubr.f32.gmra.mrb[0].mxu0 %v1997
    %v2065 = vpop.f32.mrb[0].mxu0
    %v2066 = vadd.f32 %v1995, %v2065
    %v2067 = vpop.f32.mrb[0].mxu0
    %2068 = vdwg.mxu0
    %v2069 = vrot.slane %v1798, 3
    %2071 = vmatprep.subr.mxu0 0.0
    %2072 = vmatpush1.msra.mxu0 %v1886
    %2073 = vmatprep.subr.mxu0 0.0
    %2074 = vmatpush1.msra.mxu0 %v1887
    %2075 = vmatprep.subr.mxu0 0.0
    %2076 = vmatpush1.msra.mxu0 %v1888
    %2077 = vmatprep.subr.mxu0 0.0
    %2078 = vmatpush1.msra.mxu0 %v1889
    %2079 = vmatprep.subr.mxu0 0.0
    %2080 = vmatpush1.msra.mxu0 0.0
    %2081 = vmatprep.subr.mxu0 0.0
    %2082 = vmatpush1.msra.mxu0 0.0
    %2083 = vmatprep.subr.mxu0 0.0
    %2084 = vmatpush1.msra.mxu0 0.0
    %2085 = vmatprep.subr.mxu0 0.0
    %2086 = vmatpush1.msra.mxu0 0.0
    %2087 = vmatprep.subr.mxu0 0.0
    %2088 = vmatpush1.msra.mxu0 0.0
    %2089 = vmatprep.subr.mxu0 0.0
    %2090 = vmatpush1.msra.mxu0 0.0
    %2091 = vmatprep.subr.mxu0 0.0
    %2092 = vmatpush1.msra.mxu0 0.0
    %2093 = vmatprep.subr.mxu0 0.0
    %2094 = vmatpush1.msra.mxu0 0.0
    %2095 = vmatprep.subr.mxu0 0.0
    %2096 = vmatpush1.msra.mxu0 0.0
    %2097 = vmatprep.subr.mxu0 0.0
    %2098 = vmatpush1.msra.mxu0 0.0
    %2099 = vmatprep.subr.mxu0 0.0
    %2100 = vmatpush1.msra.mxu0 0.0
    %2101 = vmatprep.subr.mxu0 0.0
    %2102 = vmatpush1.msra.mxu0 0.0
    %2103 = vmatprep.subr.mxu0 0.0
    %2104 = vmatpush1.msra.mxu0 0.0
    %2105 = vmatprep.subr.mxu0 0.0
    %2106 = vmatpush1.msra.mxu0 0.0
    %2107 = vmatprep.subr.mxu0 0.0
    %2108 = vmatpush1.msra.mxu0 0.0
    %2109 = vmatprep.subr.mxu0 0.0
    %2110 = vmatpush1.msra.mxu0 0.0
    %2111 = vmatprep.subr.mxu0 0.0
    %2112 = vmatpush1.msra.mxu0 0.0
    %2113 = vmatprep.subr.mxu0 0.0
    %2114 = vmatpush1.msra.mxu0 0.0
    %2115 = vmatprep.subr.mxu0 0.0
    %2116 = vmatpush1.msra.mxu0 0.0
    %2117 = vmatprep.subr.mxu0 0.0
    %2118 = vmatpush1.msra.mxu0 0.0
    %2119 = vmatprep.subr.mxu0 0.0
    %2120 = vmatpush1.msra.mxu0 0.0
    %2121 = vmatprep.subr.mxu0 0.0
    %2122 = vmatpush1.msra.mxu0 0.0
    %2123 = vmatprep.subr.mxu0 0.0
    %2124 = vmatpush1.msra.mxu0 0.0
    %2125 = vmatprep.subr.mxu0 0.0
    %2126 = vmatpush1.msra.mxu0 0.0
    %2127 = vmatprep.subr.mxu0 0.0
    %2128 = vmatpush1.msra.mxu0 0.0
    %2129 = vmatprep.subr.mxu0 0.0
    %2130 = vmatpush1.msra.mxu0 0.0
    %2131 = vmatprep.subr.mxu0 0.0
    %2132 = vmatpush1.msra.mxu0 0.0
    %2133 = vmatprep.subr.mxu0 0.0
    %2134 = vmatpush1.msra.mxu0 0.0
    %2135 = vmatprep.mubr.f32.mxu0 0.0
    %2136 = vmatmul.mubr.f32.gmra.mrb[0].mxu0 %v1894
    %v2137 = vpop.f32.mrb[0].mxu0
    %v2138 = vadd.f32 %v2069, %v2137
    %v2139 = vpop.f32.mrb[0].mxu0
    %2140 = vdwg.mxu0
    %v2141 = vadd.f32 %v2066, %v2138
    %v2142 = vxor.u32 %v2141, 2147483648
    %v2143 = vmul.f32 %v2142, 1.442695
    %v2144 = vpow.pop %v2143
    %v2145 = vadd.f32 %v2144, 1.0
    %v2146 = vrcp.pop %v2145
    %v2147 = vmul.f32 1.0, %v2146
    %2149 = vrot.lane.b32.xlu0 %v2138, 64
    %v2150 = vpop.permute.xlu0 %2149
    %v2152 = vmul.f32 %v2147, %v2150
    %2154 = vrot.lane.b32.xlu0 %v2152, 64
    %v2155 = vpop.permute.xlu0 %2154
    %v2157 = vadd.f32 %v2066, %v2155
    %v2158 = vtanh.pop %v2157
    %v2159 = vsub.f32 1.0, %v2147
    %2161 = vrot.lane.b32.xlu0 %v2158, 96
    %v2162 = vpop.permute.xlu0 %2161
    %v2164 = vmul.f32 %v2159, %v2162
    %v2165 = vmul.f32 %v2147, 0.0
    %v2166 = vadd.f32 %v2164, %v2165
    %2167 = vmatprep.subr.mxu0 0.0
    %2168 = vmatpush1.msra.mxu0 %v1876
    %2169 = vmatprep.subr.mxu0 0.0
    %2170 = vmatpush1.msra.mxu0 %v1877
    %2171 = vmatprep.subr.mxu0 0.0
    %2172 = vmatpush1.msra.mxu0 %v1878
    %2173 = vmatprep.subr.mxu0 0.0
    %2174 = vmatpush1.msra.mxu0 %v1879
    %2175 = vmatprep.subr.mxu0 0.0
    %2176 = vmatpush1.msra.mxu0 0.0
    %2177 = vmatprep.subr.mxu0 0.0
    %2178 = vmatpush1.msra.mxu0 0.0
    %2179 = vmatprep.subr.mxu0 0.0
    %2180 = vmatpush1.msra.mxu0 0.0
    %2181 = vmatprep.subr.mxu0 0.0
    %2182 = vmatpush1.msra.mxu0 0.0
    %2183 = vmatprep.subr.mxu0 0.0
    %2184 = vmatpush1.msra.mxu0 0.0
    %2185 = vmatprep.subr.mxu0 0.0
    %2186 = vmatpush1.msra.mxu0 0.0
    %2187 = vmatprep.subr.mxu0 0.0
    %2188 = vmatpush1.msra.mxu0 0.0
    %2189 = vmatprep.subr.mxu0 0.0
    %2190 = vmatpush1.msra.mxu0 0.0
    %2191 = vmatprep.subr.mxu0 0.0
    %2192 = vmatpush1.msra.mxu0 0.0
    %2193 = vmatprep.subr.mxu0 0.0
    %2194 = vmatpush1.msra.mxu0 0.0
    %2195 = vmatprep.subr.mxu0 0.0
    %2196 = vmatpush1.msra.mxu0 0.0
    %2197 = vmatprep.subr.mxu0 0.0
    %2198 = vmatpush1.msra.mxu0 0.0
    %2199 = vmatprep.subr.mxu0 0.0
    %2200 = vmatpush1.msra.mxu0 0.0
    %2201 = vmatprep.subr.mxu0 0.0
    %2202 = vmatpush1.msra.mxu0 0.0
    %2203 = vmatprep.subr.mxu0 0.0
    %2204 = vmatpush1.msra.mxu0 0.0
    %2205 = vmatprep.subr.mxu0 0.0
    %2206 = vmatpush1.msra.mxu0 0.0
    %2207 = vmatprep.subr.mxu0 0.0
    %2208 = vmatpush1.msra.mxu0 0.0
    %2209 = vmatprep.subr.mxu0 0.0
    %2210 = vmatpush1.msra.mxu0 0.0
    %2211 = vmatprep.subr.mxu0 0.0
    %2212 = vmatpush1.msra.mxu0 0.0
    %2213 = vmatprep.subr.mxu0 0.0
    %2214 = vmatpush1.msra.mxu0 0.0
    %2215 = vmatprep.subr.mxu0 0.0
    %2216 = vmatpush1.msra.mxu0 0.0
    %2217 = vmatprep.subr.mxu0 0.0
    %2218 = vmatpush1.msra.mxu0 0.0
    %2219 = vmatprep.subr.mxu0 0.0
    %2220 = vmatpush1.msra.mxu0 0.0
    %2221 = vmatprep.subr.mxu0 0.0
    %2222 = vmatpush1.msra.mxu0 0.0
    %2223 = vmatprep.subr.mxu0 0.0
    %2224 = vmatpush1.msra.mxu0 0.0
    %2225 = vmatprep.subr.mxu0 0.0
    %2226 = vmatpush1.msra.mxu0 0.0
    %2227 = vmatprep.subr.mxu0 0.0
    %2228 = vmatpush1.msra.mxu0 0.0
    %2229 = vmatprep.subr.mxu0 0.0
    %2230 = vmatpush1.msra.mxu0 0.0
    %2231 = vmatprep.mubr.f32.mxu0 0.0
    %2232 = vmatmul.mubr.f32.gmra.mrb[0].mxu0 %v1997
    %v2233 = vpop.f32.mrb[0].mxu0
    %v2234 = vadd.f32 %v1891, %v2233
    %v2235 = vpop.f32.mrb[0].mxu0
    %2236 = vdwg.mxu0
    %v2238 = vrot.slane %v2234, 7
    %v2240 = vadd.f32 %v1873, %v2238
    %v2241 = vxor.u32 %v2240, 2147483648
    %v2242 = vmul.f32 %v2241, 1.442695
    %v2243 = vpow.pop %v2242
    %v2244 = vadd.f32 %v2243, 1.0
    %v2245 = vrcp.pop %v2244
    %v2246 = vmul.f32 1.0, %v2245
    %2247 = vrot.lane.b32.xlu0 %v2238, 64
    %v2248 = vpop.permute.xlu0 %2247
    %v2250 = vmul.f32 %v2246, %v2248
    %2252 = vrot.lane.b32.xlu0 %v2250, 64
    %v2253 = vpop.permute.xlu0 %2252
    %v2255 = vadd.f32 %v1873, %v2253
    %v2256 = vtanh.pop %v2255
    %v2257 = vsub.f32 1.0, %v2246
    %2259 = vrot.lane.b32.xlu0 %v2256, 96
    %v2260 = vpop.permute.xlu0 %2259
    %v2262 = vmul.f32 %v2257, %v2260
    %v2263 = vrot.slane %v1991, 7
    %v2265 = vmul.f32 %v2246, %v2263
    %v2266 = vadd.f32 %v2262, %v2265
    %v2268 = vrot.slane %v2266, 1
    %2269 = vrot.lane.b32.xlu0 %v2268, 96
    %v2270 = vpop.permute.xlu0 %2269
    %v2271 = vsel %vm1573, %v2270, 0
    %2273 = vmatprep.subr.mxu0 0.0
    %2274 = vmatpush1.msra.mxu0 %v1881
    %2275 = vmatprep.subr.mxu0 0.0
    %2276 = vmatpush1.msra.mxu0 %v1882
    %2277 = vmatprep.subr.mxu0 0.0
    %2278 = vmatpush1.msra.mxu0 %v1883
    %2279 = vmatprep.subr.mxu0 0.0
    %2280 = vmatpush1.msra.mxu0 %v1884
    %2281 = vmatprep.subr.mxu0 0.0
    %2282 = vmatpush1.msra.mxu0 0.0
    %2283 = vmatprep.subr.mxu0 0.0
    %2284 = vmatpush1.msra.mxu0 0.0
    %2285 = vmatprep.subr.mxu0 0.0
    %2286 = vmatpush1.msra.mxu0 0.0
    %2287 = vmatprep.subr.mxu0 0.0
    %2288 = vmatpush1.msra.mxu0 0.0
    %2289 = vmatprep.subr.mxu0 0.0
    %2290 = vmatpush1.msra.mxu0 0.0
    %2291 = vmatprep.subr.mxu0 0.0
    %2292 = vmatpush1.msra.mxu0 0.0
    %2293 = vmatprep.subr.mxu0 0.0
    %2294 = vmatpush1.msra.mxu0 0.0
    %2295 = vmatprep.subr.mxu0 0.0
    %2296 = vmatpush1.msra.mxu0 0.0
    %2297 = vmatprep.subr.mxu0 0.0
    %2298 = vmatpush1.msra.mxu0 0.0
    %2299 = vmatprep.subr.mxu0 0.0
    %2300 = vmatpush1.msra.mxu0 0.0
    %2301 = vmatprep.subr.mxu0 0.0
    %2302 = vmatpush1.msra.mxu0 0.0
    %2303 = vmatprep.subr.mxu0 0.0
    %2304 = vmatpush1.msra.mxu0 0.0
    %2305 = vmatprep.subr.mxu0 0.0
    %2306 = vmatpush1.msra.mxu0 0.0
    %2307 = vmatprep.subr.mxu0 0.0
    %2308 = vmatpush1.msra.mxu0 0.0
    %2309 = vmatprep.subr.mxu0 0.0
    %2310 = vmatpush1.msra.mxu0 0.0
    %2311 = vmatprep.subr.mxu0 0.0
    %2312 = vmatpush1.msra.mxu0 0.0
    %2313 = vmatprep.subr.mxu0 0.0
    %2314 = vmatpush1.msra.mxu0 0.0
    %2315 = vmatprep.subr.mxu0 0.0
    %2316 = vmatpush1.msra.mxu0 0.0
    %2317 = vmatprep.subr.mxu0 0.0
    %2318 = vmatpush1.msra.mxu0 0.0
    %2319 = vmatprep.subr.mxu0 0.0
    %2320 = vmatpush1.msra.mxu0 0.0
    %2321 = vmatprep.subr.mxu0 0.0
    %2322 = vmatpush1.msra.mxu0 0.0
    %2323 = vmatprep.subr.mxu0 0.0
    %2324 = vmatpush1.msra.mxu0 0.0
    %2325 = vmatprep.subr.mxu0 0.0
    %2326 = vmatpush1.msra.mxu0 0.0
    %2327 = vmatprep.subr.mxu0 0.0
    %2328 = vmatpush1.msra.mxu0 0.0
    %2329 = vmatprep.subr.mxu0 0.0
    %2330 = vmatpush1.msra.mxu0 0.0
    %2331 = vmatprep.subr.mxu0 0.0
    %2332 = vmatpush1.msra.mxu0 0.0
    %2333 = vmatprep.subr.mxu0 0.0
    %2334 = vmatpush1.msra.mxu0 0.0
    %2335 = vmatprep.subr.mxu0 0.0
    %2336 = vmatpush1.msra.mxu0 0.0
    %2337 = vmatprep.mubr.f32.mxu0 0.0
    %2338 = vmatmul.mubr.f32.gmra.mrb[0].mxu0 %v2271
    %v2339 = vpop.f32.mrb[0].mxu0
    %v2340 = vadd.f32 %v1995, %v2339
    %v2341 = vpop.f32.mrb[0].mxu0
    %2342 = vdwg.mxu0
    %2344 = vrot.lane.b32.xlu0 %v2166, 96
    %v2345 = vpop.permute.xlu0 %2344
    %v2346 = vsel %vm1573, %v2345, 0
    %2348 = vmatprep.subr.mxu0 0.0
    %2349 = vmatpush1.msra.mxu0 %v1886
    %2350 = vmatprep.subr.mxu0 0.0
    %2351 = vmatpush1.msra.mxu0 %v1887
    %2352 = vmatprep.subr.mxu0 0.0
    %2353 = vmatpush1.msra.mxu0 %v1888
    %2354 = vmatprep.subr.mxu0 0.0
    %2355 = vmatpush1.msra.mxu0 %v1889
    %2356 = vmatprep.subr.mxu0 0.0
    %2357 = vmatpush1.msra.mxu0 0.0
    %2358 = vmatprep.subr.mxu0 0.0
    %2359 = vmatpush1.msra.mxu0 0.0
    %2360 = vmatprep.subr.mxu0 0.0
    %2361 = vmatpush1.msra.mxu0 0.0
    %2362 = vmatprep.subr.mxu0 0.0
    %2363 = vmatpush1.msra.mxu0 0.0
    %2364 = vmatprep.subr.mxu0 0.0
    %2365 = vmatpush1.msra.mxu0 0.0
    %2366 = vmatprep.subr.mxu0 0.0
    %2367 = vmatpush1.msra.mxu0 0.0
    %2368 = vmatprep.subr.mxu0 0.0
    %2369 = vmatpush1.msra.mxu0 0.0
    %2370 = vmatprep.subr.mxu0 0.0
    %2371 = vmatpush1.msra.mxu0 0.0
    %2372 = vmatprep.subr.mxu0 0.0
    %2373 = vmatpush1.msra.mxu0 0.0
    %2374 = vmatprep.subr.mxu0 0.0
    %2375 = vmatpush1.msra.mxu0 0.0
    %2376 = vmatprep.subr.mxu0 0.0
    %2377 = vmatpush1.msra.mxu0 0.0
    %2378 = vmatprep.subr.mxu0 0.0
    %2379 = vmatpush1.msra.mxu0 0.0
    %2380 = vmatprep.subr.mxu0 0.0
    %2381 = vmatpush1.msra.mxu0 0.0
    %2382 = vmatprep.subr.mxu0 0.0
    %2383 = vmatpush1.msra.mxu0 0.0
    %2384 = vmatprep.subr.mxu0 0.0
    %2385 = vmatpush1.msra.mxu0 0.0
    %2386 = vmatprep.subr.mxu0 0.0
    %2387 = vmatpush1.msra.mxu0 0.0
    %2388 = vmatprep.subr.mxu0 0.0
    %2389 = vmatpush1.msra.mxu0 0.0
    %2390 = vmatprep.subr.mxu0 0.0
    %2391 = vmatpush1.msra.mxu0 0.0
    %2392 = vmatprep.subr.mxu0 0.0
    %2393 = vmatpush1.msra.mxu0 0.0
    %2394 = vmatprep.subr.mxu0 0.0
    %2395 = vmatpush1.msra.mxu0 0.0
    %2396 = vmatprep.subr.mxu0 0.0
    %2397 = vmatpush1.msra.mxu0 0.0
    %2398 = vmatprep.subr.mxu0 0.0
    %2399 = vmatpush1.msra.mxu0 0.0
    %2400 = vmatprep.subr.mxu0 0.0
    %2401 = vmatpush1.msra.mxu0 0.0
    %2402 = vmatprep.subr.mxu0 0.0
    %2403 = vmatpush1.msra.mxu0 0.0
    %2404 = vmatprep.subr.mxu0 0.0
    %2405 = vmatpush1.msra.mxu0 0.0
    %2406 = vmatprep.subr.mxu0 0.0
    %2407 = vmatpush1.msra.mxu0 0.0
    %2408 = vmatprep.subr.mxu0 0.0
    %2409 = vmatpush1.msra.mxu0 0.0
    %2410 = vmatprep.subr.mxu0 0.0
    %2411 = vmatpush1.msra.mxu0 0.0
    %2412 = vmatprep.mubr.f32.mxu0 0.0
    %2413 = vmatmul.mubr.f32.gmra.mrb[0].mxu0 %v2346
    %v2414 = vpop.f32.mrb[0].mxu0
    %v2415 = vadd.f32 %v2069, %v2414
    %v2416 = vpop.f32.mrb[0].mxu0
    %2417 = vdwg.mxu0
    %v2418 = vadd.f32 %v2340, %v2415
    %v2419 = vxor.u32 %v2418, 2147483648
    %v2420 = vmul.f32 %v2419, 1.442695
    %v2421 = vpow.pop %v2420
    %v2422 = vadd.f32 %v2421, 1.0
    %v2423 = vrcp.pop %v2422
    %v2424 = vmul.f32 1.0, %v2423
    %2426 = vrot.lane.b32.xlu0 %v2415, 64
    %v2427 = vpop.permute.xlu0 %2426
    %v2429 = vmul.f32 %v2424, %v2427
    %2431 = vrot.lane.b32.xlu0 %v2429, 64
    %v2432 = vpop.permute.xlu0 %2431
    %v2434 = vadd.f32 %v2340, %v2432
    %v2435 = vtanh.pop %v2434
    %v2436 = vsub.f32 1.0, %v2424
    %2438 = vrot.lane.b32.xlu0 %v2435, 96
    %v2439 = vpop.permute.xlu0 %2438
    %v2441 = vmul.f32 %v2436, %v2439
    %v2442 = vmul.f32 %v2424, %v2166
    %v2443 = vadd.f32 %v2441, %v2442
    %2444 = vmatprep.subr.mxu0 0.0
    %2445 = vmatpush1.msra.mxu0 %v1876
    %2446 = vmatprep.subr.mxu0 0.0
    %2447 = vmatpush1.msra.mxu0 %v1877
    %2448 = vmatprep.subr.mxu0 0.0
    %2449 = vmatpush1.msra.mxu0 %v1878
    %2450 = vmatprep.subr.mxu0 0.0
    %2451 = vmatpush1.msra.mxu0 %v1879
    %2452 = vmatprep.subr.mxu0 0.0
    %2453 = vmatpush1.msra.mxu0 0.0
    %2454 = vmatprep.subr.mxu0 0.0
    %2455 = vmatpush1.msra.mxu0 0.0
    %2456 = vmatprep.subr.mxu0 0.0
    %2457 = vmatpush1.msra.mxu0 0.0
    %2458 = vmatprep.subr.mxu0 0.0
    %2459 = vmatpush1.msra.mxu0 0.0
    %2460 = vmatprep.subr.mxu0 0.0
    %2461 = vmatpush1.msra.mxu0 0.0
    %2462 = vmatprep.subr.mxu0 0.0
    %2463 = vmatpush1.msra.mxu0 0.0
    %2464 = vmatprep.subr.mxu0 0.0
    %2465 = vmatpush1.msra.mxu0 0.0
    %2466 = vmatprep.subr.mxu0 0.0
    %2467 = vmatpush1.msra.mxu0 0.0
    %2468 = vmatprep.subr.mxu0 0.0
    %2469 = vmatpush1.msra.mxu0 0.0
    %2470 = vmatprep.subr.mxu0 0.0
    %2471 = vmatpush1.msra.mxu0 0.0
    %2472 = vmatprep.subr.mxu0 0.0
    %2473 = vmatpush1.msra.mxu0 0.0
    %2474 = vmatprep.subr.mxu0 0.0
    %2475 = vmatpush1.msra.mxu0 0.0
    %2476 = vmatprep.subr.mxu0 0.0
    %2477 = vmatpush1.msra.mxu0 0.0
    %2478 = vmatprep.subr.mxu0 0.0
    %2479 = vmatpush1.msra.mxu0 0.0
    %2480 = vmatprep.subr.mxu0 0.0
    %2481 = vmatpush1.msra.mxu0 0.0
    %2482 = vmatprep.subr.mxu0 0.0
    %2483 = vmatpush1.msra.mxu0 0.0
    %2484 = vmatprep.subr.mxu0 0.0
    %2485 = vmatpush1.msra.mxu0 0.0
    %2486 = vmatprep.subr.mxu0 0.0
    %2487 = vmatpush1.msra.mxu0 0.0
    %2488 = vmatprep.subr.mxu0 0.0
    %2489 = vmatpush1.msra.mxu0 0.0
    %2490 = vmatprep.subr.mxu0 0.0
    %2491 = vmatpush1.msra.mxu0 0.0
    %2492 = vmatprep.subr.mxu0 0.0
    %2493 = vmatpush1.msra.mxu0 0.0
    %2494 = vmatprep.subr.mxu0 0.0
    %2495 = vmatpush1.msra.mxu0 0.0
    %2496 = vmatprep.subr.mxu0 0.0
    %2497 = vmatpush1.msra.mxu0 0.0
    %2498 = vmatprep.subr.mxu0 0.0
    %2499 = vmatpush1.msra.mxu0 0.0
    %2500 = vmatprep.subr.mxu0 0.0
    %2501 = vmatpush1.msra.mxu0 0.0
    %2502 = vmatprep.subr.mxu0 0.0
    %2503 = vmatpush1.msra.mxu0 0.0
    %2504 = vmatprep.subr.mxu0 0.0
    %2505 = vmatpush1.msra.mxu0 0.0
    %2506 = vmatprep.subr.mxu0 0.0
    %2507 = vmatpush1.msra.mxu0 0.0
    %2508 = vmatprep.mubr.f32.mxu0 0.0
    %2509 = vmatmul.mubr.f32.gmra.mrb[0].mxu0 %v2271
    %v2510 = vpop.f32.mrb[0].mxu0
    %v2511 = vadd.f32 %v1891, %v2510
    %v2512 = vpop.f32.mrb[0].mxu0
    %2513 = vdwg.mxu0
    %v2515 = vrot.slane %v2511, 6
    %v2517 = vadd.f32 %v1873, %v2515
    %v2518 = vxor.u32 %v2517, 2147483648
    %v2519 = vmul.f32 %v2518, 1.442695
    %v2520 = vpow.pop %v2519
    %v2521 = vadd.f32 %v2520, 1.0
    %v2522 = vrcp.pop %v2521
    %v2523 = vmul.f32 1.0, %v2522
    %2524 = vrot.lane.b32.xlu0 %v2515, 64
    %v2525 = vpop.permute.xlu0 %2524
    %v2527 = vmul.f32 %v2523, %v2525
    %2529 = vrot.lane.b32.xlu0 %v2527, 64
    %v2530 = vpop.permute.xlu0 %2529
    %v2532 = vadd.f32 %v1873, %v2530
    %v2533 = vtanh.pop %v2532
    %v2534 = vsub.f32 1.0, %v2523
    %2536 = vrot.lane.b32.xlu0 %v2533, 96
    %v2537 = vpop.permute.xlu0 %2536
    %v2539 = vmul.f32 %v2534, %v2537
    %v2540 = vrot.slane %v2266, 7
    %v2542 = vmul.f32 %v2523, %v2540
    %v2543 = vadd.f32 %v2539, %v2542
    %v2545 = vrot.slane %v2543, 2
    %2546 = vrot.lane.b32.xlu0 %v2545, 96
    %v2547 = vpop.permute.xlu0 %2546
    %v2548 = vsel %vm1573, %v2547, 0
    %2550 = vmatprep.subr.mxu0 0.0
    %2551 = vmatpush1.msra.mxu0 %v1881
    %2552 = vmatprep.subr.mxu0 0.0
    %2553 = vmatpush1.msra.mxu0 %v1882
    %2554 = vmatprep.subr.mxu0 0.0
    %2555 = vmatpush1.msra.mxu0 %v1883
    %2556 = vmatprep.subr.mxu0 0.0
    %2557 = vmatpush1.msra.mxu0 %v1884
    %2558 = vmatprep.subr.mxu0 0.0
    %2559 = vmatpush1.msra.mxu0 0.0
    %2560 = vmatprep.subr.mxu0 0.0
    %2561 = vmatpush1.msra.mxu0 0.0
    %2562 = vmatprep.subr.mxu0 0.0
    %2563 = vmatpush1.msra.mxu0 0.0
    %2564 = vmatprep.subr.mxu0 0.0
    %2565 = vmatpush1.msra.mxu0 0.0
    %2566 = vmatprep.subr.mxu0 0.0
    %2567 = vmatpush1.msra.mxu0 0.0
    %2568 = vmatprep.subr.mxu0 0.0
    %2569 = vmatpush1.msra.mxu0 0.0
    %2570 = vmatprep.subr.mxu0 0.0
    %2571 = vmatpush1.msra.mxu0 0.0
    %2572 = vmatprep.subr.mxu0 0.0
    %2573 = vmatpush1.msra.mxu0 0.0
    %2574 = vmatprep.subr.mxu0 0.0
    %2575 = vmatpush1.msra.mxu0 0.0
    %2576 = vmatprep.subr.mxu0 0.0
    %2577 = vmatpush1.msra.mxu0 0.0
    %2578 = vmatprep.subr.mxu0 0.0
    %2579 = vmatpush1.msra.mxu0 0.0
    %2580 = vmatprep.subr.mxu0 0.0
    %2581 = vmatpush1.msra.mxu0 0.0
    %2582 = vmatprep.subr.mxu0 0.0
    %2583 = vmatpush1.msra.mxu0 0.0
    %2584 = vmatprep.subr.mxu0 0.0
    %2585 = vmatpush1.msra.mxu0 0.0
    %2586 = vmatprep.subr.mxu0 0.0
    %2587 = vmatpush1.msra.mxu0 0.0
    %2588 = vmatprep.subr.mxu0 0.0
    %2589 = vmatpush1.msra.mxu0 0.0
    %2590 = vmatprep.subr.mxu0 0.0
    %2591 = vmatpush1.msra.mxu0 0.0
    %2592 = vmatprep.subr.mxu0 0.0
    %2593 = vmatpush1.msra.mxu0 0.0
    %2594 = vmatprep.subr.mxu0 0.0
    %2595 = vmatpush1.msra.mxu0 0.0
    %2596 = vmatprep.subr.mxu0 0.0
    %2597 = vmatpush1.msra.mxu0 0.0
    %2598 = vmatprep.subr.mxu0 0.0
    %2599 = vmatpush1.msra.mxu0 0.0
    %2600 = vmatprep.subr.mxu0 0.0
    %2601 = vmatpush1.msra.mxu0 0.0
    %2602 = vmatprep.subr.mxu0 0.0
    %2603 = vmatpush1.msra.mxu0 0.0
    %2604 = vmatprep.subr.mxu0 0.0
    %2605 = vmatpush1.msra.mxu0 0.0
    %2606 = vmatprep.subr.mxu0 0.0
    %2607 = vmatpush1.msra.mxu0 0.0
    %2608 = vmatprep.subr.mxu0 0.0
    %2609 = vmatpush1.msra.mxu0 0.0
    %2610 = vmatprep.subr.mxu0 0.0
    %2611 = vmatpush1.msra.mxu0 0.0
    %2612 = vmatprep.subr.mxu0 0.0
    %2613 = vmatpush1.msra.mxu0 0.0
    %2614 = vmatprep.mubr.f32.mxu0 0.0
    %2615 = vmatmul.mubr.f32.gmra.mrb[0].mxu0 %v2548
    %v2616 = vpop.f32.mrb[0].mxu0
    %v2617 = vadd.f32 %v1995, %v2616
    %v2618 = vpop.f32.mrb[0].mxu0
    %2619 = vdwg.mxu0
    %2621 = vrot.lane.b32.xlu0 %v2443, 96
    %v2622 = vpop.permute.xlu0 %2621
    %v2623 = vsel %vm1573, %v2622, 0
    %2625 = vmatprep.subr.mxu0 0.0
    %2626 = vmatpush1.msra.mxu0 %v1886
    %2627 = vmatprep.subr.mxu0 0.0
    %2628 = vmatpush1.msra.mxu0 %v1887
    %2629 = vmatprep.subr.mxu0 0.0
    %2630 = vmatpush1.msra.mxu0 %v1888
    %2631 = vmatprep.subr.mxu0 0.0
    %2632 = vmatpush1.msra.mxu0 %v1889
    %2633 = vmatprep.subr.mxu0 0.0
    %2634 = vmatpush1.msra.mxu0 0.0
    %2635 = vmatprep.subr.mxu0 0.0
    %2636 = vmatpush1.msra.mxu0 0.0
    %2637 = vmatprep.subr.mxu0 0.0
    %2638 = vmatpush1.msra.mxu0 0.0
    %2639 = vmatprep.subr.mxu0 0.0
    %2640 = vmatpush1.msra.mxu0 0.0
    %2641 = vmatprep.subr.mxu0 0.0
    %2642 = vmatpush1.msra.mxu0 0.0
    %2643 = vmatprep.subr.mxu0 0.0
    %2644 = vmatpush1.msra.mxu0 0.0
    %2645 = vmatprep.subr.mxu0 0.0
    %2646 = vmatpush1.msra.mxu0 0.0
    %2647 = vmatprep.subr.mxu0 0.0
    %2648 = vmatpush1.msra.mxu0 0.0
    %2649 = vmatprep.subr.mxu0 0.0
    %2650 = vmatpush1.msra.mxu0 0.0
    %2651 = vmatprep.subr.mxu0 0.0
    %2652 = vmatpush1.msra.mxu0 0.0
    %2653 = vmatprep.subr.mxu0 0.0
    %2654 = vmatpush1.msra.mxu0 0.0
    %2655 = vmatprep.subr.mxu0 0.0
    %2656 = vmatpush1.msra.mxu0 0.0
    %2657 = vmatprep.subr.mxu0 0.0
    %2658 = vmatpush1.msra.mxu0 0.0
    %2659 = vmatprep.subr.mxu0 0.0
    %2660 = vmatpush1.msra.mxu0 0.0
    %2661 = vmatprep.subr.mxu0 0.0
    %2662 = vmatpush1.msra.mxu0 0.0
    %2663 = vmatprep.subr.mxu0 0.0
    %2664 = vmatpush1.msra.mxu0 0.0
    %2665 = vmatprep.subr.mxu0 0.0
    %2666 = vmatpush1.msra.mxu0 0.0
    %2667 = vmatprep.subr.mxu0 0.0
    %2668 = vmatpush1.msra.mxu0 0.0
    %2669 = vmatprep.subr.mxu0 0.0
    %2670 = vmatpush1.msra.mxu0 0.0
    %2671 = vmatprep.subr.mxu0 0.0
    %2672 = vmatpush1.msra.mxu0 0.0
    %2673 = vmatprep.subr.mxu0 0.0
    %2674 = vmatpush1.msra.mxu0 0.0
    %2675 = vmatprep.subr.mxu0 0.0
    %2676 = vmatpush1.msra.mxu0 0.0
    %2677 = vmatprep.subr.mxu0 0.0
    %2678 = vmatpush1.msra.mxu0 0.0
    %2679 = vmatprep.subr.mxu0 0.0
    %2680 = vmatpush1.msra.mxu0 0.0
    %2681 = vmatprep.subr.mxu0 0.0
    %2682 = vmatpush1.msra.mxu0 0.0
    %2683 = vmatprep.subr.mxu0 0.0
    %2684 = vmatpush1.msra.mxu0 0.0
    %2685 = vmatprep.subr.mxu0 0.0
    %2686 = vmatpush1.msra.mxu0 0.0
    %2687 = vmatprep.subr.mxu0 0.0
    %2688 = vmatpush1.msra.mxu0 0.0
    %2689 = vmatprep.mubr.f32.mxu0 0.0
    %2690 = vmatmul.mubr.f32.gmra.mrb[0].mxu0 %v2623
    %v2691 = vpop.f32.mrb[0].mxu0
    %v2692 = vadd.f32 %v2069, %v2691
    %v2693 = vpop.f32.mrb[0].mxu0
    %2694 = vdwg.mxu0
    %v2695 = vadd.f32 %v2617, %v2692
    %v2696 = vxor.u32 %v2695, 2147483648
    %v2697 = vmul.f32 %v2696, 1.442695
    %v2698 = vpow.pop %v2697
    %v2699 = vadd.f32 %v2698, 1.0
    %v2700 = vrcp.pop %v2699
    %v2701 = vmul.f32 1.0, %v2700
    %2703 = vrot.lane.b32.xlu0 %v2692, 64
    %v2704 = vpop.permute.xlu0 %2703
    %v2706 = vmul.f32 %v2701, %v2704
    %2708 = vrot.lane.b32.xlu0 %v2706, 64
    %v2709 = vpop.permute.xlu0 %2708
    %v2711 = vadd.f32 %v2617, %v2709
    %v2712 = vtanh.pop %v2711
    %v2713 = vsub.f32 1.0, %v2701
    %2715 = vrot.lane.b32.xlu0 %v2712, 96
    %v2716 = vpop.permute.xlu0 %2715
    %v2718 = vmul.f32 %v2713, %v2716
    %v2719 = vmul.f32 %v2701, %v2443
    %v2720 = vadd.f32 %v2718, %v2719
    %2721 = vmatprep.subr.mxu0 0.0
    %2722 = vmatpush1.msra.mxu0 %v1876
    %2723 = vmatprep.subr.mxu0 0.0
    %2724 = vmatpush1.msra.mxu0 %v1877
    %2725 = vmatprep.subr.mxu0 0.0
    %2726 = vmatpush1.msra.mxu0 %v1878
    %2727 = vmatprep.subr.mxu0 0.0
    %2728 = vmatpush1.msra.mxu0 %v1879
    %2729 = vmatprep.subr.mxu0 0.0
    %2730 = vmatpush1.msra.mxu0 0.0
    %2731 = vmatprep.subr.mxu0 0.0
    %2732 = vmatpush1.msra.mxu0 0.0
    %2733 = vmatprep.subr.mxu0 0.0
    %2734 = vmatpush1.msra.mxu0 0.0
    %2735 = vmatprep.subr.mxu0 0.0
    %2736 = vmatpush1.msra.mxu0 0.0
    %2737 = vmatprep.subr.mxu0 0.0
    %2738 = vmatpush1.msra.mxu0 0.0
    %2739 = vmatprep.subr.mxu0 0.0
    %2740 = vmatpush1.msra.mxu0 0.0
    %2741 = vmatprep.subr.mxu0 0.0
    %2742 = vmatpush1.msra.mxu0 0.0
    %2743 = vmatprep.subr.mxu0 0.0
    %2744 = vmatpush1.msra.mxu0 0.0
    %2745 = vmatprep.subr.mxu0 0.0
    %2746 = vmatpush1.msra.mxu0 0.0
    %2747 = vmatprep.subr.mxu0 0.0
    %2748 = vmatpush1.msra.mxu0 0.0
    %2749 = vmatprep.subr.mxu0 0.0
    %2750 = vmatpush1.msra.mxu0 0.0
    %2751 = vmatprep.subr.mxu0 0.0
    %2752 = vmatpush1.msra.mxu0 0.0
    %2753 = vmatprep.subr.mxu0 0.0
    %2754 = vmatpush1.msra.mxu0 0.0
    %2755 = vmatprep.subr.mxu0 0.0
    %2756 = vmatpush1.msra.mxu0 0.0
    %2757 = vmatprep.subr.mxu0 0.0
    %2758 = vmatpush1.msra.mxu0 0.0
    %2759 = vmatprep.subr.mxu0 0.0
    %2760 = vmatpush1.msra.mxu0 0.0
    %2761 = vmatprep.subr.mxu0 0.0
    %2762 = vmatpush1.msra.mxu0 0.0
    %2763 = vmatprep.subr.mxu0 0.0
    %2764 = vmatpush1.msra.mxu0 0.0
    %2765 = vmatprep.subr.mxu0 0.0
    %2766 = vmatpush1.msra.mxu0 0.0
    %2767 = vmatprep.subr.mxu0 0.0
    %2768 = vmatpush1.msra.mxu0 0.0
    %2769 = vmatprep.subr.mxu0 0.0
    %2770 = vmatpush1.msra.mxu0 0.0
    %2771 = vmatprep.subr.mxu0 0.0
    %2772 = vmatpush1.msra.mxu0 0.0
    %2773 = vmatprep.subr.mxu0 0.0
    %2774 = vmatpush1.msra.mxu0 0.0
    %2775 = vmatprep.subr.mxu0 0.0
    %2776 = vmatpush1.msra.mxu0 0.0
    %2777 = vmatprep.subr.mxu0 0.0
    %2778 = vmatpush1.msra.mxu0 0.0
    %2779 = vmatprep.subr.mxu0 0.0
    %2780 = vmatpush1.msra.mxu0 0.0
    %2781 = vmatprep.subr.mxu0 0.0
    %2782 = vmatpush1.msra.mxu0 0.0
    %2783 = vmatprep.subr.mxu0 0.0
    %2784 = vmatpush1.msra.mxu0 0.0
    %2785 = vmatprep.mubr.f32.mxu0 0.0
    %2786 = vmatmul.mubr.f32.gmra.mrb[0].mxu0 %v2548
    %v2787 = vpop.f32.mrb[0].mxu0
    %v2788 = vadd.f32 %v1891, %v2787
    %v2789 = vpop.f32.mrb[0].mxu0
    %2790 = vdwg.mxu0
    %v2792 = vrot.slane %v2788, 5
    %v2794 = vadd.f32 %v1873, %v2792
    %v2795 = vxor.u32 %v2794, 2147483648
    %v2796 = vmul.f32 %v2795, 1.442695
    %v2797 = vpow.pop %v2796
    %v2798 = vadd.f32 %v2797, 1.0
    %v2799 = vrcp.pop %v2798
    %v2800 = vmul.f32 1.0, %v2799
    %2801 = vrot.lane.b32.xlu0 %v2792, 64
    %v2802 = vpop.permute.xlu0 %2801
    %v2804 = vmul.f32 %v2800, %v2802
    %2806 = vrot.lane.b32.xlu0 %v2804, 64
    %v2807 = vpop.permute.xlu0 %2806
    %v2809 = vadd.f32 %v1873, %v2807
    %v2810 = vtanh.pop %v2809
    %v2811 = vsub.f32 1.0, %v2800
    %2813 = vrot.lane.b32.xlu0 %v2810, 96
    %v2814 = vpop.permute.xlu0 %2813
    %v2816 = vmul.f32 %v2811, %v2814
    %v2817 = vrot.slane %v2543, 7
    %v2819 = vmul.f32 %v2800, %v2817
    %v2820 = vadd.f32 %v2816, %v2819
    %v2822 = vrot.slane %v2820, 3
    %2823 = vrot.lane.b32.xlu0 %v2822, 96
    %v2824 = vpop.permute.xlu0 %2823
    %v2825 = vsel %vm1573, %v2824, 0
    %2827 = vmatprep.subr.mxu0 0.0
    %2828 = vmatpush1.msra.mxu0 %v1881
    %2829 = vmatprep.subr.mxu0 0.0
    %2830 = vmatpush1.msra.mxu0 %v1882
    %2831 = vmatprep.subr.mxu0 0.0
    %2832 = vmatpush1.msra.mxu0 %v1883
    %2833 = vmatprep.subr.mxu0 0.0
    %2834 = vmatpush1.msra.mxu0 %v1884
    %2835 = vmatprep.subr.mxu0 0.0
    %2836 = vmatpush1.msra.mxu0 0.0
    %2837 = vmatprep.subr.mxu0 0.0
    %2838 = vmatpush1.msra.mxu0 0.0
    %2839 = vmatprep.subr.mxu0 0.0
    %2840 = vmatpush1.msra.mxu0 0.0
    %2841 = vmatprep.subr.mxu0 0.0
    %2842 = vmatpush1.msra.mxu0 0.0
    %2843 = vmatprep.subr.mxu0 0.0
    %2844 = vmatpush1.msra.mxu0 0.0
    %2845 = vmatprep.subr.mxu0 0.0
    %2846 = vmatpush1.msra.mxu0 0.0
    %2847 = vmatprep.subr.mxu0 0.0
    %2848 = vmatpush1.msra.mxu0 0.0
    %2849 = vmatprep.subr.mxu0 0.0
    %2850 = vmatpush1.msra.mxu0 0.0
    %2851 = vmatprep.subr.mxu0 0.0
    %2852 = vmatpush1.msra.mxu0 0.0
    %2853 = vmatprep.subr.mxu0 0.0
    %2854 = vmatpush1.msra.mxu0 0.0
    %2855 = vmatprep.subr.mxu0 0.0
    %2856 = vmatpush1.msra.mxu0 0.0
    %2857 = vmatprep.subr.mxu0 0.0
    %2858 = vmatpush1.msra.mxu0 0.0
    %2859 = vmatprep.subr.mxu0 0.0
    %2860 = vmatpush1.msra.mxu0 0.0
    %2861 = vmatprep.subr.mxu0 0.0
    %2862 = vmatpush1.msra.mxu0 0.0
    %2863 = vmatprep.subr.mxu0 0.0
    %2864 = vmatpush1.msra.mxu0 0.0
    %2865 = vmatprep.subr.mxu0 0.0
    %2866 = vmatpush1.msra.mxu0 0.0
    %2867 = vmatprep.subr.mxu0 0.0
    %2868 = vmatpush1.msra.mxu0 0.0
    %2869 = vmatprep.subr.mxu0 0.0
    %2870 = vmatpush1.msra.mxu0 0.0
    %2871 = vmatprep.subr.mxu0 0.0
    %2872 = vmatpush1.msra.mxu0 0.0
    %2873 = vmatprep.subr.mxu0 0.0
    %2874 = vmatpush1.msra.mxu0 0.0
    %2875 = vmatprep.subr.mxu0 0.0
    %2876 = vmatpush1.msra.mxu0 0.0
    %2877 = vmatprep.subr.mxu0 0.0
    %2878 = vmatpush1.msra.mxu0 0.0
    %2879 = vmatprep.subr.mxu0 0.0
    %2880 = vmatpush1.msra.mxu0 0.0
    %2881 = vmatprep.subr.mxu0 0.0
    %2882 = vmatpush1.msra.mxu0 0.0
    %2883 = vmatprep.subr.mxu0 0.0
    %2884 = vmatpush1.msra.mxu0 0.0
    %2885 = vmatprep.subr.mxu0 0.0
    %2886 = vmatpush1.msra.mxu0 0.0
    %2887 = vmatprep.subr.mxu0 0.0
    %2888 = vmatpush1.msra.mxu0 0.0
    %2889 = vmatprep.subr.mxu0 0.0
    %2890 = vmatpush1.msra.mxu0 0.0
    %2891 = vmatprep.mubr.f32.mxu0 0.0
    %2892 = vmatmul.mubr.f32.gmra.mrb[0].mxu0 %v2825
    %v2893 = vpop.f32.mrb[0].mxu0
    %v2894 = vadd.f32 %v1995, %v2893
    %v2895 = vpop.f32.mrb[0].mxu0
    %2896 = vdwg.mxu0
    %2898 = vrot.lane.b32.xlu0 %v2720, 96
    %v2899 = vpop.permute.xlu0 %2898
    %v2900 = vsel %vm1573, %v2899, 0
    %2902 = vmatprep.subr.mxu0 0.0
    %2903 = vmatpush1.msra.mxu0 %v1886
    %2904 = vmatprep.subr.mxu0 0.0
    %2905 = vmatpush1.msra.mxu0 %v1887
    %2906 = vmatprep.subr.mxu0 0.0
    %2907 = vmatpush1.msra.mxu0 %v1888
    %2908 = vmatprep.subr.mxu0 0.0
    %2909 = vmatpush1.msra.mxu0 %v1889
    %2910 = vmatprep.subr.mxu0 0.0
    %2911 = vmatpush1.msra.mxu0 0.0
    %2912 = vmatprep.subr.mxu0 0.0
    %2913 = vmatpush1.msra.mxu0 0.0
    %2914 = vmatprep.subr.mxu0 0.0
    %2915 = vmatpush1.msra.mxu0 0.0
    %2916 = vmatprep.subr.mxu0 0.0
    %2917 = vmatpush1.msra.mxu0 0.0
    %2918 = vmatprep.subr.mxu0 0.0
    %2919 = vmatpush1.msra.mxu0 0.0
    %2920 = vmatprep.subr.mxu0 0.0
    %2921 = vmatpush1.msra.mxu0 0.0
    %2922 = vmatprep.subr.mxu0 0.0
    %2923 = vmatpush1.msra.mxu0 0.0
    %2924 = vmatprep.subr.mxu0 0.0
    %2925 = vmatpush1.msra.mxu0 0.0
    %2926 = vmatprep.subr.mxu0 0.0
    %2927 = vmatpush1.msra.mxu0 0.0
    %2928 = vmatprep.subr.mxu0 0.0
    %2929 = vmatpush1.msra.mxu0 0.0
    %2930 = vmatprep.subr.mxu0 0.0
    %2931 = vmatpush1.msra.mxu0 0.0
    %2932 = vmatprep.subr.mxu0 0.0
    %2933 = vmatpush1.msra.mxu0 0.0
    %2934 = vmatprep.subr.mxu0 0.0
    %2935 = vmatpush1.msra.mxu0 0.0
    %2936 = vmatprep.subr.mxu0 0.0
    %2937 = vmatpush1.msra.mxu0 0.0
    %2938 = vmatprep.subr.mxu0 0.0
    %2939 = vmatpush1.msra.mxu0 0.0
    %2940 = vmatprep.subr.mxu0 0.0
    %2941 = vmatpush1.msra.mxu0 0.0
    %2942 = vmatprep.subr.mxu0 0.0
    %2943 = vmatpush1.msra.mxu0 0.0
    %2944 = vmatprep.subr.mxu0 0.0
    %2945 = vmatpush1.msra.mxu0 0.0
    %2946 = vmatprep.subr.mxu0 0.0
    %2947 = vmatpush1.msra.mxu0 0.0
    %2948 = vmatprep.subr.mxu0 0.0
    %2949 = vmatpush1.msra.mxu0 0.0
    %2950 = vmatprep.subr.mxu0 0.0
    %2951 = vmatpush1.msra.mxu0 0.0
    %2952 = vmatprep.subr.mxu0 0.0
    %2953 = vmatpush1.msra.mxu0 0.0
    %2954 = vmatprep.subr.mxu0 0.0
    %2955 = vmatpush1.msra.mxu0 0.0
    %2956 = vmatprep.subr.mxu0 0.0
    %2957 = vmatpush1.msra.mxu0 0.0
    %2958 = vmatprep.subr.mxu0 0.0
    %2959 = vmatpush1.msra.mxu0 0.0
    %2960 = vmatprep.subr.mxu0 0.0
    %2961 = vmatpush1.msra.mxu0 0.0
    %2962 = vmatprep.subr.mxu0 0.0
    %2963 = vmatpush1.msra.mxu0 0.0
    %2964 = vmatprep.subr.mxu0 0.0
    %2965 = vmatpush1.msra.mxu0 0.0
    %2966 = vmatprep.mubr.f32.mxu0 0.0
    %2967 = vmatmul.mubr.f32.gmra.mrb[0].mxu0 %v2900
    %v2968 = vpop.f32.mrb[0].mxu0
    %v2969 = vadd.f32 %v2069, %v2968
    %v2970 = vpop.f32.mrb[0].mxu0
    %2971 = vdwg.mxu0
    %v2972 = vadd.f32 %v2894, %v2969
    %v2973 = vxor.u32 %v2972, 2147483648
    %v2974 = vmul.f32 %v2973, 1.442695
    %v2975 = vpow.pop %v2974
    %v2976 = vadd.f32 %v2975, 1.0
    %v2977 = vrcp.pop %v2976
    %v2978 = vmul.f32 1.0, %v2977
    %2980 = vrot.lane.b32.xlu0 %v2969, 64
    %v2981 = vpop.permute.xlu0 %2980
    %v2983 = vmul.f32 %v2978, %v2981
    %2985 = vrot.lane.b32.xlu0 %v2983, 64
    %v2986 = vpop.permute.xlu0 %2985
    %v2988 = vadd.f32 %v2894, %v2986
    %v2989 = vtanh.pop %v2988
    %v2990 = vsub.f32 1.0, %v2978
    %2992 = vrot.lane.b32.xlu0 %v2989, 96
    %v2993 = vpop.permute.xlu0 %2992
    %v2995 = vmul.f32 %v2990, %v2993
    %v2996 = vmul.f32 %v2978, %v2720
    %v2997 = vadd.f32 %v2995, %v2996
    %2998 = vmatprep.subr.mxu0 0.0
    %2999 = vmatpush1.msra.mxu0 %v1876
    %3000 = vmatprep.subr.mxu0 0.0
    %3001 = vmatpush1.msra.mxu0 %v1877
    %3002 = vmatprep.subr.mxu0 0.0
    %3003 = vmatpush1.msra.mxu0 %v1878
    %3004 = vmatprep.subr.mxu0 0.0
    %3005 = vmatpush1.msra.mxu0 %v1879
    %3006 = vmatprep.subr.mxu0 0.0
    %3007 = vmatpush1.msra.mxu0 0.0
    %3008 = vmatprep.subr.mxu0 0.0
    %3009 = vmatpush1.msra.mxu0 0.0
    %3010 = vmatprep.subr.mxu0 0.0
    %3011 = vmatpush1.msra.mxu0 0.0
    %3012 = vmatprep.subr.mxu0 0.0
    %3013 = vmatpush1.msra.mxu0 0.0
    %3014 = vmatprep.subr.mxu0 0.0
    %3015 = vmatpush1.msra.mxu0 0.0
    %3016 = vmatprep.subr.mxu0 0.0
    %3017 = vmatpush1.msra.mxu0 0.0
    %3018 = vmatprep.subr.mxu0 0.0
    %3019 = vmatpush1.msra.mxu0 0.0
    %3020 = vmatprep.subr.mxu0 0.0
    %3021 = vmatpush1.msra.mxu0 0.0
    %3022 = vmatprep.subr.mxu0 0.0
    %3023 = vmatpush1.msra.mxu0 0.0
    %3024 = vmatprep.subr.mxu0 0.0
    %3025 = vmatpush1.msra.mxu0 0.0
    %3026 = vmatprep.subr.mxu0 0.0
    %3027 = vmatpush1.msra.mxu0 0.0
    %3028 = vmatprep.subr.mxu0 0.0
    %3029 = vmatpush1.msra.mxu0 0.0
    %3030 = vmatprep.subr.mxu0 0.0
    %3031 = vmatpush1.msra.mxu0 0.0
    %3032 = vmatprep.subr.mxu0 0.0
    %3033 = vmatpush1.msra.mxu0 0.0
    %3034 = vmatprep.subr.mxu0 0.0
    %3035 = vmatpush1.msra.mxu0 0.0
    %3036 = vmatprep.subr.mxu0 0.0
    %3037 = vmatpush1.msra.mxu0 0.0
    %3038 = vmatprep.subr.mxu0 0.0
    %3039 = vmatpush1.msra.mxu0 0.0
    %3040 = vmatprep.subr.mxu0 0.0
    %3041 = vmatpush1.msra.mxu0 0.0
    %3042 = vmatprep.subr.mxu0 0.0
    %3043 = vmatpush1.msra.mxu0 0.0
    %3044 = vmatprep.subr.mxu0 0.0
    %3045 = vmatpush1.msra.mxu0 0.0
    %3046 = vmatprep.subr.mxu0 0.0
    %3047 = vmatpush1.msra.mxu0 0.0
    %3048 = vmatprep.subr.mxu0 0.0
    %3049 = vmatpush1.msra.mxu0 0.0
    %3050 = vmatprep.subr.mxu0 0.0
    %3051 = vmatpush1.msra.mxu0 0.0
    %3052 = vmatprep.subr.mxu0 0.0
    %3053 = vmatpush1.msra.mxu0 0.0
    %3054 = vmatprep.subr.mxu0 0.0
    %3055 = vmatpush1.msra.mxu0 0.0
    %3056 = vmatprep.subr.mxu0 0.0
    %3057 = vmatpush1.msra.mxu0 0.0
    %3058 = vmatprep.subr.mxu0 0.0
    %3059 = vmatpush1.msra.mxu0 0.0
    %3060 = vmatprep.subr.mxu0 0.0
    %3061 = vmatpush1.msra.mxu0 0.0
    %3062 = vmatprep.mubr.f32.mxu0 0.0
    %3063 = vmatmul.mubr.f32.gmra.mrb[0].mxu0 %v2825
    %v3064 = vpop.f32.mrb[0].mxu0
    %v3065 = vadd.f32 %v1891, %v3064
    %v3066 = vpop.f32.mrb[0].mxu0
    %3067 = vdwg.mxu0
    %v3069 = vrot.slane %v3065, 4
    %v3071 = vadd.f32 %v1873, %v3069
    %v3072 = vxor.u32 %v3071, 2147483648
    %v3073 = vmul.f32 %v3072, 1.442695
    %v3074 = vpow.pop %v3073
    %v3075 = vadd.f32 %v3074, 1.0
    %v3076 = vrcp.pop %v3075
    %v3077 = vmul.f32 1.0, %v3076
    %3078 = vrot.lane.b32.xlu0 %v3069, 64
    %v3079 = vpop.permute.xlu0 %3078
    %v3081 = vmul.f32 %v3077, %v3079
    %3083 = vrot.lane.b32.xlu0 %v3081, 64
    %v3084 = vpop.permute.xlu0 %3083
    %v3086 = vadd.f32 %v1873, %v3084
    %v3087 = vtanh.pop %v3086
    %v3088 = vsub.f32 1.0, %v3077
    %3090 = vrot.lane.b32.xlu0 %v3087, 96
    %v3091 = vpop.permute.xlu0 %3090
    %v3093 = vmul.f32 %v3088, %v3091
    %v3094 = vrot.slane %v2820, 7
    %v3096 = vmul.f32 %v3077, %v3094
    %v3097 = vadd.f32 %v3093, %v3096
    %v3099 = vrot.slane %v3097, 4
    %3100 = vrot.lane.b32.xlu0 %v3099, 96
    %v3101 = vpop.permute.xlu0 %3100
    %v3102 = vsel %vm1573, %v3101, 0
    %3104 = vmatprep.subr.mxu0 0.0
    %3105 = vmatpush1.msra.mxu0 %v1881
    %3106 = vmatprep.subr.mxu0 0.0
    %3107 = vmatpush1.msra.mxu0 %v1882
    %3108 = vmatprep.subr.mxu0 0.0
    %3109 = vmatpush1.msra.mxu0 %v1883
    %3110 = vmatprep.subr.mxu0 0.0
    %3111 = vmatpush1.msra.mxu0 %v1884
    %3112 = vmatprep.subr.mxu0 0.0
    %3113 = vmatpush1.msra.mxu0 0.0
    %3114 = vmatprep.subr.mxu0 0.0
    %3115 = vmatpush1.msra.mxu0 0.0
    %3116 = vmatprep.subr.mxu0 0.0
    %3117 = vmatpush1.msra.mxu0 0.0
    %3118 = vmatprep.subr.mxu0 0.0
    %3119 = vmatpush1.msra.mxu0 0.0
    %3120 = vmatprep.subr.mxu0 0.0
    %3121 = vmatpush1.msra.mxu0 0.0
    %3122 = vmatprep.subr.mxu0 0.0
    %3123 = vmatpush1.msra.mxu0 0.0
    %3124 = vmatprep.subr.mxu0 0.0
    %3125 = vmatpush1.msra.mxu0 0.0
    %3126 = vmatprep.subr.mxu0 0.0
    %3127 = vmatpush1.msra.mxu0 0.0
    %3128 = vmatprep.subr.mxu0 0.0
    %3129 = vmatpush1.msra.mxu0 0.0
    %3130 = vmatprep.subr.mxu0 0.0
    %3131 = vmatpush1.msra.mxu0 0.0
    %3132 = vmatprep.subr.mxu0 0.0
    %3133 = vmatpush1.msra.mxu0 0.0
    %3134 = vmatprep.subr.mxu0 0.0
    %3135 = vmatpush1.msra.mxu0 0.0
    %3136 = vmatprep.subr.mxu0 0.0
    %3137 = vmatpush1.msra.mxu0 0.0
    %3138 = vmatprep.subr.mxu0 0.0
    %3139 = vmatpush1.msra.mxu0 0.0
    %3140 = vmatprep.subr.mxu0 0.0
    %3141 = vmatpush1.msra.mxu0 0.0
    %3142 = vmatprep.subr.mxu0 0.0
    %3143 = vmatpush1.msra.mxu0 0.0
    %3144 = vmatprep.subr.mxu0 0.0
    %3145 = vmatpush1.msra.mxu0 0.0
    %3146 = vmatprep.subr.mxu0 0.0
    %3147 = vmatpush1.msra.mxu0 0.0
    %3148 = vmatprep.subr.mxu0 0.0
    %3149 = vmatpush1.msra.mxu0 0.0
    %3150 = vmatprep.subr.mxu0 0.0
    %3151 = vmatpush1.msra.mxu0 0.0
    %3152 = vmatprep.subr.mxu0 0.0
    %3153 = vmatpush1.msra.mxu0 0.0
    %3154 = vmatprep.subr.mxu0 0.0
    %3155 = vmatpush1.msra.mxu0 0.0
    %3156 = vmatprep.subr.mxu0 0.0
    %3157 = vmatpush1.msra.mxu0 0.0
    %3158 = vmatprep.subr.mxu0 0.0
    %3159 = vmatpush1.msra.mxu0 0.0
    %3160 = vmatprep.subr.mxu0 0.0
    %3161 = vmatpush1.msra.mxu0 0.0
    %3162 = vmatprep.subr.mxu0 0.0
    %3163 = vmatpush1.msra.mxu0 0.0
    %3164 = vmatprep.subr.mxu0 0.0
    %3165 = vmatpush1.msra.mxu0 0.0
    %3166 = vmatprep.subr.mxu0 0.0
    %3167 = vmatpush1.msra.mxu0 0.0
    %3168 = vmatprep.mubr.f32.mxu0 0.0
    %3169 = vmatmul.mubr.f32.gmra.mrb[0].mxu0 %v3102
    %v3170 = vpop.f32.mrb[0].mxu0
    %v3171 = vadd.f32 %v1995, %v3170
    %v3172 = vpop.f32.mrb[0].mxu0
    %3173 = vdwg.mxu0
    %3175 = vrot.lane.b32.xlu0 %v2997, 96
    %v3176 = vpop.permute.xlu0 %3175
    %v3177 = vsel %vm1573, %v3176, 0
    %3179 = vmatprep.subr.mxu0 0.0
    %3180 = vmatpush1.msra.mxu0 %v1886
    %3181 = vmatprep.subr.mxu0 0.0
    %3182 = vmatpush1.msra.mxu0 %v1887
    %3183 = vmatprep.subr.mxu0 0.0
    %3184 = vmatpush1.msra.mxu0 %v1888
    %3185 = vmatprep.subr.mxu0 0.0
    %3186 = vmatpush1.msra.mxu0 %v1889
    %3187 = vmatprep.subr.mxu0 0.0
    %3188 = vmatpush1.msra.mxu0 0.0
    %3189 = vmatprep.subr.mxu0 0.0
    %3190 = vmatpush1.msra.mxu0 0.0
    %3191 = vmatprep.subr.mxu0 0.0
    %3192 = vmatpush1.msra.mxu0 0.0
    %3193 = vmatprep.subr.mxu0 0.0
    %3194 = vmatpush1.msra.mxu0 0.0
    %3195 = vmatprep.subr.mxu0 0.0
    %3196 = vmatpush1.msra.mxu0 0.0
    %3197 = vmatprep.subr.mxu0 0.0
    %3198 = vmatpush1.msra.mxu0 0.0
    %3199 = vmatprep.subr.mxu0 0.0
    %3200 = vmatpush1.msra.mxu0 0.0
    %3201 = vmatprep.subr.mxu0 0.0
    %3202 = vmatpush1.msra.mxu0 0.0
    %3203 = vmatprep.subr.mxu0 0.0
    %3204 = vmatpush1.msra.mxu0 0.0
    %3205 = vmatprep.subr.mxu0 0.0
    %3206 = vmatpush1.msra.mxu0 0.0
    %3207 = vmatprep.subr.mxu0 0.0
    %3208 = vmatpush1.msra.mxu0 0.0
    %3209 = vmatprep.subr.mxu0 0.0
    %3210 = vmatpush1.msra.mxu0 0.0
    %3211 = vmatprep.subr.mxu0 0.0
    %3212 = vmatpush1.msra.mxu0 0.0
    %3213 = vmatprep.subr.mxu0 0.0
    %3214 = vmatpush1.msra.mxu0 0.0
    %3215 = vmatprep.subr.mxu0 0.0
    %3216 = vmatpush1.msra.mxu0 0.0
    %3217 = vmatprep.subr.mxu0 0.0
    %3218 = vmatpush1.msra.mxu0 0.0
    %3219 = vmatprep.subr.mxu0 0.0
    %3220 = vmatpush1.msra.mxu0 0.0
    %3221 = vmatprep.subr.mxu0 0.0
    %3222 = vmatpush1.msra.mxu0 0.0
    %3223 = vmatprep.subr.mxu0 0.0
    %3224 = vmatpush1.msra.mxu0 0.0
    %3225 = vmatprep.subr.mxu0 0.0
    %3226 = vmatpush1.msra.mxu0 0.0
    %3227 = vmatprep.subr.mxu0 0.0
    %3228 = vmatpush1.msra.mxu0 0.0
    %3229 = vmatprep.subr.mxu0 0.0
    %3230 = vmatpush1.msra.mxu0 0.0
    %3231 = vmatprep.subr.mxu0 0.0
    %3232 = vmatpush1.msra.mxu0 0.0
    %3233 = vmatprep.subr.mxu0 0.0
    %3234 = vmatpush1.msra.mxu0 0.0
    %3235 = vmatprep.subr.mxu0 0.0
    %3236 = vmatpush1.msra.mxu0 0.0
    %3237 = vmatprep.subr.mxu0 0.0
    %3238 = vmatpush1.msra.mxu0 0.0
    %3239 = vmatprep.subr.mxu0 0.0
    %3240 = vmatpush1.msra.mxu0 0.0
    %3241 = vmatprep.subr.mxu0 0.0
    %3242 = vmatpush1.msra.mxu0 0.0
    %3243 = vmatprep.mubr.f32.mxu0 0.0
    %3244 = vmatmul.mubr.f32.gmra.mrb[0].mxu0 %v3177
    %v3245 = vpop.f32.mrb[0].mxu0
    %v3246 = vadd.f32 %v2069, %v3245
    %v3247 = vpop.f32.mrb[0].mxu0
    %3248 = vdwg.mxu0
    %v3249 = vadd.f32 %v3171, %v3246
    %v3250 = vxor.u32 %v3249, 2147483648
    %v3251 = vmul.f32 %v3250, 1.442695
    %v3252 = vpow.pop %v3251
    %v3253 = vadd.f32 %v3252, 1.0
    %v3254 = vrcp.pop %v3253
    %v3255 = vmul.f32 1.0, %v3254
    %3257 = vrot.lane.b32.xlu0 %v3246, 64
    %v3258 = vpop.permute.xlu0 %3257
    %v3260 = vmul.f32 %v3255, %v3258
    %3262 = vrot.lane.b32.xlu0 %v3260, 64
    %v3263 = vpop.permute.xlu0 %3262
    %v3265 = vadd.f32 %v3171, %v3263
    %v3266 = vtanh.pop %v3265
    %v3267 = vsub.f32 1.0, %v3255
    %3269 = vrot.lane.b32.xlu0 %v3266, 96
    %v3270 = vpop.permute.xlu0 %3269
    %v3272 = vmul.f32 %v3267, %v3270
    %v3273 = vmul.f32 %v3255, %v2997
    %v3274 = vadd.f32 %v3272, %v3273
    %3275 = vmatprep.subr.mxu0 0.0
    %3276 = vmatpush1.msra.mxu0 %v1876
    %3277 = vmatprep.subr.mxu0 0.0
    %3278 = vmatpush1.msra.mxu0 %v1877
    %3279 = vmatprep.subr.mxu0 0.0
    %3280 = vmatpush1.msra.mxu0 %v1878
    %3281 = vmatprep.subr.mxu0 0.0
    %3282 = vmatpush1.msra.mxu0 %v1879
    %3283 = vmatprep.subr.mxu0 0.0
    %3284 = vmatpush1.msra.mxu0 0.0
    %3285 = vmatprep.subr.mxu0 0.0
    %3286 = vmatpush1.msra.mxu0 0.0
    %3287 = vmatprep.subr.mxu0 0.0
    %3288 = vmatpush1.msra.mxu0 0.0
    %3289 = vmatprep.subr.mxu0 0.0
    %3290 = vmatpush1.msra.mxu0 0.0
    %3291 = vmatprep.subr.mxu0 0.0
    %3292 = vmatpush1.msra.mxu0 0.0
    %3293 = vmatprep.subr.mxu0 0.0
    %3294 = vmatpush1.msra.mxu0 0.0
    %3295 = vmatprep.subr.mxu0 0.0
    %3296 = vmatpush1.msra.mxu0 0.0
    %3297 = vmatprep.subr.mxu0 0.0
    %3298 = vmatpush1.msra.mxu0 0.0
    %3299 = vmatprep.subr.mxu0 0.0
    %3300 = vmatpush1.msra.mxu0 0.0
    %3301 = vmatprep.subr.mxu0 0.0
    %3302 = vmatpush1.msra.mxu0 0.0
    %3303 = vmatprep.subr.mxu0 0.0
    %3304 = vmatpush1.msra.mxu0 0.0
    %3305 = vmatprep.subr.mxu0 0.0
    %3306 = vmatpush1.msra.mxu0 0.0
    %3307 = vmatprep.subr.mxu0 0.0
    %3308 = vmatpush1.msra.mxu0 0.0
    %3309 = vmatprep.subr.mxu0 0.0
    %3310 = vmatpush1.msra.mxu0 0.0
    %3311 = vmatprep.subr.mxu0 0.0
    %3312 = vmatpush1.msra.mxu0 0.0
    %3313 = vmatprep.subr.mxu0 0.0
    %3314 = vmatpush1.msra.mxu0 0.0
    %3315 = vmatprep.subr.mxu0 0.0
    %3316 = vmatpush1.msra.mxu0 0.0
    %3317 = vmatprep.subr.mxu0 0.0
    %3318 = vmatpush1.msra.mxu0 0.0
    %3319 = vmatprep.subr.mxu0 0.0
    %3320 = vmatpush1.msra.mxu0 0.0
    %3321 = vmatprep.subr.mxu0 0.0
    %3322 = vmatpush1.msra.mxu0 0.0
    %3323 = vmatprep.subr.mxu0 0.0
    %3324 = vmatpush1.msra.mxu0 0.0
    %3325 = vmatprep.subr.mxu0 0.0
    %3326 = vmatpush1.msra.mxu0 0.0
    %3327 = vmatprep.subr.mxu0 0.0
    %3328 = vmatpush1.msra.mxu0 0.0
    %3329 = vmatprep.subr.mxu0 0.0
    %3330 = vmatpush1.msra.mxu0 0.0
    %3331 = vmatprep.subr.mxu0 0.0
    %3332 = vmatpush1.msra.mxu0 0.0
    %3333 = vmatprep.subr.mxu0 0.0
    %3334 = vmatpush1.msra.mxu0 0.0
    %3335 = vmatprep.subr.mxu0 0.0
    %3336 = vmatpush1.msra.mxu0 0.0
    %3337 = vmatprep.subr.mxu0 0.0
    %3338 = vmatpush1.msra.mxu0 0.0
    %3339 = vmatprep.mubr.f32.mxu0 0.0
    %3340 = vmatmul.mubr.f32.gmra.mrb[0].mxu0 %v3102
    %v3341 = vpop.f32.mrb[0].mxu0
    %v3342 = vadd.f32 %v1891, %v3341
    %v3343 = vpop.f32.mrb[0].mxu0
    %3344 = vdwg.mxu0
    %v3346 = vrot.slane %v3342, 3
    %v3348 = vadd.f32 %v1873, %v3346
    %v3349 = vxor.u32 %v3348, 2147483648
    %v3350 = vmul.f32 %v3349, 1.442695
    %v3351 = vpow.pop %v3350
    %v3352 = vadd.f32 %v3351, 1.0
    %v3353 = vrcp.pop %v3352
    %v3354 = vmul.f32 1.0, %v3353
    %3355 = vrot.lane.b32.xlu0 %v3346, 64
    %v3356 = vpop.permute.xlu0 %3355
    %v3358 = vmul.f32 %v3354, %v3356
    %3360 = vrot.lane.b32.xlu0 %v3358, 64
    %v3361 = vpop.permute.xlu0 %3360
    %v3363 = vadd.f32 %v1873, %v3361
    %v3364 = vtanh.pop %v3363
    %v3365 = vsub.f32 1.0, %v3354
    %3367 = vrot.lane.b32.xlu0 %v3364, 96
    %v3368 = vpop.permute.xlu0 %3367
    %v3370 = vmul.f32 %v3365, %v3368
    %v3371 = vrot.slane %v3097, 7
    %v3373 = vmul.f32 %v3354, %v3371
    %v3374 = vadd.f32 %v3370, %v3373
    %v3376 = vrot.slane %v3374, 5
    %3377 = vrot.lane.b32.xlu0 %v3376, 96
    %v3378 = vpop.permute.xlu0 %3377
    %v3379 = vsel %vm1573, %v3378, 0
    %3381 = vmatprep.subr.mxu0 0.0
    %3382 = vmatpush1.msra.mxu0 %v1881
    %3383 = vmatprep.subr.mxu0 0.0
    %3384 = vmatpush1.msra.mxu0 %v1882
    %3385 = vmatprep.subr.mxu0 0.0
    %3386 = vmatpush1.msra.mxu0 %v1883
    %3387 = vmatprep.subr.mxu0 0.0
    %3388 = vmatpush1.msra.mxu0 %v1884
    %3389 = vmatprep.subr.mxu0 0.0
    %3390 = vmatpush1.msra.mxu0 0.0
    %3391 = vmatprep.subr.mxu0 0.0
    %3392 = vmatpush1.msra.mxu0 0.0
    %3393 = vmatprep.subr.mxu0 0.0
    %3394 = vmatpush1.msra.mxu0 0.0
    %3395 = vmatprep.subr.mxu0 0.0
    %3396 = vmatpush1.msra.mxu0 0.0
    %3397 = vmatprep.subr.mxu0 0.0
    %3398 = vmatpush1.msra.mxu0 0.0
    %3399 = vmatprep.subr.mxu0 0.0
    %3400 = vmatpush1.msra.mxu0 0.0
    %3401 = vmatprep.subr.mxu0 0.0
    %3402 = vmatpush1.msra.mxu0 0.0
    %3403 = vmatprep.subr.mxu0 0.0
    %3404 = vmatpush1.msra.mxu0 0.0
    %3405 = vmatprep.subr.mxu0 0.0
    %3406 = vmatpush1.msra.mxu0 0.0
    %3407 = vmatprep.subr.mxu0 0.0
    %3408 = vmatpush1.msra.mxu0 0.0
    %3409 = vmatprep.subr.mxu0 0.0
    %3410 = vmatpush1.msra.mxu0 0.0
    %3411 = vmatprep.subr.mxu0 0.0
    %3412 = vmatpush1.msra.mxu0 0.0
    %3413 = vmatprep.subr.mxu0 0.0
    %3414 = vmatpush1.msra.mxu0 0.0
    %3415 = vmatprep.subr.mxu0 0.0
    %3416 = vmatpush1.msra.mxu0 0.0
    %3417 = vmatprep.subr.mxu0 0.0
    %3418 = vmatpush1.msra.mxu0 0.0
    %3419 = vmatprep.subr.mxu0 0.0
    %3420 = vmatpush1.msra.mxu0 0.0
    %3421 = vmatprep.subr.mxu0 0.0
    %3422 = vmatpush1.msra.mxu0 0.0
    %3423 = vmatprep.subr.mxu0 0.0
    %3424 = vmatpush1.msra.mxu0 0.0
    %3425 = vmatprep.subr.mxu0 0.0
    %3426 = vmatpush1.msra.mxu0 0.0
    %3427 = vmatprep.subr.mxu0 0.0
    %3428 = vmatpush1.msra.mxu0 0.0
    %3429 = vmatprep.subr.mxu0 0.0
    %3430 = vmatpush1.msra.mxu0 0.0
    %3431 = vmatprep.subr.mxu0 0.0
    %3432 = vmatpush1.msra.mxu0 0.0
    %3433 = vmatprep.subr.mxu0 0.0
    %3434 = vmatpush1.msra.mxu0 0.0
    %3435 = vmatprep.subr.mxu0 0.0
    %3436 = vmatpush1.msra.mxu0 0.0
    %3437 = vmatprep.subr.mxu0 0.0
    %3438 = vmatpush1.msra.mxu0 0.0
    %3439 = vmatprep.subr.mxu0 0.0
    %3440 = vmatpush1.msra.mxu0 0.0
    %3441 = vmatprep.subr.mxu0 0.0
    %3442 = vmatpush1.msra.mxu0 0.0
    %3443 = vmatprep.subr.mxu0 0.0
    %3444 = vmatpush1.msra.mxu0 0.0
    %3445 = vmatprep.mubr.f32.mxu0 0.0
    %3446 = vmatmul.mubr.f32.gmra.mrb[0].mxu0 %v3379
    %v3447 = vpop.f32.mrb[0].mxu0
    %v3448 = vadd.f32 %v1995, %v3447
    %v3449 = vpop.f32.mrb[0].mxu0
    %3450 = vdwg.mxu0
    %3452 = vrot.lane.b32.xlu0 %v3274, 96
    %v3453 = vpop.permute.xlu0 %3452
    %v3454 = vsel %vm1573, %v3453, 0
    %3456 = vmatprep.subr.mxu0 0.0
    %3457 = vmatpush1.msra.mxu0 %v1886
    %3458 = vmatprep.subr.mxu0 0.0
    %3459 = vmatpush1.msra.mxu0 %v1887
    %3460 = vmatprep.subr.mxu0 0.0
    %3461 = vmatpush1.msra.mxu0 %v1888
    %3462 = vmatprep.subr.mxu0 0.0
    %3463 = vmatpush1.msra.mxu0 %v1889
    %3464 = vmatprep.subr.mxu0 0.0
    %3465 = vmatpush1.msra.mxu0 0.0
    %3466 = vmatprep.subr.mxu0 0.0
    %3467 = vmatpush1.msra.mxu0 0.0
    %3468 = vmatprep.subr.mxu0 0.0
    %3469 = vmatpush1.msra.mxu0 0.0
    %3470 = vmatprep.subr.mxu0 0.0
    %3471 = vmatpush1.msra.mxu0 0.0
    %3472 = vmatprep.subr.mxu0 0.0
    %3473 = vmatpush1.msra.mxu0 0.0
    %3474 = vmatprep.subr.mxu0 0.0
    %3475 = vmatpush1.msra.mxu0 0.0
    %3476 = vmatprep.subr.mxu0 0.0
    %3477 = vmatpush1.msra.mxu0 0.0
    %3478 = vmatprep.subr.mxu0 0.0
    %3479 = vmatpush1.msra.mxu0 0.0
    %3480 = vmatprep.subr.mxu0 0.0
    %3481 = vmatpush1.msra.mxu0 0.0
    %3482 = vmatprep.subr.mxu0 0.0
    %3483 = vmatpush1.msra.mxu0 0.0
    %3484 = vmatprep.subr.mxu0 0.0
    %3485 = vmatpush1.msra.mxu0 0.0
    %3486 = vmatprep.subr.mxu0 0.0
    %3487 = vmatpush1.msra.mxu0 0.0
    %3488 = vmatprep.subr.mxu0 0.0
    %3489 = vmatpush1.msra.mxu0 0.0
    %3490 = vmatprep.subr.mxu0 0.0
    %3491 = vmatpush1.msra.mxu0 0.0
    %3492 = vmatprep.subr.mxu0 0.0
    %3493 = vmatpush1.msra.mxu0 0.0
    %3494 = vmatprep.subr.mxu0 0.0
    %3495 = vmatpush1.msra.mxu0 0.0
    %3496 = vmatprep.subr.mxu0 0.0
    %3497 = vmatpush1.msra.mxu0 0.0
    %3498 = vmatprep.subr.mxu0 0.0
    %3499 = vmatpush1.msra.mxu0 0.0
    %3500 = vmatprep.subr.mxu0 0.0
    %3501 = vmatpush1.msra.mxu0 0.0
    %3502 = vmatprep.subr.mxu0 0.0
    %3503 = vmatpush1.msra.mxu0 0.0
    %3504 = vmatprep.subr.mxu0 0.0
    %3505 = vmatpush1.msra.mxu0 0.0
    %3506 = vmatprep.subr.mxu0 0.0
    %3507 = vmatpush1.msra.mxu0 0.0
    %3508 = vmatprep.subr.mxu0 0.0
    %3509 = vmatpush1.msra.mxu0 0.0
    %3510 = vmatprep.subr.mxu0 0.0
    %3511 = vmatpush1.msra.mxu0 0.0
    %3512 = vmatprep.subr.mxu0 0.0
    %3513 = vmatpush1.msra.mxu0 0.0
    %3514 = vmatprep.subr.mxu0 0.0
    %3515 = vmatpush1.msra.mxu0 0.0
    %3516 = vmatprep.subr.mxu0 0.0
    %3517 = vmatpush1.msra.mxu0 0.0
    %3518 = vmatprep.subr.mxu0 0.0
    %3519 = vmatpush1.msra.mxu0 0.0
    %3520 = vmatprep.mubr.f32.mxu0 0.0
    %3521 = vmatmul.mubr.f32.gmra.mrb[0].mxu0 %v3454
    %v3522 = vpop.f32.mrb[0].mxu0
    %v3523 = vadd.f32 %v2069, %v3522
    %v3524 = vpop.f32.mrb[0].mxu0
    %3525 = vdwg.mxu0
    %v3526 = vadd.f32 %v3448, %v3523
    %v3527 = vxor.u32 %v3526, 2147483648
    %v3528 = vmul.f32 %v3527, 1.442695
    %v3529 = vpow.pop %v3528
    %v3530 = vadd.f32 %v3529, 1.0
    %v3531 = vrcp.pop %v3530
    %v3532 = vmul.f32 1.0, %v3531
    %3534 = vrot.lane.b32.xlu0 %v3523, 64
    %v3535 = vpop.permute.xlu0 %3534
    %v3537 = vmul.f32 %v3532, %v3535
    %3539 = vrot.lane.b32.xlu0 %v3537, 64
    %v3540 = vpop.permute.xlu0 %3539
    %v3542 = vadd.f32 %v3448, %v3540
    %v3543 = vtanh.pop %v3542
    %v3544 = vsub.f32 1.0, %v3532
    %3546 = vrot.lane.b32.xlu0 %v3543, 96
    %v3547 = vpop.permute.xlu0 %3546
    %v3549 = vmul.f32 %v3544, %v3547
    %v3550 = vmul.f32 %v3532, %v3274
    %v3551 = vadd.f32 %v3549, %v3550
    %3552 = vmatprep.subr.mxu0 0.0
    %3553 = vmatpush1.msra.mxu0 %v1876
    %3554 = vmatprep.subr.mxu0 0.0
    %3555 = vmatpush1.msra.mxu0 %v1877
    %3556 = vmatprep.subr.mxu0 0.0
    %3557 = vmatpush1.msra.mxu0 %v1878
    %3558 = vmatprep.subr.mxu0 0.0
    %3559 = vmatpush1.msra.mxu0 %v1879
    %3560 = vmatprep.subr.mxu0 0.0
    %3561 = vmatpush1.msra.mxu0 0.0
    %3562 = vmatprep.subr.mxu0 0.0
    %3563 = vmatpush1.msra.mxu0 0.0
    %3564 = vmatprep.subr.mxu0 0.0
    %3565 = vmatpush1.msra.mxu0 0.0
    %3566 = vmatprep.subr.mxu0 0.0
    %3567 = vmatpush1.msra.mxu0 0.0
    %3568 = vmatprep.subr.mxu0 0.0
    %3569 = vmatpush1.msra.mxu0 0.0
    %3570 = vmatprep.subr.mxu0 0.0
    %3571 = vmatpush1.msra.mxu0 0.0
    %3572 = vmatprep.subr.mxu0 0.0
    %3573 = vmatpush1.msra.mxu0 0.0
    %3574 = vmatprep.subr.mxu0 0.0
    %3575 = vmatpush1.msra.mxu0 0.0
    %3576 = vmatprep.subr.mxu0 0.0
    %3577 = vmatpush1.msra.mxu0 0.0
    %3578 = vmatprep.subr.mxu0 0.0
    %3579 = vmatpush1.msra.mxu0 0.0
    %3580 = vmatprep.subr.mxu0 0.0
    %3581 = vmatpush1.msra.mxu0 0.0
    %3582 = vmatprep.subr.mxu0 0.0
    %3583 = vmatpush1.msra.mxu0 0.0
    %3584 = vmatprep.subr.mxu0 0.0
    %3585 = vmatpush1.msra.mxu0 0.0
    %3586 = vmatprep.subr.mxu0 0.0
    %3587 = vmatpush1.msra.mxu0 0.0
    %3588 = vmatprep.subr.mxu0 0.0
    %3589 = vmatpush1.msra.mxu0 0.0
    %3590 = vmatprep.subr.mxu0 0.0
    %3591 = vmatpush1.msra.mxu0 0.0
    %3592 = vmatprep.subr.mxu0 0.0
    %3593 = vmatpush1.msra.mxu0 0.0
    %3594 = vmatprep.subr.mxu0 0.0
    %3595 = vmatpush1.msra.mxu0 0.0
    %3596 = vmatprep.subr.mxu0 0.0
    %3597 = vmatpush1.msra.mxu0 0.0
    %3598 = vmatprep.subr.mxu0 0.0
    %3599 = vmatpush1.msra.mxu0 0.0
    %3600 = vmatprep.subr.mxu0 0.0
    %3601 = vmatpush1.msra.mxu0 0.0
    %3602 = vmatprep.subr.mxu0 0.0
    %3603 = vmatpush1.msra.mxu0 0.0
    %3604 = vmatprep.subr.mxu0 0.0
    %3605 = vmatpush1.msra.mxu0 0.0
    %3606 = vmatprep.subr.mxu0 0.0
    %3607 = vmatpush1.msra.mxu0 0.0
    %3608 = vmatprep.subr.mxu0 0.0
    %3609 = vmatpush1.msra.mxu0 0.0
    %3610 = vmatprep.subr.mxu0 0.0
    %3611 = vmatpush1.msra.mxu0 0.0
    %3612 = vmatprep.subr.mxu0 0.0
    %3613 = vmatpush1.msra.mxu0 0.0
    %3614 = vmatprep.subr.mxu0 0.0
    %3615 = vmatpush1.msra.mxu0 0.0
    %3616 = vmatprep.mubr.f32.mxu0 0.0
    %3617 = vmatmul.mubr.f32.gmra.mrb[0].mxu0 %v3379
    %v3618 = vpop.f32.mrb[0].mxu0
    %v3619 = vadd.f32 %v1891, %v3618
    %v3620 = vpop.f32.mrb[0].mxu0
    %3621 = vdwg.mxu0
    %v3623 = vrot.slane %v3619, 2
    %v3625 = vadd.f32 %v1873, %v3623
    %v3626 = vxor.u32 %v3625, 2147483648
    %v3627 = vmul.f32 %v3626, 1.442695
    %v3628 = vpow.pop %v3627
    %v3629 = vadd.f32 %v3628, 1.0
    %v3630 = vrcp.pop %v3629
    %v3631 = vmul.f32 1.0, %v3630
    %3632 = vrot.lane.b32.xlu0 %v3623, 64
    %v3633 = vpop.permute.xlu0 %3632
    %v3635 = vmul.f32 %v3631, %v3633
    %3637 = vrot.lane.b32.xlu0 %v3635, 64
    %v3638 = vpop.permute.xlu0 %3637
    %v3640 = vadd.f32 %v1873, %v3638
    %v3641 = vtanh.pop %v3640
    %v3642 = vsub.f32 1.0, %v3631
    %3644 = vrot.lane.b32.xlu0 %v3641, 96
    %v3645 = vpop.permute.xlu0 %3644
    %v3647 = vmul.f32 %v3642, %v3645
    %v3648 = vrot.slane %v3374, 7
    %v3650 = vmul.f32 %v3631, %v3648
    %v3651 = vadd.f32 %v3647, %v3650
    %v3653 = vrot.slane %v3651, 6
    %3654 = vrot.lane.b32.xlu0 %v3653, 96
    %v3655 = vpop.permute.xlu0 %3654
    %v3656 = vsel %vm1573, %v3655, 0
    %3658 = vmatprep.subr.mxu0 0.0
    %3659 = vmatpush1.msra.mxu0 %v1881
    %3660 = vmatprep.subr.mxu0 0.0
    %3661 = vmatpush1.msra.mxu0 %v1882
    %3662 = vmatprep.subr.mxu0 0.0
    %3663 = vmatpush1.msra.mxu0 %v1883
    %3664 = vmatprep.subr.mxu0 0.0
    %3665 = vmatpush1.msra.mxu0 %v1884
    %3666 = vmatprep.subr.mxu0 0.0
    %3667 = vmatpush1.msra.mxu0 0.0
    %3668 = vmatprep.subr.mxu0 0.0
    %3669 = vmatpush1.msra.mxu0 0.0
    %3670 = vmatprep.subr.mxu0 0.0
    %3671 = vmatpush1.msra.mxu0 0.0
    %3672 = vmatprep.subr.mxu0 0.0
    %3673 = vmatpush1.msra.mxu0 0.0
    %3674 = vmatprep.subr.mxu0 0.0
    %3675 = vmatpush1.msra.mxu0 0.0
    %3676 = vmatprep.subr.mxu0 0.0
    %3677 = vmatpush1.msra.mxu0 0.0
    %3678 = vmatprep.subr.mxu0 0.0
    %3679 = vmatpush1.msra.mxu0 0.0
    %3680 = vmatprep.subr.mxu0 0.0
    %3681 = vmatpush1.msra.mxu0 0.0
    %3682 = vmatprep.subr.mxu0 0.0
    %3683 = vmatpush1.msra.mxu0 0.0
    %3684 = vmatprep.subr.mxu0 0.0
    %3685 = vmatpush1.msra.mxu0 0.0
    %3686 = vmatprep.subr.mxu0 0.0
    %3687 = vmatpush1.msra.mxu0 0.0
    %3688 = vmatprep.subr.mxu0 0.0
    %3689 = vmatpush1.msra.mxu0 0.0
    %3690 = vmatprep.subr.mxu0 0.0
    %3691 = vmatpush1.msra.mxu0 0.0
    %3692 = vmatprep.subr.mxu0 0.0
    %3693 = vmatpush1.msra.mxu0 0.0
    %3694 = vmatprep.subr.mxu0 0.0
    %3695 = vmatpush1.msra.mxu0 0.0
    %3696 = vmatprep.subr.mxu0 0.0
    %3697 = vmatpush1.msra.mxu0 0.0
    %3698 = vmatprep.subr.mxu0 0.0
    %3699 = vmatpush1.msra.mxu0 0.0
    %3700 = vmatprep.subr.mxu0 0.0
    %3701 = vmatpush1.msra.mxu0 0.0
    %3702 = vmatprep.subr.mxu0 0.0
    %3703 = vmatpush1.msra.mxu0 0.0
    %3704 = vmatprep.subr.mxu0 0.0
    %3705 = vmatpush1.msra.mxu0 0.0
    %3706 = vmatprep.subr.mxu0 0.0
    %3707 = vmatpush1.msra.mxu0 0.0
    %3708 = vmatprep.subr.mxu0 0.0
    %3709 = vmatpush1.msra.mxu0 0.0
    %3710 = vmatprep.subr.mxu0 0.0
    %3711 = vmatpush1.msra.mxu0 0.0
    %3712 = vmatprep.subr.mxu0 0.0
    %3713 = vmatpush1.msra.mxu0 0.0
    %3714 = vmatprep.subr.mxu0 0.0
    %3715 = vmatpush1.msra.mxu0 0.0
    %3716 = vmatprep.subr.mxu0 0.0
    %3717 = vmatpush1.msra.mxu0 0.0
    %3718 = vmatprep.subr.mxu0 0.0
    %3719 = vmatpush1.msra.mxu0 0.0
    %3720 = vmatprep.subr.mxu0 0.0
    %3721 = vmatpush1.msra.mxu0 0.0
    %3722 = vmatprep.mubr.f32.mxu0 0.0
    %3723 = vmatmul.mubr.f32.gmra.mrb[0].mxu0 %v3656
    %v3724 = vpop.f32.mrb[0].mxu0
    %v3725 = vadd.f32 %v1995, %v3724
    %v3726 = vpop.f32.mrb[0].mxu0
    %3727 = vdwg.mxu0
    %3729 = vrot.lane.b32.xlu0 %v3551, 96
    %v3730 = vpop.permute.xlu0 %3729
    %v3731 = vsel %vm1573, %v3730, 0
    %3733 = vmatprep.subr.mxu0 0.0
    %3734 = vmatpush1.msra.mxu0 %v1886
    %3735 = vmatprep.subr.mxu0 0.0
    %3736 = vmatpush1.msra.mxu0 %v1887
    %3737 = vmatprep.subr.mxu0 0.0
    %3738 = vmatpush1.msra.mxu0 %v1888
    %3739 = vmatprep.subr.mxu0 0.0
    %3740 = vmatpush1.msra.mxu0 %v1889
    %3741 = vmatprep.subr.mxu0 0.0
    %3742 = vmatpush1.msra.mxu0 0.0
    %3743 = vmatprep.subr.mxu0 0.0
    %3744 = vmatpush1.msra.mxu0 0.0
    %3745 = vmatprep.subr.mxu0 0.0
    %3746 = vmatpush1.msra.mxu0 0.0
    %3747 = vmatprep.subr.mxu0 0.0
    %3748 = vmatpush1.msra.mxu0 0.0
    %3749 = vmatprep.subr.mxu0 0.0
    %3750 = vmatpush1.msra.mxu0 0.0
    %3751 = vmatprep.subr.mxu0 0.0
    %3752 = vmatpush1.msra.mxu0 0.0
    %3753 = vmatprep.subr.mxu0 0.0
    %3754 = vmatpush1.msra.mxu0 0.0
    %3755 = vmatprep.subr.mxu0 0.0
    %3756 = vmatpush1.msra.mxu0 0.0
    %3757 = vmatprep.subr.mxu0 0.0
    %3758 = vmatpush1.msra.mxu0 0.0
    %3759 = vmatprep.subr.mxu0 0.0
    %3760 = vmatpush1.msra.mxu0 0.0
    %3761 = vmatprep.subr.mxu0 0.0
    %3762 = vmatpush1.msra.mxu0 0.0
    %3763 = vmatprep.subr.mxu0 0.0
    %3764 = vmatpush1.msra.mxu0 0.0
    %3765 = vmatprep.subr.mxu0 0.0
    %3766 = vmatpush1.msra.mxu0 0.0
    %3767 = vmatprep.subr.mxu0 0.0
    %3768 = vmatpush1.msra.mxu0 0.0
    %3769 = vmatprep.subr.mxu0 0.0
    %3770 = vmatpush1.msra.mxu0 0.0
    %3771 = vmatprep.subr.mxu0 0.0
    %3772 = vmatpush1.msra.mxu0 0.0
    %3773 = vmatprep.subr.mxu0 0.0
    %3774 = vmatpush1.msra.mxu0 0.0
    %3775 = vmatprep.subr.mxu0 0.0
    %3776 = vmatpush1.msra.mxu0 0.0
    %3777 = vmatprep.subr.mxu0 0.0
    %3778 = vmatpush1.msra.mxu0 0.0
    %3779 = vmatprep.subr.mxu0 0.0
    %3780 = vmatpush1.msra.mxu0 0.0
    %3781 = vmatprep.subr.mxu0 0.0
    %3782 = vmatpush1.msra.mxu0 0.0
    %3783 = vmatprep.subr.mxu0 0.0
    %3784 = vmatpush1.msra.mxu0 0.0
    %3785 = vmatprep.subr.mxu0 0.0
    %3786 = vmatpush1.msra.mxu0 0.0
    %3787 = vmatprep.subr.mxu0 0.0
    %3788 = vmatpush1.msra.mxu0 0.0
    %3789 = vmatprep.subr.mxu0 0.0
    %3790 = vmatpush1.msra.mxu0 0.0
    %3791 = vmatprep.subr.mxu0 0.0
    %3792 = vmatpush1.msra.mxu0 0.0
    %3793 = vmatprep.subr.mxu0 0.0
    %3794 = vmatpush1.msra.mxu0 0.0
    %3795 = vmatprep.subr.mxu0 0.0
    %3796 = vmatpush1.msra.mxu0 0.0
    %3797 = vmatprep.mubr.f32.mxu0 0.0
    %3798 = vmatmul.mubr.f32.gmra.mrb[0].mxu0 %v3731
    %v3799 = vpop.f32.mrb[0].mxu0
    %v3800 = vadd.f32 %v2069, %v3799
    %v3801 = vpop.f32.mrb[0].mxu0
    %3802 = vdwg.mxu0
    %v3803 = vadd.f32 %v3725, %v3800
    %v3804 = vxor.u32 %v3803, 2147483648
    %v3805 = vmul.f32 %v3804, 1.442695
    %v3806 = vpow.pop %v3805
    %v3807 = vadd.f32 %v3806, 1.0
    %v3808 = vrcp.pop %v3807
    %v3809 = vmul.f32 1.0, %v3808
    %3811 = vrot.lane.b32.xlu0 %v3800, 64
    %v3812 = vpop.permute.xlu0 %3811
    %v3814 = vmul.f32 %v3809, %v3812
    %3816 = vrot.lane.b32.xlu0 %v3814, 64
    %v3817 = vpop.permute.xlu0 %3816
    %v3819 = vadd.f32 %v3725, %v3817
    %v3820 = vtanh.pop %v3819
    %v3821 = vsub.f32 1.0, %v3809
    %3823 = vrot.lane.b32.xlu0 %v3820, 96
    %v3824 = vpop.permute.xlu0 %3823
    %v3826 = vmul.f32 %v3821, %v3824
    %v3827 = vmul.f32 %v3809, %v3551
    %v3828 = vadd.f32 %v3826, %v3827
    %3829 = vmatprep.subr.mxu0 0.0
    %3830 = vmatpush1.msra.mxu0 %v1876
    %3831 = vmatprep.subr.mxu0 0.0
    %3832 = vmatpush1.msra.mxu0 %v1877
    %3833 = vmatprep.subr.mxu0 0.0
    %3834 = vmatpush1.msra.mxu0 %v1878
    %3835 = vmatprep.subr.mxu0 0.0
    %3836 = vmatpush1.msra.mxu0 %v1879
    %3837 = vmatprep.subr.mxu0 0.0
    %3838 = vmatpush1.msra.mxu0 0.0
    %3839 = vmatprep.subr.mxu0 0.0
    %3840 = vmatpush1.msra.mxu0 0.0
    %3841 = vmatprep.subr.mxu0 0.0
    %3842 = vmatpush1.msra.mxu0 0.0
    %3843 = vmatprep.subr.mxu0 0.0
    %3844 = vmatpush1.msra.mxu0 0.0
    %3845 = vmatprep.subr.mxu0 0.0
    %3846 = vmatpush1.msra.mxu0 0.0
    %3847 = vmatprep.subr.mxu0 0.0
    %3848 = vmatpush1.msra.mxu0 0.0
    %3849 = vmatprep.subr.mxu0 0.0
    %3850 = vmatpush1.msra.mxu0 0.0
    %3851 = vmatprep.subr.mxu0 0.0
    %3852 = vmatpush1.msra.mxu0 0.0
    %3853 = vmatprep.subr.mxu0 0.0
    %3854 = vmatpush1.msra.mxu0 0.0
    %3855 = vmatprep.subr.mxu0 0.0
    %3856 = vmatpush1.msra.mxu0 0.0
    %3857 = vmatprep.subr.mxu0 0.0
    %3858 = vmatpush1.msra.mxu0 0.0
    %3859 = vmatprep.subr.mxu0 0.0
    %3860 = vmatpush1.msra.mxu0 0.0
    %3861 = vmatprep.subr.mxu0 0.0
    %3862 = vmatpush1.msra.mxu0 0.0
    %3863 = vmatprep.subr.mxu0 0.0
    %3864 = vmatpush1.msra.mxu0 0.0
    %3865 = vmatprep.subr.mxu0 0.0
    %3866 = vmatpush1.msra.mxu0 0.0
    %3867 = vmatprep.subr.mxu0 0.0
    %3868 = vmatpush1.msra.mxu0 0.0
    %3869 = vmatprep.subr.mxu0 0.0
    %3870 = vmatpush1.msra.mxu0 0.0
    %3871 = vmatprep.subr.mxu0 0.0
    %3872 = vmatpush1.msra.mxu0 0.0
    %3873 = vmatprep.subr.mxu0 0.0
    %3874 = vmatpush1.msra.mxu0 0.0
    %3875 = vmatprep.subr.mxu0 0.0
    %3876 = vmatpush1.msra.mxu0 0.0
    %3877 = vmatprep.subr.mxu0 0.0
    %3878 = vmatpush1.msra.mxu0 0.0
    %3879 = vmatprep.subr.mxu0 0.0
    %3880 = vmatpush1.msra.mxu0 0.0
    %3881 = vmatprep.subr.mxu0 0.0
    %3882 = vmatpush1.msra.mxu0 0.0
    %3883 = vmatprep.subr.mxu0 0.0
    %3884 = vmatpush1.msra.mxu0 0.0
    %3885 = vmatprep.subr.mxu0 0.0
    %3886 = vmatpush1.msra.mxu0 0.0
    %3887 = vmatprep.subr.mxu0 0.0
    %3888 = vmatpush1.msra.mxu0 0.0
    %3889 = vmatprep.subr.mxu0 0.0
    %3890 = vmatpush1.msra.mxu0 0.0
    %3891 = vmatprep.subr.mxu0 0.0
    %3892 = vmatpush1.msra.mxu0 0.0
    %3893 = vmatprep.mubr.f32.mxu0 0.0
    %3894 = vmatmul.mubr.f32.gmra.mrb[0].mxu0 %v3656
    %v3895 = vpop.f32.mrb[0].mxu0
    %v3896 = vadd.f32 %v1891, %v3895
    %v3897 = vpop.f32.mrb[0].mxu0
    %3898 = vdwg.mxu0
    %v3900 = vrot.slane %v3896, 1
    %v3902 = vadd.f32 %v1873, %v3900
    %v3903 = vxor.u32 %v3902, 2147483648
    %v3904 = vmul.f32 %v3903, 1.442695
    %v3905 = vpow.pop %v3904
    %v3906 = vadd.f32 %v3905, 1.0
    %v3907 = vrcp.pop %v3906
    %v3908 = vmul.f32 1.0, %v3907
    %3909 = vrot.lane.b32.xlu0 %v3900, 64
    %v3910 = vpop.permute.xlu0 %3909
    %v3912 = vmul.f32 %v3908, %v3910
    %3914 = vrot.lane.b32.xlu0 %v3912, 64
    %v3915 = vpop.permute.xlu0 %3914
    %v3917 = vadd.f32 %v1873, %v3915
    %v3918 = vtanh.pop %v3917
    %v3919 = vsub.f32 1.0, %v3908
    %3921 = vrot.lane.b32.xlu0 %v3918, 96
    %v3922 = vpop.permute.xlu0 %3921
    %v3924 = vmul.f32 %v3919, %v3922
    %v3925 = vrot.slane %v3651, 7
    %v3927 = vmul.f32 %v3908, %v3925
    %v3928 = vadd.f32 %v3924, %v3927
    %v3930 = vrot.slane %v3928, 7
    %3931 = vrot.lane.b32.xlu0 %v3930, 96
    %v3932 = vpop.permute.xlu0 %3931
    %v3933 = vsel %vm1573, %v3932, 0
    %3935 = vmatprep.subr.mxu0 0.0
    %3936 = vmatpush1.msra.mxu0 %v1881
    %3937 = vmatprep.subr.mxu0 0.0
    %3938 = vmatpush1.msra.mxu0 %v1882
    %3939 = vmatprep.subr.mxu0 0.0
    %3940 = vmatpush1.msra.mxu0 %v1883
    %3941 = vmatprep.subr.mxu0 0.0
    %3942 = vmatpush1.msra.mxu0 %v1884
    %3943 = vmatprep.subr.mxu0 0.0
    %3944 = vmatpush1.msra.mxu0 0.0
    %3945 = vmatprep.subr.mxu0 0.0
    %3946 = vmatpush1.msra.mxu0 0.0
    %3947 = vmatprep.subr.mxu0 0.0
    %3948 = vmatpush1.msra.mxu0 0.0
    %3949 = vmatprep.subr.mxu0 0.0
    %3950 = vmatpush1.msra.mxu0 0.0
    %3951 = vmatprep.subr.mxu0 0.0
    %3952 = vmatpush1.msra.mxu0 0.0
    %3953 = vmatprep.subr.mxu0 0.0
    %3954 = vmatpush1.msra.mxu0 0.0
    %3955 = vmatprep.subr.mxu0 0.0
    %3956 = vmatpush1.msra.mxu0 0.0
    %3957 = vmatprep.subr.mxu0 0.0
    %3958 = vmatpush1.msra.mxu0 0.0
    %3959 = vmatprep.subr.mxu0 0.0
    %3960 = vmatpush1.msra.mxu0 0.0
    %3961 = vmatprep.subr.mxu0 0.0
    %3962 = vmatpush1.msra.mxu0 0.0
    %3963 = vmatprep.subr.mxu0 0.0
    %3964 = vmatpush1.msra.mxu0 0.0
    %3965 = vmatprep.subr.mxu0 0.0
    %3966 = vmatpush1.msra.mxu0 0.0
    %3967 = vmatprep.subr.mxu0 0.0
    %3968 = vmatpush1.msra.mxu0 0.0
    %3969 = vmatprep.subr.mxu0 0.0
    %3970 = vmatpush1.msra.mxu0 0.0
    %3971 = vmatprep.subr.mxu0 0.0
    %3972 = vmatpush1.msra.mxu0 0.0
    %3973 = vmatprep.subr.mxu0 0.0
    %3974 = vmatpush1.msra.mxu0 0.0
    %3975 = vmatprep.subr.mxu0 0.0
    %3976 = vmatpush1.msra.mxu0 0.0
    %3977 = vmatprep.subr.mxu0 0.0
    %3978 = vmatpush1.msra.mxu0 0.0
    %3979 = vmatprep.subr.mxu0 0.0
    %3980 = vmatpush1.msra.mxu0 0.0
    %3981 = vmatprep.subr.mxu0 0.0
    %3982 = vmatpush1.msra.mxu0 0.0
    %3983 = vmatprep.subr.mxu0 0.0
    %3984 = vmatpush1.msra.mxu0 0.0
    %3985 = vmatprep.subr.mxu0 0.0
    %3986 = vmatpush1.msra.mxu0 0.0
    %3987 = vmatprep.subr.mxu0 0.0
    %3988 = vmatpush1.msra.mxu0 0.0
    %3989 = vmatprep.subr.mxu0 0.0
    %3990 = vmatpush1.msra.mxu0 0.0
    %3991 = vmatprep.subr.mxu0 0.0
    %3992 = vmatpush1.msra.mxu0 0.0
    %3993 = vmatprep.subr.mxu0 0.0
    %3994 = vmatpush1.msra.mxu0 0.0
    %3995 = vmatprep.subr.mxu0 0.0
    %3996 = vmatpush1.msra.mxu0 0.0
    %3997 = vmatprep.subr.mxu0 0.0
    %3998 = vmatpush1.msra.mxu0 0.0
    %3999 = vmatprep.mubr.f32.mxu0 0.0
    %4000 = vmatmul.mubr.f32.gmra.mrb[0].mxu0 %v3933
    %v4001 = vpop.f32.mrb[0].mxu0
    %v4002 = vadd.f32 %v1995, %v4001
    %v4003 = vpop.f32.mrb[0].mxu0
    %4004 = vdwg.mxu0
    %4006 = vrot.lane.b32.xlu0 %v3828, 96
    %v4007 = vpop.permute.xlu0 %4006
    %v4008 = vsel %vm1573, %v4007, 0
    %4010 = vmatprep.subr.mxu0 0.0
    %4011 = vmatpush1.msra.mxu0 %v1886
    %4012 = vmatprep.subr.mxu0 0.0
    %4013 = vmatpush1.msra.mxu0 %v1887
    %4014 = vmatprep.subr.mxu0 0.0
    %4015 = vmatpush1.msra.mxu0 %v1888
    %4016 = vmatprep.subr.mxu0 0.0
    %4017 = vmatpush1.msra.mxu0 %v1889
    %4018 = vmatprep.subr.mxu0 0.0
    %4019 = vmatpush1.msra.mxu0 0.0
    %4020 = vmatprep.subr.mxu0 0.0
    %4021 = vmatpush1.msra.mxu0 0.0
    %4022 = vmatprep.subr.mxu0 0.0
    %4023 = vmatpush1.msra.mxu0 0.0
    %4024 = vmatprep.subr.mxu0 0.0
    %4025 = vmatpush1.msra.mxu0 0.0
    %4026 = vmatprep.subr.mxu0 0.0
    %4027 = vmatpush1.msra.mxu0 0.0
    %4028 = vmatprep.subr.mxu0 0.0
    %4029 = vmatpush1.msra.mxu0 0.0
    %4030 = vmatprep.subr.mxu0 0.0
    %4031 = vmatpush1.msra.mxu0 0.0
    %4032 = vmatprep.subr.mxu0 0.0
    %4033 = vmatpush1.msra.mxu0 0.0
    %4034 = vmatprep.subr.mxu0 0.0
    %4035 = vmatpush1.msra.mxu0 0.0
    %4036 = vmatprep.subr.mxu0 0.0
    %4037 = vmatpush1.msra.mxu0 0.0
    %4038 = vmatprep.subr.mxu0 0.0
    %4039 = vmatpush1.msra.mxu0 0.0
    %4040 = vmatprep.subr.mxu0 0.0
    %4041 = vmatpush1.msra.mxu0 0.0
    %4042 = vmatprep.subr.mxu0 0.0
    %4043 = vmatpush1.msra.mxu0 0.0
    %4044 = vmatprep.subr.mxu0 0.0
    %4045 = vmatpush1.msra.mxu0 0.0
    %4046 = vmatprep.subr.mxu0 0.0
    %4047 = vmatpush1.msra.mxu0 0.0
    %4048 = vmatprep.subr.mxu0 0.0
    %4049 = vmatpush1.msra.mxu0 0.0
    %4050 = vmatprep.subr.mxu0 0.0
    %4051 = vmatpush1.msra.mxu0 0.0
    %4052 = vmatprep.subr.mxu0 0.0
    %4053 = vmatpush1.msra.mxu0 0.0
    %4054 = vmatprep.subr.mxu0 0.0
    %4055 = vmatpush1.msra.mxu0 0.0
    %4056 = vmatprep.subr.mxu0 0.0
    %4057 = vmatpush1.msra.mxu0 0.0
    %4058 = vmatprep.subr.mxu0 0.0
    %4059 = vmatpush1.msra.mxu0 0.0
    %4060 = vmatprep.subr.mxu0 0.0
    %4061 = vmatpush1.msra.mxu0 0.0
    %4062 = vmatprep.subr.mxu0 0.0
    %4063 = vmatpush1.msra.mxu0 0.0
    %4064 = vmatprep.subr.mxu0 0.0
    %4065 = vmatpush1.msra.mxu0 0.0
    %4066 = vmatprep.subr.mxu0 0.0
    %4067 = vmatpush1.msra.mxu0 0.0
    %4068 = vmatprep.subr.mxu0 0.0
    %4069 = vmatpush1.msra.mxu0 0.0
    %4070 = vmatprep.subr.mxu0 0.0
    %4071 = vmatpush1.msra.mxu0 0.0
    %4072 = vmatprep.subr.mxu0 0.0
    %4073 = vmatpush1.msra.mxu0 0.0
    %4074 = vmatprep.mubr.f32.mxu0 0.0
    %4075 = vmatmul.mubr.f32.gmra.mrb[0].mxu0 %v4008
    %v4076 = vpop.f32.mrb[0].mxu0
    %v4077 = vadd.f32 %v2069, %v4076
    %v4078 = vpop.f32.mrb[0].mxu0
    %4079 = vdwg.mxu0
    %v4080 = vadd.f32 %v4002, %v4077
    %v4081 = vxor.u32 %v4080, 2147483648
    %v4082 = vmul.f32 %v4081, 1.442695
    %v4083 = vpow.pop %v4082
    %v4084 = vadd.f32 %v4083, 1.0
    %v4085 = vrcp.pop %v4084
    %v4086 = vmul.f32 1.0, %v4085
    %4088 = vrot.lane.b32.xlu0 %v4077, 64
    %v4089 = vpop.permute.xlu0 %4088
    %v4091 = vmul.f32 %v4086, %v4089
    %4093 = vrot.lane.b32.xlu0 %v4091, 64
    %v4094 = vpop.permute.xlu0 %4093
    %v4096 = vadd.f32 %v4002, %v4094
    %v4097 = vtanh.pop %v4096
    %v4098 = vsub.f32 1.0, %v4086
    %4100 = vrot.lane.b32.xlu0 %v4097, 96
    %v4101 = vpop.permute.xlu0 %4100
    %v4103 = vmul.f32 %v4098, %v4101
    %v4104 = vmul.f32 %v4086, %v3828
    %v4105 = vadd.f32 %v4103, %v4104
    %v4106 = vld [vmem:[%s8] sm:$0xff]
    %v4107 = vld [vmem:[%s8 + $0x8] sm:$0xff]
    %v4108 = vld [vmem:[%s8 + $0x10] sm:$0xff]
    %v4109 = vld [vmem:[%s8 + $0x18] sm:$0xff]
    %v4110 = vld [vmem:[%s8 + $0x20] sm:$0x1]
    %v4111 = vrot.slane %v2443, 7
    %v4113 = vrot.slane %v2720, 6
    %v4115 = vrot.slane %v2997, 5
    %v4117 = vrot.slane %v3274, 4
    %v4119 = vrot.slane %v3551, 3
    %v4121 = vrot.slane %v3828, 2
    %v4124 = vrot.slane %v4105, 1
    %vm4126 = vcmask 1040384
    %v4127 = vsel %vm4126, %v2166, %v4111
    %vm4128 = vcmask 1041408
    %v4129 = vsel %vm4128, %v4127, %v4113
    %vm4130 = vcmask 1042432
    %v4131 = vsel %vm4130, %v4129, %v4115
    %vm4132 = vcmask 1043456
    %v4133 = vsel %vm4132, %v4131, %v4117
    %vm4134 = vcmask 1044480
    %v4135 = vsel %vm4134, %v4133, %v4119
    %vm4136 = vcmask 1045504
    %v4137 = vsel %vm4136, %v4135, %v4121
    %vm4138 = vcmask 1046528
    %v4139 = vsel %vm4138, %v4137, %v4124
    %v4140 = vlaneseq
    %v4141 = vshrl.u32 %v4140, 7
    %v4142 = vsub.s32 0, %v4141
    %v4143 = vrot.slane %v4110, %v4142
    %4145 = vrot.lane.b32.xlu0 %v4139, 96
    %v4146 = vpop.permute.xlu0 %4145
    %v4147 = vsel %vm1573, %v4146, 0
    %4149 = vmatprep.subr.mxu0 0.0
    %4150 = vmatpush1.msra.mxu0 %v4106
    %4151 = vmatprep.subr.mxu0 0.0
    %4152 = vmatpush1.msra.mxu0 %v4107
    %4153 = vmatprep.subr.mxu0 0.0
    %4154 = vmatpush1.msra.mxu0 %v4108
    %4155 = vmatprep.subr.mxu0 0.0
    %4156 = vmatpush1.msra.mxu0 %v4109
    %4157 = vmatprep.subr.mxu0 0.0
    %4158 = vmatpush1.msra.mxu0 0.0
    %4159 = vmatprep.subr.mxu0 0.0
    %4160 = vmatpush1.msra.mxu0 0.0
    %4161 = vmatprep.subr.mxu0 0.0
    %4162 = vmatpush1.msra.mxu0 0.0
    %4163 = vmatprep.subr.mxu0 0.0
    %4164 = vmatpush1.msra.mxu0 0.0
    %4165 = vmatprep.subr.mxu0 0.0
    %4166 = vmatpush1.msra.mxu0 0.0
    %4167 = vmatprep.subr.mxu0 0.0
    %4168 = vmatpush1.msra.mxu0 0.0
    %4169 = vmatprep.subr.mxu0 0.0
    %4170 = vmatpush1.msra.mxu0 0.0
    %4171 = vmatprep.subr.mxu0 0.0
    %4172 = vmatpush1.msra.mxu0 0.0
    %4173 = vmatprep.subr.mxu0 0.0
    %4174 = vmatpush1.msra.mxu0 0.0
    %4175 = vmatprep.subr.mxu0 0.0
    %4176 = vmatpush1.msra.mxu0 0.0
    %4177 = vmatprep.subr.mxu0 0.0
    %4178 = vmatpush1.msra.mxu0 0.0
    %4179 = vmatprep.subr.mxu0 0.0
    %4180 = vmatpush1.msra.mxu0 0.0
    %4181 = vmatprep.subr.mxu0 0.0
    %4182 = vmatpush1.msra.mxu0 0.0
    %4183 = vmatprep.subr.mxu0 0.0
    %4184 = vmatpush1.msra.mxu0 0.0
    %4185 = vmatprep.subr.mxu0 0.0
    %4186 = vmatpush1.msra.mxu0 0.0
    %4187 = vmatprep.subr.mxu0 0.0
    %4188 = vmatpush1.msra.mxu0 0.0
    %4189 = vmatprep.subr.mxu0 0.0
    %4190 = vmatpush1.msra.mxu0 0.0
    %4191 = vmatprep.subr.mxu0 0.0
    %4192 = vmatpush1.msra.mxu0 0.0
    %4193 = vmatprep.subr.mxu0 0.0
    %4194 = vmatpush1.msra.mxu0 0.0
    %4195 = vmatprep.subr.mxu0 0.0
    %4196 = vmatpush1.msra.mxu0 0.0
    %4197 = vmatprep.subr.mxu0 0.0
    %4198 = vmatpush1.msra.mxu0 0.0
    %4199 = vmatprep.subr.mxu0 0.0
    %4200 = vmatpush1.msra.mxu0 0.0
    %4201 = vmatprep.subr.mxu0 0.0
    %4202 = vmatpush1.msra.mxu0 0.0
    %4203 = vmatprep.subr.mxu0 0.0
    %4204 = vmatpush1.msra.mxu0 0.0
    %4205 = vmatprep.subr.mxu0 0.0
    %4206 = vmatpush1.msra.mxu0 0.0
    %4207 = vmatprep.subr.mxu0 0.0
    %4208 = vmatpush1.msra.mxu0 0.0
    %4209 = vmatprep.subr.mxu0 0.0
    %4210 = vmatpush1.msra.mxu0 0.0
    %4211 = vmatprep.subr.mxu0 0.0
    %4212 = vmatpush1.msra.mxu0 0.0
    %4213 = vmatprep.mubr.f32.mxu0 0.0
    %4214 = vmatmul.mubr.f32.gmra.mrb[0].mxu0 %v4147
    %v4215 = vpop.f32.mrb[0].mxu0
    %v4216 = vadd.f32 %v4143, %v4215
    %v4217 = vpop.f32.mrb[0].mxu0
    %4218 = vdwg.mxu0
    %vm4219 = vcmask 7168
    %4220 = vst.msk [vmem:[%s9] sm:$0xff] %vm4219, %v4216
    // Predicated region
    $region46: #{tpu_custom_call.1} parent=1 // pred_check
      _
    $region47: #{tpu_custom_call.1} parent=1 // pred_check_branch
      %4222 = sbr.rel (0) target = $region49
    $region48: #{tpu_custom_call.1} parent=1 // pred_region
      _
    $region49: #{tpu_custom_call.1} parent=1 // pred_fallthru
      _
    // Predicated region
    $region50: #{tpu_custom_call.1} parent=1 // pred_check
      _
    $region51: #{tpu_custom_call.1} parent=1 // pred_check_branch
      %4224 = sbr.rel (0) target = $region53
    $region52: #{tpu_custom_call.1} parent=1 // pred_region
      %s4226 = ssub.s32 128, 128
      %4227 = vsyncadd [#allocation4], %s4226
      %s4229 = sshll.u32 [#allocation7], 4
      %s4230 = int_to_ptr.vmem [resolvable:$true] %s4229
      %4232 = dma.vmem_to_hbm [thread:$0]  %s4230, 128, %s10, [#allocation4]
    $region53: #{tpu_custom_call.1} parent=1 // pred_fallthru
      _
    // Predicated region
    $region54: #{tpu_custom_call.1} parent=1 // pred_check
      _
    $region55: #{tpu_custom_call.1} parent=1 // pred_check_branch
      %4234 = sbr.rel (0) target = $region57
    $region56: #{tpu_custom_call.1} parent=1 // pred_region
      _
    $region57: #{tpu_custom_call.1} parent=1 // pred_fallthru
      _
    // Predicated region
    $region58: #{tpu_custom_call.1} parent=1 // pred_check
      _
    $region59: #{tpu_custom_call.1} parent=1 // pred_check_branch
      %4236 = sbr.rel (0) target = $region61
    $region60: #{tpu_custom_call.1} parent=1 // pred_region
      %4237 = dma.done [#allocation4], 128
    $region61: #{tpu_custom_call.1} parent=1 // pred_fallthru
      _
    %4238 = vsyncpa [#allocation3], 1
    %4239 = vsyncpa [#allocation6], 1
    %4240 = vsyncpa [#allocation4], 1

</llo_original>
